<compile_context>
chip_gen: v7x
topology: tpu7x:2x2x1
jax: 0.10.0
libtpu: 0.0.40
codegen_flags: <defaults>
</compile_context>

<pallas_src>
import jax
import jax.numpy as jnp
from jax.experimental import pallas as pl
from jax.experimental.pallas import tpu as pltpu

# ----------------------------- config (small, synthetic) --------------------
VOCAB = 64
MAX_POS = 64
HIDDEN = 128
N_HEADS = 2
HEAD_DIM = HIDDEN // N_HEADS
FFN = 256
N_LAYERS = 2
LN_EPS = 1e-12
BATCH = 2
SEQ = 16
BS = BATCH * SEQ           # tokens per encoder


# ----------------------------- fused encoder kernel -------------------------
def _ln(x, g, b):
    mean = jnp.mean(x, axis=-1, keepdims=True)
    xc = x - mean
    var = jnp.mean(xc * xc, axis=-1, keepdims=True)
    return xc * jax.lax.rsqrt(var + LN_EPS) * g + b


def _bi_encoder_kernel(
    x_emb_ref, emb_g_ref, emb_b_ref,
    wqkv_ref, bqkv_ref, wo_ref, bo_ref, ln1_g_ref, ln1_b_ref,
    w1_ref, b1_ref, w2_ref, b2_ref, ln2_g_ref, ln2_b_ref,
    pool_w_ref, pool_b_ref,
    pooled_ref,
    x_sc,
):
    """One grid step = one transformer layer of one encoder (e = axis 0, l = axis 1)."""
    l = pl.program_id(1)

    # Layer 0: embedding layernorm -> VMEM-resident activation.
    @pl.when(l == 0)
    def _():
        x_sc[...] = _ln(x_emb_ref[...], emb_g_ref[...], emb_b_ref[...])

    x = x_sc[...]                                             # [BS, H] f32, resident
    xb = x.astype(jnp.bfloat16)

    # Fused Q|K|V projection: one [BS, 3H] matmul (lane width 384 fills the MXU).
    qkv = jnp.dot(xb, wqkv_ref[...],
                  preferred_element_type=jnp.float32) + bqkv_ref[...]

    # Attention: in-kernel head split via static slices, merged lane-dense output.
    scale = 1.0 / float(HEAD_DIM) ** 0.5
    ctx_rows = []
    for b in range(BATCH):
        r0 = b * SEQ
        heads = []
        for h in range(N_HEADS):
            c0 = h * HEAD_DIM
            qh = qkv[r0:r0 + SEQ, c0:c0 + HEAD_DIM].astype(jnp.bfloat16)
            kh = qkv[r0:r0 + SEQ,
                     HIDDEN + c0:HIDDEN + c0 + HEAD_DIM].astype(jnp.bfloat16)
            vh = qkv[r0:r0 + SEQ,
                     2 * HIDDEN + c0:2 * HIDDEN + c0 + HEAD_DIM].astype(jnp.bfloat16)
            # contract on head_dim (no explicit K transpose)
            s = jax.lax.dot_general(qh, kh, (((1,), (1,)), ((), ())),
                                    preferred_element_type=jnp.float32) * scale
            s = s - jnp.max(s, axis=-1, keepdims=True)
            p = jnp.exp(s)
            p = p * pl.reciprocal(jnp.sum(p, axis=-1, keepdims=True), approx=True)
            heads.append(jnp.dot(p.astype(jnp.bfloat16), vh,
                                 preferred_element_type=jnp.float32))
        ctx_rows.append(jnp.concatenate(heads, axis=-1))       # [S, H]
    ctx = jnp.concatenate(ctx_rows, axis=0)                    # [BS, H] lane-dense

    # Output projection + residual + LN (all fused, no HBM round trips).
    attn = jnp.dot(ctx.astype(jnp.bfloat16), wo_ref[...],
                   preferred_element_type=jnp.float32) + bo_ref[...]
    x1 = _ln(x + attn, ln1_g_ref[...], ln1_b_ref[...])

    # FFN (gelu) + residual + LN.
    hmid = jnp.dot(x1.astype(jnp.bfloat16), w1_ref[...],
                   preferred_element_type=jnp.float32) + b1_ref[...]
    hmid = jax.nn.gelu(hmid, approximate=True)
    ffn = jnp.dot(hmid.astype(jnp.bfloat16), w2_ref[...],
                  preferred_element_type=jnp.float32) + b2_ref[...]
    x2 = _ln(x1 + ffn, ln2_g_ref[...], ln2_b_ref[...])

    x_sc[...] = x2

    # Last layer: [CLS] rows -> pooler (dense + tanh), written once per encoder.
    @pl.when(l == pl.num_programs(1) - 1)
    def _():
        cls = jnp.concatenate([x2[b * SEQ:b * SEQ + 1, :] for b in range(BATCH)],
                              axis=0)                          # [B, H]
        pooled = jnp.tanh(
            jnp.dot(cls.astype(jnp.bfloat16), pool_w_ref[...],
                    preferred_element_type=jnp.float32) + pool_b_ref[...])
        pooled_ref[...] = pooled


def _bi_encoder_call(x_emb, emb_g, emb_b, wqkv, bqkv, wo, bo, ln1_g, ln1_b,
                     w1, b1, w2, b2, ln2_g, ln2_b, pool_w, pool_b):
    E = x_emb.shape[0]                                         # 2 encoders (q, c)

    per_enc = lambda e, l: (e, 0, 0)
    per_layer = lambda e, l: (e, l, 0, 0)

    def enc_spec(d0, d1):
        return pl.BlockSpec((None, d0, d1), per_enc)

    def layer_spec(d0, d1):
        return pl.BlockSpec((None, None, d0, d1), per_layer)

    return pl.pallas_call(
        _bi_encoder_kernel,
        out_shape=jax.ShapeDtypeStruct((E, BATCH, HIDDEN), jnp.float32),
        grid=(E, N_LAYERS),
        in_specs=[
            enc_spec(BS, HIDDEN),                 # x_emb (resident across layers)
            enc_spec(1, HIDDEN),                  # emb_ln_g
            enc_spec(1, HIDDEN),                  # emb_ln_b
            layer_spec(HIDDEN, 3 * HIDDEN),       # wqkv (bf16)
            layer_spec(1, 3 * HIDDEN),            # bqkv
            layer_spec(HIDDEN, HIDDEN),           # wo (bf16)
            layer_spec(1, HIDDEN),                # bo
            layer_spec(1, HIDDEN),                # ln1_g
            layer_spec(1, HIDDEN),                # ln1_b
            layer_spec(HIDDEN, FFN),              # w1 (bf16)
            layer_spec(1, FFN),                   # b1
            layer_spec(FFN, HIDDEN),              # w2 (bf16)
            layer_spec(1, HIDDEN),                # b2
            layer_spec(1, HIDDEN),                # ln2_g
            layer_spec(1, HIDDEN),                # ln2_b
            enc_spec(HIDDEN, HIDDEN),             # pooler_w (bf16)
            enc_spec(1, HIDDEN),                  # pooler_b
        ],
        out_specs=pl.BlockSpec((None, BATCH, HIDDEN), per_enc),
        scratch_shapes=[pltpu.VMEM((BS, HIDDEN), jnp.float32)],
        compiler_params=pltpu.CompilerParams(
            dimension_semantics=("parallel", "arbitrary")),
    )(x_emb, emb_g, emb_b, wqkv, bqkv, wo, bo, ln1_g, ln1_b,
      w1, b1, w2, b2, ln2_g, ln2_b, pool_w, pool_b)


# ----------------------------- synthetic BERT-style encoder -----------------
def init_encoder_params(key):
    def nrm(k, shape):
        return 0.02 * jax.random.normal(k, shape, dtype=jnp.float32)

    keys = jax.random.split(key, 9)
    L, H, F = N_LAYERS, HIDDEN, FFN
    wq, wk, wv = nrm(keys[0], (L, H, H)), nrm(keys[1], (L, H, H)), nrm(keys[2], (L, H, H))
    return {
        "word_emb": nrm(keys[3], (VOCAB, H)),
        "pos_emb": nrm(keys[4], (MAX_POS, H)),
        "emb_ln_g": jnp.ones((1, H), jnp.float32),
        "emb_ln_b": jnp.zeros((1, H), jnp.float32),
        "wqkv": jnp.concatenate([wq, wk, wv], axis=-1),       # [L, H, 3H] fused QKV
        "bqkv": jnp.zeros((L, 1, 3 * H), jnp.float32),
        "wo": nrm(keys[5], (L, H, H)),
        "bo": jnp.zeros((L, 1, H), jnp.float32),
        "ln1_g": jnp.ones((L, 1, H), jnp.float32),
        "ln1_b": jnp.zeros((L, 1, H), jnp.float32),
        "w1": nrm(keys[6], (L, H, F)),
        "b1": jnp.zeros((L, 1, F), jnp.float32),
        "w2": nrm(keys[7], (L, F, H)),
        "b2": jnp.zeros((L, 1, H), jnp.float32),
        "ln2_g": jnp.ones((L, 1, H), jnp.float32),
        "ln2_b": jnp.zeros((L, 1, H), jnp.float32),
        "pooler_w": nrm(keys[8], (H, H)),
        "pooler_b": jnp.zeros((1, H), jnp.float32),
    }


def _embed(token_ids, word_emb, pos_emb):
    # TODO(synk): embedding gather stays in XLA (data-dependent gather; no win
    # from a Pallas kernel at this size).
    B, S = token_ids.shape
    x = word_emb[token_ids] + pos_emb[:S][None, :, :]
    return x.reshape(B * S, HIDDEN)


def bi_encoder_forward(question_ids, context_ids, q_params, c_params):
    x_q = _embed(question_ids, q_params["word_emb"], q_params["pos_emb"])
    x_c = _embed(context_ids, c_params["word_emb"], c_params["pos_emb"])
    x_emb = jnp.stack([x_q, x_c], axis=0)                      # [2, B*S, H]

    def stack(name, dtype=None):
        a = jnp.stack([q_params[name], c_params[name]], axis=0)
        return a.astype(dtype) if dtype is not None else a

    pooled = _bi_encoder_call(
        x_emb,
        stack("emb_ln_g"), stack("emb_ln_b"),
        stack("wqkv", jnp.bfloat16), stack("bqkv"),
        stack("wo", jnp.bfloat16), stack("bo"),
        stack("ln1_g"), stack("ln1_b"),
        stack("w1", jnp.bfloat16), stack("b1"),
        stack("w2", jnp.bfloat16), stack("b2"),
        stack("ln2_g"), stack("ln2_b"),
        stack("pooler_w", jnp.bfloat16), stack("pooler_b"),
    )                                                          # [2, B, H]
    return pooled[0], pooled[1]


bi_encoder_forward = jax.jit(bi_encoder_forward)


def encoders_loss(encoded_q, encoded_c):
    # Tiny [Bq, Bc] score matrix: plain XLA (a pallas_call here is pure launch
    # overhead); contract on H so no transpose is materialized.
    scores = jax.lax.dot_general(encoded_q, encoded_c, (((1,), (1,)), ((), ())))
    lse = jax.nn.logsumexp(scores, axis=1)
    diag = jnp.diagonal(scores)
    return jnp.mean(lse - diag)


# ----------------------------- main ------------------------------------------
if __name__ == "__main__":
    root = jax.random.PRNGKey(0)
    k_q, k_c, k_qt, k_ct = jax.random.split(root, 4)

    q_params = init_encoder_params(k_q)   # question encoder weights
    c_params = init_encoder_params(k_c)   # context encoder weights

    # deterministic "tokenized" inputs (pre-tokenized ids)
    question_ids = jax.random.randint(k_qt, (BATCH, SEQ), 0, VOCAB, dtype=jnp.int32)
    context_ids = jax.random.randint(k_ct, (BATCH, SEQ), 0, VOCAB, dtype=jnp.int32)

    encoded_q, encoded_c = bi_encoder_forward(question_ids, context_ids,
                                              q_params, c_params)
    loss = encoders_loss(encoded_q, encoded_c)

    jax.block_until_ready((encoded_q, encoded_c, loss))
    assert encoded_q.shape == (BATCH, HIDDEN)
    assert encoded_c.shape == (BATCH, HIDDEN)
    assert jnp.isfinite(loss)
    print("KERNEL_OK")
</pallas_src>

<mosaic_0001>
module attributes {stable_mosaic.version = 11 : i64} {
  func.func @_bi_encoder_kernel(%arg0: i32, %arg1: i32, %arg2: memref<1x32x128xf32, #tpu.memory_space<vmem>>, %arg3: memref<1x1x128xf32, #tpu.memory_space<vmem>>, %arg4: memref<1x1x128xf32, #tpu.memory_space<vmem>>, %arg5: memref<1x1x128x384xbf16, #tpu.memory_space<vmem>>, %arg6: memref<1x1x1x384xf32, #tpu.memory_space<vmem>>, %arg7: memref<1x1x128x128xbf16, #tpu.memory_space<vmem>>, %arg8: memref<1x1x1x128xf32, #tpu.memory_space<vmem>>, %arg9: memref<1x1x1x128xf32, #tpu.memory_space<vmem>>, %arg10: memref<1x1x1x128xf32, #tpu.memory_space<vmem>>, %arg11: memref<1x1x128x256xbf16, #tpu.memory_space<vmem>>, %arg12: memref<1x1x1x256xf32, #tpu.memory_space<vmem>>, %arg13: memref<1x1x256x128xbf16, #tpu.memory_space<vmem>>, %arg14: memref<1x1x1x128xf32, #tpu.memory_space<vmem>>, %arg15: memref<1x1x1x128xf32, #tpu.memory_space<vmem>>, %arg16: memref<1x1x1x128xf32, #tpu.memory_space<vmem>>, %arg17: memref<1x128x128xbf16, #tpu.memory_space<vmem>>, %arg18: memref<1x1x128xf32, #tpu.memory_space<vmem>>, %arg19: memref<1x2x128xf32, #tpu.memory_space<vmem>>, %arg20: memref<32x128xf32, #tpu.memory_space<vmem>>) attributes {dimension_semantics = [#tpu.dimension_semantics<parallel>, #tpu.dimension_semantics<arbitrary>], iteration_bounds = array<i64: 2, 2>, scalar_prefetch = 0 : i64, scratch_operands = 1 : i64, tpu.core_type = #tpu.core_type<tc>, window_params = [{transform_indices = @transform_0, window_bounds = array<i64: 1, 32, 128>}, {transform_indices = @transform_1, window_bounds = array<i64: 1, 1, 128>}, {transform_indices = @transform_2, window_bounds = array<i64: 1, 1, 128>}, {transform_indices = @transform_3, window_bounds = array<i64: 1, 1, 128, 384>}, {transform_indices = @transform_4, window_bounds = array<i64: 1, 1, 1, 384>}, {transform_indices = @transform_5, window_bounds = array<i64: 1, 1, 128, 128>}, {transform_indices = @transform_6, window_bounds = array<i64: 1, 1, 1, 128>}, {transform_indices = @transform_7, window_bounds = array<i64: 1, 1, 1, 128>}, {transform_indices = @transform_8, window_bounds = array<i64: 1, 1, 1, 128>}, {transform_indices = @transform_9, window_bounds = array<i64: 1, 1, 128, 256>}, {transform_indices = @transform_10, window_bounds = array<i64: 1, 1, 1, 256>}, {transform_indices = @transform_11, window_bounds = array<i64: 1, 1, 256, 128>}, {transform_indices = @transform_12, window_bounds = array<i64: 1, 1, 1, 128>}, {transform_indices = @transform_13, window_bounds = array<i64: 1, 1, 1, 128>}, {transform_indices = @transform_14, window_bounds = array<i64: 1, 1, 1, 128>}, {transform_indices = @transform_15, window_bounds = array<i64: 1, 128, 128>}, {transform_indices = @transform_16, window_bounds = array<i64: 1, 1, 128>}, {transform_indices = @transform_17, window_bounds = array<i64: 1, 2, 128>}]} {
    %c0_i32 = arith.constant 0 : i32
    %0 = arith.cmpi eq, %arg1, %c0_i32 : i32
    %1 = arith.extui %0 : i1 to i32
    %c0_i32_0 = arith.constant 0 : i32
    %2 = arith.cmpi ne, %1, %c0_i32_0 : i32
    scf.if %2 {
      %c0_90 = arith.constant 0 : index
      %c0_91 = arith.constant 0 : index
      %c0_92 = arith.constant 0 : index
      %190 = vector.load %arg2[%c0_90, %c0_91, %c0_92] : memref<1x32x128xf32, #tpu.memory_space<vmem>>, vector<1x32x128xf32>
      %191 = vector.shape_cast %190 : vector<1x32x128xf32> to vector<32x128xf32>
      %c0_93 = arith.constant 0 : index
      %c0_94 = arith.constant 0 : index
      %c0_95 = arith.constant 0 : index
      %192 = vector.load %arg3[%c0_93, %c0_94, %c0_95] : memref<1x1x128xf32, #tpu.memory_space<vmem>>, vector<1x1x128xf32>
      %193 = vector.shape_cast %192 : vector<1x1x128xf32> to vector<1x128xf32>
      %c0_96 = arith.constant 0 : index
      %c0_97 = arith.constant 0 : index
      %c0_98 = arith.constant 0 : index
      %194 = vector.load %arg4[%c0_96, %c0_97, %c0_98] : memref<1x1x128xf32, #tpu.memory_space<vmem>>, vector<1x1x128xf32>
      %195 = vector.shape_cast %194 : vector<1x1x128xf32> to vector<1x128xf32>
      %cst_99 = arith.constant dense<0.000000e+00> : vector<32xf32>
      %196 = vector.multi_reduction <add>, %191, %cst_99 [1] : vector<32x128xf32> to vector<32xf32>
      %197 = vector.shape_cast %196 : vector<32xf32> to vector<32x1xf32>
      %cst_100 = arith.constant 1.280000e+02 : f32
      %198 = vector.broadcast %cst_100 : f32 to vector<32x1xf32>
      %199 = arith.divf %197, %198 : vector<32x1xf32>
      %200 = vector.broadcast %199 : vector<32x1xf32> to vector<32x128xf32>
      %201 = arith.subf %191, %200 : vector<32x128xf32>
      %202 = arith.mulf %201, %201 : vector<32x128xf32>
      %cst_101 = arith.constant dense<0.000000e+00> : vector<32xf32>
      %203 = vector.multi_reduction <add>, %202, %cst_101 [1] : vector<32x128xf32> to vector<32xf32>
      %204 = vector.shape_cast %203 : vector<32xf32> to vector<32x1xf32>
      %cst_102 = arith.constant 1.280000e+02 : f32
      %205 = vector.broadcast %cst_102 : f32 to vector<32x1xf32>
      %206 = arith.divf %204, %205 : vector<32x1xf32>
      %cst_103 = arith.constant 9.99999996E-13 : f32
      %207 = vector.broadcast %cst_103 : f32 to vector<32x1xf32>
      %208 = arith.addf %206, %207 : vector<32x1xf32>
      %209 = math.rsqrt %208 : vector<32x1xf32>
      %210 = vector.broadcast %209 : vector<32x1xf32> to vector<32x128xf32>
      %211 = arith.mulf %201, %210 : vector<32x128xf32>
      %212 = vector.broadcast %193 : vector<1x128xf32> to vector<32x128xf32>
      %213 = arith.mulf %211, %212 : vector<32x128xf32>
      %214 = vector.broadcast %195 : vector<1x128xf32> to vector<32x128xf32>
      %215 = arith.addf %213, %214 : vector<32x128xf32>
      %c0_104 = arith.constant 0 : index
      %c0_105 = arith.constant 0 : index
      %216 = vector.load %arg20[%c0_104, %c0_105] : memref<32x128xf32, #tpu.memory_space<vmem>>, vector<32x128xf32>
      tpu.vector_store %arg20[%c0_104, %c0_105], %215 {strides = array<i32>} : memref<32x128xf32, #tpu.memory_space<vmem>>, vector<32x128xf32>,
    } else {
    }
    %c0 = arith.constant 0 : index
    %c0_1 = arith.constant 0 : index
    %3 = vector.load %arg20[%c0, %c0_1] : memref<32x128xf32, #tpu.memory_space<vmem>>, vector<32x128xf32>
    %4 = arith.truncf %3 : vector<32x128xf32> to vector<32x128xbf16>
    %c0_2 = arith.constant 0 : index
    %c0_3 = arith.constant 0 : index
    %c0_4 = arith.constant 0 : index
    %c0_5 = arith.constant 0 : index
    %5 = vector.load %arg5[%c0_2, %c0_3, %c0_4, %c0_5] : memref<1x1x128x384xbf16, #tpu.memory_space<vmem>>, vector<1x1x128x384xbf16>
    %6 = vector.shape_cast %5 : vector<1x1x128x384xbf16> to vector<128x384xbf16>
    %cst = arith.constant dense<0.000000e+00> : vector<32x384xf32>
    %7 = tpu.matmul %4, %6, %cst {dimension_numbers = #tpu.dot_dimension_numbers<[1], [0], [0], [1], [0, 0, 1, 1], [], []>} : vector<32x128xbf16>, vector<128x384xbf16>, vector<32x384xf32> -> vector<32x384xf32>
    %c0_6 = arith.constant 0 : index
    %c0_7 = arith.constant 0 : index
    %c0_8 = arith.constant 0 : index
    %c0_9 = arith.constant 0 : index
    %8 = vector.load %arg6[%c0_6, %c0_7, %c0_8, %c0_9] : memref<1x1x1x384xf32, #tpu.memory_space<vmem>>, vector<1x1x1x384xf32>
    %9 = vector.shape_cast %8 : vector<1x1x1x384xf32> to vector<1x384xf32>
    %10 = vector.broadcast %9 : vector<1x384xf32> to vector<32x384xf32>
    %11 = arith.addf %7, %10 : vector<32x384xf32>
    %12 = vector.extract_strided_slice %11 {offsets = [0, 0], sizes = [16, 64], strides = [1, 1]} : vector<32x384xf32> to vector<16x64xf32>
    %13 = arith.truncf %12 : vector<16x64xf32> to vector<16x64xbf16>
    %14 = vector.extract_strided_slice %11 {offsets = [0, 128], sizes = [16, 64], strides = [1, 1]} : vector<32x384xf32> to vector<16x64xf32>
    %15 = arith.truncf %14 : vector<16x64xf32> to vector<16x64xbf16>
    %16 = vector.extract_strided_slice %11 {offsets = [0, 256], sizes = [16, 64], strides = [1, 1]} : vector<32x384xf32> to vector<16x64xf32>
    %17 = arith.truncf %16 : vector<16x64xf32> to vector<16x64xbf16>
    %cst_10 = arith.constant dense<0.000000e+00> : vector<16x16xf32>
    %18 = tpu.matmul %13, %15, %cst_10 {dimension_numbers = #tpu.dot_dimension_numbers<[1], [1], [0], [0], [0, 0, 1, 0], [], []>} : vector<16x64xbf16>, vector<16x64xbf16>, vector<16x16xf32> -> vector<16x16xf32>
    %cst_11 = arith.constant 1.250000e-01 : f32
    %19 = vector.broadcast %cst_11 : f32 to vector<16x16xf32>
    %20 = arith.mulf %18, %19 : vector<16x16xf32>
    %cst_12 = arith.constant dense<0xFF800000> : vector<16xf32>
    %21 = vector.multi_reduction <maximumf>, %20, %cst_12 [1] : vector<16x16xf32> to vector<16xf32>
    %22 = vector.shape_cast %21 : vector<16xf32> to vector<16x1xf32>
    %23 = vector.broadcast %22 : vector<16x1xf32> to vector<16x16xf32>
    %24 = arith.subf %20, %23 : vector<16x16xf32>
    %25 = math.exp %24 : vector<16x16xf32>
    %cst_13 = arith.constant dense<0.000000e+00> : vector<16xf32>
    %26 = vector.multi_reduction <add>, %25, %cst_13 [1] : vector<16x16xf32> to vector<16xf32>
    %27 = vector.shape_cast %26 : vector<16xf32> to vector<16x1xf32>
    %28 = tpu.reciprocal %27 {approx = true} : vector<16x1xf32> -> vector<16x1xf32>
    %29 = vector.broadcast %28 : vector<16x1xf32> to vector<16x16xf32>
    %30 = arith.mulf %25, %29 : vector<16x16xf32>
    %31 = arith.truncf %30 : vector<16x16xf32> to vector<16x16xbf16>
    %cst_14 = arith.constant dense<0.000000e+00> : vector<16x64xf32>
    %32 = tpu.matmul %31, %17, %cst_14 {dimension_numbers = #tpu.dot_dimension_numbers<[1], [0], [0], [1], [0, 0, 1, 1], [], []>} : vector<16x16xbf16>, vector<16x64xbf16>, vector<16x64xf32> -> vector<16x64xf32>
    %33 = vector.extract_strided_slice %11 {offsets = [0, 64], sizes = [16, 64], strides = [1, 1]} : vector<32x384xf32> to vector<16x64xf32>
    %34 = arith.truncf %33 : vector<16x64xf32> to vector<16x64xbf16>
    %35 = vector.extract_strided_slice %11 {offsets = [0, 192], sizes = [16, 64], strides = [1, 1]} : vector<32x384xf32> to vector<16x64xf32>
    %36 = arith.truncf %35 : vector<16x64xf32> to vector<16x64xbf16>
    %37 = vector.extract_strided_slice %11 {offsets = [0, 320], sizes = [16, 64], strides = [1, 1]} : vector<32x384xf32> to vector<16x64xf32>
    %38 = arith.truncf %37 : vector<16x64xf32> to vector<16x64xbf16>
    %cst_15 = arith.constant dense<0.000000e+00> : vector<16x16xf32>
    %39 = tpu.matmul %34, %36, %cst_15 {dimension_numbers = #tpu.dot_dimension_numbers<[1], [1], [0], [0], [0, 0, 1, 0], [], []>} : vector<16x64xbf16>, vector<16x64xbf16>, vector<16x16xf32> -> vector<16x16xf32>
    %cst_16 = arith.constant 1.250000e-01 : f32
    %40 = vector.broadcast %cst_16 : f32 to vector<16x16xf32>
    %41 = arith.mulf %39, %40 : vector<16x16xf32>
    %cst_17 = arith.constant dense<0xFF800000> : vector<16xf32>
    %42 = vector.multi_reduction <maximumf>, %41, %cst_17 [1] : vector<16x16xf32> to vector<16xf32>
    %43 = vector.shape_cast %42 : vector<16xf32> to vector<16x1xf32>
    %44 = vector.broadcast %43 : vector<16x1xf32> to vector<16x16xf32>
    %45 = arith.subf %41, %44 : vector<16x16xf32>
    %46 = math.exp %45 : vector<16x16xf32>
    %cst_18 = arith.constant dense<0.000000e+00> : vector<16xf32>
    %47 = vector.multi_reduction <add>, %46, %cst_18 [1] : vector<16x16xf32> to vector<16xf32>
    %48 = vector.shape_cast %47 : vector<16xf32> to vector<16x1xf32>
    %49 = tpu.reciprocal %48 {approx = true} : vector<16x1xf32> -> vector<16x1xf32>
    %50 = vector.broadcast %49 : vector<16x1xf32> to vector<16x16xf32>
    %51 = arith.mulf %46, %50 : vector<16x16xf32>
    %52 = arith.truncf %51 : vector<16x16xf32> to vector<16x16xbf16>
    %cst_19 = arith.constant dense<0.000000e+00> : vector<16x64xf32>
    %53 = tpu.matmul %52, %38, %cst_19 {dimension_numbers = #tpu.dot_dimension_numbers<[1], [0], [0], [1], [0, 0, 1, 1], [], []>} : vector<16x16xbf16>, vector<16x64xbf16>, vector<16x64xf32> -> vector<16x64xf32>
    %54 = tpu.concatenate %32, %53 in 1 : vector<16x64xf32>, vector<16x64xf32> -> vector<16x128xf32>
    %55 = vector.extract_strided_slice %11 {offsets = [16, 0], sizes = [16, 64], strides = [1, 1]} : vector<32x384xf32> to vector<16x64xf32>
    %56 = arith.truncf %55 : vector<16x64xf32> to vector<16x64xbf16>
    %57 = vector.extract_strided_slice %11 {offsets = [16, 128], sizes = [16, 64], strides = [1, 1]} : vector<32x384xf32> to vector<16x64xf32>
    %58 = arith.truncf %57 : vector<16x64xf32> to vector<16x64xbf16>
    %59 = vector.extract_strided_slice %11 {offsets = [16, 256], sizes = [16, 64], strides = [1, 1]} : vector<32x384xf32> to vector<16x64xf32>
    %60 = arith.truncf %59 : vector<16x64xf32> to vector<16x64xbf16>
    %cst_20 = arith.constant dense<0.000000e+00> : vector<16x16xf32>
    %61 = tpu.matmul %56, %58, %cst_20 {dimension_numbers = #tpu.dot_dimension_numbers<[1], [1], [0], [0], [0, 0, 1, 0], [], []>} : vector<16x64xbf16>, vector<16x64xbf16>, vector<16x16xf32> -> vector<16x16xf32>
    %cst_21 = arith.constant 1.250000e-01 : f32
    %62 = vector.broadcast %cst_21 : f32 to vector<16x16xf32>
    %63 = arith.mulf %61, %62 : vector<16x16xf32>
    %cst_22 = arith.constant dense<0xFF800000> : vector<16xf32>
    %64 = vector.multi_reduction <maximumf>, %63, %cst_22 [1] : vector<16x16xf32> to vector<16xf32>
    %65 = vector.shape_cast %64 : vector<16xf32> to vector<16x1xf32>
    %66 = vector.broadcast %65 : vector<16x1xf32> to vector<16x16xf32>
    %67 = arith.subf %63, %66 : vector<16x16xf32>
    %68 = math.exp %67 : vector<16x16xf32>
    %cst_23 = arith.constant dense<0.000000e+00> : vector<16xf32>
    %69 = vector.multi_reduction <add>, %68, %cst_23 [1] : vector<16x16xf32> to vector<16xf32>
    %70 = vector.shape_cast %69 : vector<16xf32> to vector<16x1xf32>
    %71 = tpu.reciprocal %70 {approx = true} : vector<16x1xf32> -> vector<16x1xf32>
    %72 = vector.broadcast %71 : vector<16x1xf32> to vector<16x16xf32>
    %73 = arith.mulf %68, %72 : vector<16x16xf32>
    %74 = arith.truncf %73 : vector<16x16xf32> to vector<16x16xbf16>
    %cst_24 = arith.constant dense<0.000000e+00> : vector<16x64xf32>
    %75 = tpu.matmul %74, %60, %cst_24 {dimension_numbers = #tpu.dot_dimension_numbers<[1], [0], [0], [1], [0, 0, 1, 1], [], []>} : vector<16x16xbf16>, vector<16x64xbf16>, vector<16x64xf32> -> vector<16x64xf32>
    %76 = vector.extract_strided_slice %11 {offsets = [16, 64], sizes = [16, 64], strides = [1, 1]} : vector<32x384xf32> to vector<16x64xf32>
    %77 = arith.truncf %76 : vector<16x64xf32> to vector<16x64xbf16>
    %78 = vector.extract_strided_slice %11 {offsets = [16, 192], sizes = [16, 64], strides = [1, 1]} : vector<32x384xf32> to vector<16x64xf32>
    %79 = arith.truncf %78 : vector<16x64xf32> to vector<16x64xbf16>
    %80 = vector.extract_strided_slice %11 {offsets = [16, 320], sizes = [16, 64], strides = [1, 1]} : vector<32x384xf32> to vector<16x64xf32>
    %81 = arith.truncf %80 : vector<16x64xf32> to vector<16x64xbf16>
    %cst_25 = arith.constant dense<0.000000e+00> : vector<16x16xf32>
    %82 = tpu.matmul %77, %79, %cst_25 {dimension_numbers = #tpu.dot_dimension_numbers<[1], [1], [0], [0], [0, 0, 1, 0], [], []>} : vector<16x64xbf16>, vector<16x64xbf16>, vector<16x16xf32> -> vector<16x16xf32>
    %cst_26 = arith.constant 1.250000e-01 : f32
    %83 = vector.broadcast %cst_26 : f32 to vector<16x16xf32>
    %84 = arith.mulf %82, %83 : vector<16x16xf32>
    %cst_27 = arith.constant dense<0xFF800000> : vector<16xf32>
    %85 = vector.multi_reduction <maximumf>, %84, %cst_27 [1] : vector<16x16xf32> to vector<16xf32>
    %86 = vector.shape_cast %85 : vector<16xf32> to vector<16x1xf32>
    %87 = vector.broadcast %86 : vector<16x1xf32> to vector<16x16xf32>
    %88 = arith.subf %84, %87 : vector<16x16xf32>
    %89 = math.exp %88 : vector<16x16xf32>
    %cst_28 = arith.constant dense<0.000000e+00> : vector<16xf32>
    %90 = vector.multi_reduction <add>, %89, %cst_28 [1] : vector<16x16xf32> to vector<16xf32>
    %91 = vector.shape_cast %90 : vector<16xf32> to vector<16x1xf32>
    %92 = tpu.reciprocal %91 {approx = true} : vector<16x1xf32> -> vector<16x1xf32>
    %93 = vector.broadcast %92 : vector<16x1xf32> to vector<16x16xf32>
    %94 = arith.mulf %89, %93 : vector<16x16xf32>
    %95 = arith.truncf %94 : vector<16x16xf32> to vector<16x16xbf16>
    %cst_29 = arith.constant dense<0.000000e+00> : vector<16x64xf32>
    %96 = tpu.matmul %95, %81, %cst_29 {dimension_numbers = #tpu.dot_dimension_numbers<[1], [0], [0], [1], [0, 0, 1, 1], [], []>} : vector<16x16xbf16>, vector<16x64xbf16>, vector<16x64xf32> -> vector<16x64xf32>
    %97 = tpu.concatenate %75, %96 in 1 : vector<16x64xf32>, vector<16x64xf32> -> vector<16x128xf32>
    %98 = tpu.concatenate %54, %97 in 0 : vector<16x128xf32>, vector<16x128xf32> -> vector<32x128xf32>
    %99 = arith.truncf %98 : vector<32x128xf32> to vector<32x128xbf16>
    %c0_30 = arith.constant 0 : index
    %c0_31 = arith.constant 0 : index
    %c0_32 = arith.constant 0 : index
    %c0_33 = arith.constant 0 : index
    %100 = vector.load %arg7[%c0_30, %c0_31, %c0_32, %c0_33] : memref<1x1x128x128xbf16, #tpu.memory_space<vmem>>, vector<1x1x128x128xbf16>
    %101 = vector.shape_cast %100 : vector<1x1x128x128xbf16> to vector<128x128xbf16>
    %cst_34 = arith.constant dense<0.000000e+00> : vector<32x128xf32>
    %102 = tpu.matmul %99, %101, %cst_34 {dimension_numbers = #tpu.dot_dimension_numbers<[1], [0], [0], [1], [0, 0, 1, 1], [], []>} : vector<32x128xbf16>, vector<128x128xbf16>, vector<32x128xf32> -> vector<32x128xf32>
    %c0_35 = arith.constant 0 : index
    %c0_36 = arith.constant 0 : index
    %c0_37 = arith.constant 0 : index
    %c0_38 = arith.constant 0 : index
    %103 = vector.load %arg8[%c0_35, %c0_36, %c0_37, %c0_38] : memref<1x1x1x128xf32, #tpu.memory_space<vmem>>, vector<1x1x1x128xf32>
    %104 = vector.shape_cast %103 : vector<1x1x1x128xf32> to vector<1x128xf32>
    %105 = vector.broadcast %104 : vector<1x128xf32> to vector<32x128xf32>
    %106 = arith.addf %102, %105 : vector<32x128xf32>
    %107 = arith.addf %3, %106 : vector<32x128xf32>
    %c0_39 = arith.constant 0 : index
    %c0_40 = arith.constant 0 : index
    %c0_41 = arith.constant 0 : index
    %c0_42 = arith.constant 0 : index
    %108 = vector.load %arg9[%c0_39, %c0_40, %c0_41, %c0_42] : memref<1x1x1x128xf32, #tpu.memory_space<vmem>>, vector<1x1x1x128xf32>
    %109 = vector.shape_cast %108 : vector<1x1x1x128xf32> to vector<1x128xf32>
    %c0_43 = arith.constant 0 : index
    %c0_44 = arith.constant 0 : index
    %c0_45 = arith.constant 0 : index
    %c0_46 = arith.constant 0 : index
    %110 = vector.load %arg10[%c0_43, %c0_44, %c0_45, %c0_46] : memref<1x1x1x128xf32, #tpu.memory_space<vmem>>, vector<1x1x1x128xf32>
    %111 = vector.shape_cast %110 : vector<1x1x1x128xf32> to vector<1x128xf32>
    %cst_47 = arith.constant dense<0.000000e+00> : vector<32xf32>
    %112 = vector.multi_reduction <add>, %107, %cst_47 [1] : vector<32x128xf32> to vector<32xf32>
    %113 = vector.shape_cast %112 : vector<32xf32> to vector<32x1xf32>
    %cst_48 = arith.constant 1.280000e+02 : f32
    %114 = vector.broadcast %cst_48 : f32 to vector<32x1xf32>
    %115 = arith.divf %113, %114 : vector<32x1xf32>
    %116 = vector.broadcast %115 : vector<32x1xf32> to vector<32x128xf32>
    %117 = arith.subf %107, %116 : vector<32x128xf32>
    %118 = arith.mulf %117, %117 : vector<32x128xf32>
    %cst_49 = arith.constant dense<0.000000e+00> : vector<32xf32>
    %119 = vector.multi_reduction <add>, %118, %cst_49 [1] : vector<32x128xf32> to vector<32xf32>
    %120 = vector.shape_cast %119 : vector<32xf32> to vector<32x1xf32>
    %cst_50 = arith.constant 1.280000e+02 : f32
    %121 = vector.broadcast %cst_50 : f32 to vector<32x1xf32>
    %122 = arith.divf %120, %121 : vector<32x1xf32>
    %cst_51 = arith.constant 9.99999996E-13 : f32
    %123 = vector.broadcast %cst_51 : f32 to vector<32x1xf32>
    %124 = arith.addf %122, %123 : vector<32x1xf32>
    %125 = math.rsqrt %124 : vector<32x1xf32>
    %126 = vector.broadcast %125 : vector<32x1xf32> to vector<32x128xf32>
    %127 = arith.mulf %117, %126 : vector<32x128xf32>
    %128 = vector.broadcast %109 : vector<1x128xf32> to vector<32x128xf32>
    %129 = arith.mulf %127, %128 : vector<32x128xf32>
    %130 = vector.broadcast %111 : vector<1x128xf32> to vector<32x128xf32>
    %131 = arith.addf %129, %130 : vector<32x128xf32>
    %132 = arith.truncf %131 : vector<32x128xf32> to vector<32x128xbf16>
    %c0_52 = arith.constant 0 : index
    %c0_53 = arith.constant 0 : index
    %c0_54 = arith.constant 0 : index
    %c0_55 = arith.constant 0 : index
    %133 = vector.load %arg11[%c0_52, %c0_53, %c0_54, %c0_55] : memref<1x1x128x256xbf16, #tpu.memory_space<vmem>>, vector<1x1x128x256xbf16>
    %134 = vector.shape_cast %133 : vector<1x1x128x256xbf16> to vector<128x256xbf16>
    %cst_56 = arith.constant dense<0.000000e+00> : vector<32x256xf32>
    %135 = tpu.matmul %132, %134, %cst_56 {dimension_numbers = #tpu.dot_dimension_numbers<[1], [0], [0], [1], [0, 0, 1, 1], [], []>} : vector<32x128xbf16>, vector<128x256xbf16>, vector<32x256xf32> -> vector<32x256xf32>
    %c0_57 = arith.constant 0 : index
    %c0_58 = arith.constant 0 : index
    %c0_59 = arith.constant 0 : index
    %c0_60 = arith.constant 0 : index
    %136 = vector.load %arg12[%c0_57, %c0_58, %c0_59, %c0_60] : memref<1x1x1x256xf32, #tpu.memory_space<vmem>>, vector<1x1x1x256xf32>
    %137 = vector.shape_cast %136 : vector<1x1x1x256xf32> to vector<1x256xf32>
    %138 = vector.broadcast %137 : vector<1x256xf32> to vector<32x256xf32>
    %139 = arith.addf %135, %138 : vector<32x256xf32>
    %140 = arith.mulf %139, %139 : vector<32x256xf32>
    %141 = arith.mulf %139, %140 : vector<32x256xf32>
    %cst_61 = arith.constant 4.471500e-02 : f32
    %142 = vector.broadcast %cst_61 : f32 to vector<32x256xf32>
    %143 = arith.mulf %142, %141 : vector<32x256xf32>
    %144 = arith.addf %139, %143 : vector<32x256xf32>
    %cst_62 = arith.constant 0.797884583 : f32
    %145 = vector.broadcast %cst_62 : f32 to vector<32x256xf32>
    %146 = arith.mulf %145, %144 : vector<32x256xf32>
    %147 = math.tanh %146 : vector<32x256xf32>
    %cst_63 = arith.constant 1.000000e+00 : f32
    %148 = vector.broadcast %cst_63 : f32 to vector<32x256xf32>
    %149 = arith.addf %148, %147 : vector<32x256xf32>
    %cst_64 = arith.constant 5.000000e-01 : f32
    %150 = vector.broadcast %cst_64 : f32 to vector<32x256xf32>
    %151 = arith.mulf %150, %149 : vector<32x256xf32>
    %152 = arith.mulf %139, %151 : vector<32x256xf32>
    %153 = arith.truncf %152 : vector<32x256xf32> to vector<32x256xbf16>
    %c0_65 = arith.constant 0 : index
    %c0_66 = arith.constant 0 : index
    %c0_67 = arith.constant 0 : index
    %c0_68 = arith.constant 0 : index
    %154 = vector.load %arg13[%c0_65, %c0_66, %c0_67, %c0_68] : memref<1x1x256x128xbf16, #tpu.memory_space<vmem>>, vector<1x1x256x128xbf16>
    %155 = vector.shape_cast %154 : vector<1x1x256x128xbf16> to vector<256x128xbf16>
    %cst_69 = arith.constant dense<0.000000e+00> : vector<32x128xf32>
    %156 = tpu.matmul %153, %155, %cst_69 {dimension_numbers = #tpu.dot_dimension_numbers<[1], [0], [0], [1], [0, 0, 1, 1], [], []>} : vector<32x256xbf16>, vector<256x128xbf16>, vector<32x128xf32> -> vector<32x128xf32>
    %c0_70 = arith.constant 0 : index
    %c0_71 = arith.constant 0 : index
    %c0_72 = arith.constant 0 : index
    %c0_73 = arith.constant 0 : index
    %157 = vector.load %arg14[%c0_70, %c0_71, %c0_72, %c0_73] : memref<1x1x1x128xf32, #tpu.memory_space<vmem>>, vector<1x1x1x128xf32>
    %158 = vector.shape_cast %157 : vector<1x1x1x128xf32> to vector<1x128xf32>
    %159 = vector.broadcast %158 : vector<1x128xf32> to vector<32x128xf32>
    %160 = arith.addf %156, %159 : vector<32x128xf32>
    %161 = arith.addf %131, %160 : vector<32x128xf32>
    %c0_74 = arith.constant 0 : index
    %c0_75 = arith.constant 0 : index
    %c0_76 = arith.constant 0 : index
    %c0_77 = arith.constant 0 : index
    %162 = vector.load %arg15[%c0_74, %c0_75, %c0_76, %c0_77] : memref<1x1x1x128xf32, #tpu.memory_space<vmem>>, vector<1x1x1x128xf32>
    %163 = vector.shape_cast %162 : vector<1x1x1x128xf32> to vector<1x128xf32>
    %c0_78 = arith.constant 0 : index
    %c0_79 = arith.constant 0 : index
    %c0_80 = arith.constant 0 : index
    %c0_81 = arith.constant 0 : index
    %164 = vector.load %arg16[%c0_78, %c0_79, %c0_80, %c0_81] : memref<1x1x1x128xf32, #tpu.memory_space<vmem>>, vector<1x1x1x128xf32>
    %165 = vector.shape_cast %164 : vector<1x1x1x128xf32> to vector<1x128xf32>
    %cst_82 = arith.constant dense<0.000000e+00> : vector<32xf32>
    %166 = vector.multi_reduction <add>, %161, %cst_82 [1] : vector<32x128xf32> to vector<32xf32>
    %167 = vector.shape_cast %166 : vector<32xf32> to vector<32x1xf32>
    %cst_83 = arith.constant 1.280000e+02 : f32
    %168 = vector.broadcast %cst_83 : f32 to vector<32x1xf32>
    %169 = arith.divf %167, %168 : vector<32x1xf32>
    %170 = vector.broadcast %169 : vector<32x1xf32> to vector<32x128xf32>
    %171 = arith.subf %161, %170 : vector<32x128xf32>
    %172 = arith.mulf %171, %171 : vector<32x128xf32>
    %cst_84 = arith.constant dense<0.000000e+00> : vector<32xf32>
    %173 = vector.multi_reduction <add>, %172, %cst_84 [1] : vector<32x128xf32> to vector<32xf32>
    %174 = vector.shape_cast %173 : vector<32xf32> to vector<32x1xf32>
    %cst_85 = arith.constant 1.280000e+02 : f32
    %175 = vector.broadcast %cst_85 : f32 to vector<32x1xf32>
    %176 = arith.divf %174, %175 : vector<32x1xf32>
    %cst_86 = arith.constant 9.99999996E-13 : f32
    %177 = vector.broadcast %cst_86 : f32 to vector<32x1xf32>
    %178 = arith.addf %176, %177 : vector<32x1xf32>
    %179 = math.rsqrt %178 : vector<32x1xf32>
    %180 = vector.broadcast %179 : vector<32x1xf32> to vector<32x128xf32>
    %181 = arith.mulf %171, %180 : vector<32x128xf32>
    %182 = vector.broadcast %163 : vector<1x128xf32> to vector<32x128xf32>
    %183 = arith.mulf %181, %182 : vector<32x128xf32>
    %184 = vector.broadcast %165 : vector<1x128xf32> to vector<32x128xf32>
    %185 = arith.addf %183, %184 : vector<32x128xf32>
    %c0_87 = arith.constant 0 : index
    %c0_88 = arith.constant 0 : index
    %186 = vector.load %arg20[%c0_87, %c0_88] : memref<32x128xf32, #tpu.memory_space<vmem>>, vector<32x128xf32>
    tpu.vector_store %arg20[%c0_87, %c0_88], %185 {strides = array<i32>} : memref<32x128xf32, #tpu.memory_space<vmem>>, vector<32x128xf32>,
    %c1_i32 = arith.constant 1 : i32
    %187 = arith.cmpi eq, %arg1, %c1_i32 : i32
    %188 = arith.extui %187 : i1 to i32
    %c0_i32_89 = arith.constant 0 : i32
    %189 = arith.cmpi ne, %188, %c0_i32_89 : i32
    scf.if %189 {
      %190 = vector.extract_strided_slice %185 {offsets = [0, 0], sizes = [1, 128], strides = [1, 1]} : vector<32x128xf32> to vector<1x128xf32>
      %191 = vector.extract_strided_slice %185 {offsets = [16, 0], sizes = [1, 128], strides = [1, 1]} : vector<32x128xf32> to vector<1x128xf32>
      %192 = tpu.concatenate %190, %191 in 0 : vector<1x128xf32>, vector<1x128xf32> -> vector<2x128xf32>
      %193 = arith.truncf %192 : vector<2x128xf32> to vector<2x128xbf16>
      %c0_90 = arith.constant 0 : index
      %c0_91 = arith.constant 0 : index
      %c0_92 = arith.constant 0 : index
      %194 = vector.load %arg17[%c0_90, %c0_91, %c0_92] : memref<1x128x128xbf16, #tpu.memory_space<vmem>>, vector<1x128x128xbf16>
      %195 = vector.shape_cast %194 : vector<1x128x128xbf16> to vector<128x128xbf16>
      %cst_93 = arith.constant dense<0.000000e+00> : vector<2x128xf32>
      %196 = tpu.matmul %193, %195, %cst_93 {dimension_numbers = #tpu.dot_dimension_numbers<[1], [0], [0], [1], [0, 0, 1, 1], [], []>} : vector<2x128xbf16>, vector<128x128xbf16>, vector<2x128xf32> -> vector<2x128xf32>
      %c0_94 = arith.constant 0 : index
      %c0_95 = arith.constant 0 : index
      %c0_96 = arith.constant 0 : index
      %197 = vector.load %arg18[%c0_94, %c0_95, %c0_96] : memref<1x1x128xf32, #tpu.memory_space<vmem>>, vector<1x1x128xf32>
      %198 = vector.shape_cast %197 : vector<1x1x128xf32> to vector<1x128xf32>
      %199 = vector.broadcast %198 : vector<1x128xf32> to vector<2x128xf32>
      %200 = arith.addf %196, %199 : vector<2x128xf32>
      %201 = math.tanh %200 : vector<2x128xf32>
      %c0_97 = arith.constant 0 : index
      %c0_98 = arith.constant 0 : index
      %c0_99 = arith.constant 0 : index
      %202 = vector.load %arg19[%c0_97, %c0_98, %c0_99] : memref<1x2x128xf32, #tpu.memory_space<vmem>>, vector<1x2x128xf32>
      %203 = vector.shape_cast %202 : vector<1x2x128xf32> to vector<2x128xf32>
      %204 = vector.shape_cast %201 : vector<2x128xf32> to vector<1x2x128xf32>
      tpu.vector_store %arg19[%c0_97, %c0_98, %c0_99], %204 {strides = array<i32>} : memref<1x2x128xf32, #tpu.memory_space<vmem>>, vector<1x2x128xf32>,
    } else {
    }
    return
  }
  func.func @transform_0(%arg0: i32, %arg1: i32) -> (i32, i32, i32) {
    %c0_i32 = arith.constant 0 : i32
    %c0_i32_0 = arith.constant 0 : i32
    %c0_i32_1 = arith.constant 0 : i32
    return %arg0, %c0_i32, %c0_i32_0 : i32, i32, i32
  }
  func.func @transform_1(%arg0: i32, %arg1: i32) -> (i32, i32, i32) {
    %c0_i32 = arith.constant 0 : i32
    %c0_i32_0 = arith.constant 0 : i32
    %c0_i32_1 = arith.constant 0 : i32
    return %arg0, %c0_i32, %c0_i32_0 : i32, i32, i32
  }
  func.func @transform_2(%arg0: i32, %arg1: i32) -> (i32, i32, i32) {
    %c0_i32 = arith.constant 0 : i32
    %c0_i32_0 = arith.constant 0 : i32
    %c0_i32_1 = arith.constant 0 : i32
    return %arg0, %c0_i32, %c0_i32_0 : i32, i32, i32
  }
  func.func @transform_3(%arg0: i32, %arg1: i32) -> (i32, i32, i32, i32) {
    %c0_i32 = arith.constant 0 : i32
    %c0_i32_0 = arith.constant 0 : i32
    %c0_i32_1 = arith.constant 0 : i32
    return %arg0, %arg1, %c0_i32, %c0_i32_0 : i32, i32, i32, i32
  }
  func.func @transform_4(%arg0: i32, %arg1: i32) -> (i32, i32, i32, i32) {
    %c0_i32 = arith.constant 0 : i32
    %c0_i32_0 = arith.constant 0 : i32
    %c0_i32_1 = arith.constant 0 : i32
    return %arg0, %arg1, %c0_i32, %c0_i32_0 : i32, i32, i32, i32
  }
  func.func @transform_5(%arg0: i32, %arg1: i32) -> (i32, i32, i32, i32) {
    %c0_i32 = arith.constant 0 : i32
    %c0_i32_0 = arith.constant 0 : i32
    %c0_i32_1 = arith.constant 0 : i32
    return %arg0, %arg1, %c0_i32, %c0_i32_0 : i32, i32, i32, i32
  }
  func.func @transform_6(%arg0: i32, %arg1: i32) -> (i32, i32, i32, i32) {
    %c0_i32 = arith.constant 0 : i32
    %c0_i32_0 = arith.constant 0 : i32
    %c0_i32_1 = arith.constant 0 : i32
    return %arg0, %arg1, %c0_i32, %c0_i32_0 : i32, i32, i32, i32
  }
  func.func @transform_7(%arg0: i32, %arg1: i32) -> (i32, i32, i32, i32) {
    %c0_i32 = arith.constant 0 : i32
    %c0_i32_0 = arith.constant 0 : i32
    %c0_i32_1 = arith.constant 0 : i32
    return %arg0, %arg1, %c0_i32, %c0_i32_0 : i32, i32, i32, i32
  }
  func.func @transform_8(%arg0: i32, %arg1: i32) -> (i32, i32, i32, i32) {
    %c0_i32 = arith.constant 0 : i32
    %c0_i32_0 = arith.constant 0 : i32
    %c0_i32_1 = arith.constant 0 : i32
    return %arg0, %arg1, %c0_i32, %c0_i32_0 : i32, i32, i32, i32
  }
  func.func @transform_9(%arg0: i32, %arg1: i32) -> (i32, i32, i32, i32) {
    %c0_i32 = arith.constant 0 : i32
    %c0_i32_0 = arith.constant 0 : i32
    %c0_i32_1 = arith.constant 0 : i32
    return %arg0, %arg1, %c0_i32, %c0_i32_0 : i32, i32, i32, i32
  }
  func.func @transform_10(%arg0: i32, %arg1: i32) -> (i32, i32, i32, i32) {
    %c0_i32 = arith.constant 0 : i32
    %c0_i32_0 = arith.constant 0 : i32
    %c0_i32_1 = arith.constant 0 : i32
    return %arg0, %arg1, %c0_i32, %c0_i32_0 : i32, i32, i32, i32
  }
  func.func @transform_11(%arg0: i32, %arg1: i32) -> (i32, i32, i32, i32) {
    %c0_i32 = arith.constant 0 : i32
    %c0_i32_0 = arith.constant 0 : i32
    %c0_i32_1 = arith.constant 0 : i32
    return %arg0, %arg1, %c0_i32, %c0_i32_0 : i32, i32, i32, i32
  }
  func.func @transform_12(%arg0: i32, %arg1: i32) -> (i32, i32, i32, i32) {
    %c0_i32 = arith.constant 0 : i32
    %c0_i32_0 = arith.constant 0 : i32
    %c0_i32_1 = arith.constant 0 : i32
    return %arg0, %arg1, %c0_i32, %c0_i32_0 : i32, i32, i32, i32
  }
  func.func @transform_13(%arg0: i32, %arg1: i32) -> (i32, i32, i32, i32) {
    %c0_i32 = arith.constant 0 : i32
    %c0_i32_0 = arith.constant 0 : i32
    %c0_i32_1 = arith.constant 0 : i32
    return %arg0, %arg1, %c0_i32, %c0_i32_0 : i32, i32, i32, i32
  }
  func.func @transform_14(%arg0: i32, %arg1: i32) -> (i32, i32, i32, i32) {
    %c0_i32 = arith.constant 0 : i32
    %c0_i32_0 = arith.constant 0 : i32
    %c0_i32_1 = arith.constant 0 : i32
    return %arg0, %arg1, %c0_i32, %c0_i32_0 : i32, i32, i32, i32
  }
  func.func @transform_15(%arg0: i32, %arg1: i32) -> (i32, i32, i32) {
    %c0_i32 = arith.constant 0 : i32
    %c0_i32_0 = arith.constant 0 : i32
    %c0_i32_1 = arith.constant 0 : i32
    return %arg0, %c0_i32, %c0_i32_0 : i32, i32, i32
  }
  func.func @transform_16(%arg0: i32, %arg1: i32) -> (i32, i32, i32) {
    %c0_i32 = arith.constant 0 : i32
    %c0_i32_0 = arith.constant 0 : i32
    %c0_i32_1 = arith.constant 0 : i32
    return %arg0, %c0_i32, %c0_i32_0 : i32, i32, i32
  }
  func.func @transform_17(%arg0: i32, %arg1: i32) -> (i32, i32, i32) {
    %c0_i32 = arith.constant 0 : i32
    %c0_i32_0 = arith.constant 0 : i32
    %c0_i32_1 = arith.constant 0 : i32
    return %arg0, %c0_i32, %c0_i32_0 : i32, i32, i32
  }
}

</mosaic_0001>

<llo_original>
// kernel: bi_encoder_forward.1
$region0: #{bi_encoder_forward.1}
  #allocation0 [shape = 'u32[]', space=smem, size = 0x4, offset = 0x4, fixed_abs, tag = 'smem constant byte address 0x4 - core index']
  #allocation1 [shape = 'u32[144,128]{1,0:T(1,128)}', space=vmem, size = 0x12000, scoped, tag = 'internal scratch']
  #allocation2 [shape = 'f32[32,128]{1,0:T(8,128)}', space=vmem, size = 0x4000, scoped, tag = 'scratch operand']
  %s0 = inlined_call_operand.vmem [shape: f32[2,32,128], index: 0, kind: input, shape index: {}]
  %s1 = inlined_call_operand.vmem [shape: f32[2,1,128], index: 1, kind: input, shape index: {}]
  %s2 = inlined_call_operand.vmem [shape: f32[2,1,128], index: 2, kind: input, shape index: {}]
  %s3 = inlined_call_operand.vmem [shape: bf16[2,2,128,384], index: 3, kind: input, shape index: {}]
  %s4 = inlined_call_operand.vmem [shape: f32[2,2,1,384], index: 4, kind: input, shape index: {}]
  %s5 = inlined_call_operand.vmem [shape: bf16[2,2,128,128], index: 5, kind: input, shape index: {}]
  %s6 = inlined_call_operand.vmem [shape: f32[2,2,1,128], index: 6, kind: input, shape index: {}]
  %s7 = inlined_call_operand.vmem [shape: f32[2,2,1,128], index: 7, kind: input, shape index: {}]
  %s8 = inlined_call_operand.vmem [shape: f32[2,2,1,128], index: 8, kind: input, shape index: {}]
  %s9 = inlined_call_operand.vmem [shape: bf16[2,2,128,256], index: 9, kind: input, shape index: {}]
  %s10 = inlined_call_operand.vmem [shape: f32[2,2,1,256], index: 10, kind: input, shape index: {}]
  %s11 = inlined_call_operand.vmem [shape: bf16[2,2,256,128], index: 11, kind: input, shape index: {}]
  %s12 = inlined_call_operand.vmem [shape: f32[2,2,1,128], index: 12, kind: input, shape index: {}]
  %s13 = inlined_call_operand.vmem [shape: f32[2,2,1,128], index: 13, kind: input, shape index: {}]
  %s14 = inlined_call_operand.vmem [shape: f32[2,2,1,128], index: 14, kind: input, shape index: {}]
  %s15 = inlined_call_operand.vmem [shape: bf16[2,128,128], index: 15, kind: input, shape index: {}]
  %s16 = inlined_call_operand.vmem [shape: f32[2,1,128], index: 16, kind: input, shape index: {}]
  %s17 = inlined_call_operand.vmem [shape: f32[2,2,128], index: 17, kind: output, shape index: {}]
  %s18 = sld [smem:[#allocation0]]
  $region109: #{bi_encoder_forward.1} parent=0
    _
  %s20 = ssub.s32 1, %s18
  %s21 = scalar_select 0, %s20, %s18
  loop: start=0, step=1, limit=6
  $region2: #{bi_encoder_forward.1} parent=0 // loop_pre_header
    _
  $region3: #{bi_encoder_forward.1} parent=0 // loop_header
    %s23 = sphi 0, %s27
    %p24 = scmp.ge.s32.totalorder %s23, 6
    %s30 = sphi 0, %s42
    %s31 = sphi 0, %s38
    %s32 = sphi 0, %s30
    %s33 = sphi 0, %s31
    %s34 = sphi 0, %s32
    %s35 = sphi 0, %s33
    %s45 = sphi 0, %s47
    %s48 = sphi 0, %s45
    %s49 = sphi 0, %s48
    %s65 = sphi 0, %s49
    %s71 = sphi 0, %s73
    %s74 = sphi 0, %s71
    %s75 = sphi 0, %s74
    %s91 = sphi 0, %s75
    %s97 = sphi 0, %s99
    %s100 = sphi 0, %s97
    %s101 = sphi 0, %s100
    %s117 = sphi 0, %s101
    %s125 = sphi 0, %s127
    %s128 = sphi 0, %s125
    %s129 = sphi 0, %s128
    %s145 = sphi 0, %s129
    %s153 = sphi 0, %s155
    %s156 = sphi 0, %s153
    %s157 = sphi 0, %s156
    %s173 = sphi 0, %s157
    %s181 = sphi 0, %s183
    %s184 = sphi 0, %s181
    %s185 = sphi 0, %s184
    %s201 = sphi 0, %s185
    %s209 = sphi 0, %s211
    %s212 = sphi 0, %s209
    %s213 = sphi 0, %s212
    %s229 = sphi 0, %s213
    %s237 = sphi 0, %s239
    %s240 = sphi 0, %s237
    %s241 = sphi 0, %s240
    %s257 = sphi 0, %s241
    %s265 = sphi 0, %s267
    %s268 = sphi 0, %s265
    %s269 = sphi 0, %s268
    %s285 = sphi 0, %s269
    %s293 = sphi 0, %s295
    %s296 = sphi 0, %s293
    %s297 = sphi 0, %s296
    %s313 = sphi 0, %s297
    %s321 = sphi 0, %s323
    %s324 = sphi 0, %s321
    %s325 = sphi 0, %s324
    %s341 = sphi 0, %s325
    %s349 = sphi 0, %s351
    %s352 = sphi 0, %s349
    %s353 = sphi 0, %s352
    %s369 = sphi 0, %s353
    %s377 = sphi 0, %s379
    %s380 = sphi 0, %s377
    %s381 = sphi 0, %s380
    %s397 = sphi 0, %s381
    %s405 = sphi 0, %s407
    %s408 = sphi 0, %s405
    %s409 = sphi 0, %s408
    %s425 = sphi 0, %s409
    %s433 = sphi 0, %s435
    %s436 = sphi 0, %s433
    %s437 = sphi 0, %s436
    %s453 = sphi 0, %s437
    %s459 = sphi 0, %s461
    %s462 = sphi 0, %s459
    %s463 = sphi 0, %s462
    %s479 = sphi 0, %s463
    %s485 = sphi 0, %s487
    %s488 = sphi 0, %s485
    %s489 = sphi 0, %s488
    %s505 = sphi 0, %s489
    %s511 = sphi 0, %s513
    %s514 = sphi 0, %s511
    %s515 = sphi 0, %s514
    %s531 = sphi 0, %s515
  $region4: #{bi_encoder_forward.1} parent=0 // loop_header_branch
    %26 = sbr.rel (%p24) target = $region8
  $region5: #{bi_encoder_forward.1} parent=0 // loop_body
    %s28 = ssub.s32 %s23, 1
    %s29 = ssub.s32 %s23, 2
    %s36 = sadd.s32 1, %s31
    %p37 = scmp.ge.s32.totalorder %s36, 2
    %s38 = scalar_select %p37, 0, %s36
    %s39 = sadd.s32 1, %s30
    %s40 = scalar_select %p37, %s39, %s30
    %p41 = scmp.ge.s32.totalorder %s40, 2
    %s42 = scalar_select %p41, 0, %s40
    %s43 = ssub.s32 %s30, %s42
    %p44 = scmp.eq.s32.totalorder %s43, 0
    %s46 = sadd.s32 %s45, 1
    %s47 = scalar_select %p44, %s45, %s46
    %p50 = pneg %p44
    %p51 = scmp.eq.s32.totalorder %s23, 3
    %p52 = por %p50, %p51
    %p53 = scmp.ne.s32.totalorder %s45, %s48
    %p54 = scmp.eq.s32.totalorder %s23, 0
    %p55 = por %p53, %p54
    %p56 = scmp.ne.s32.totalorder %s45, %s48
    %p57 = scmp.eq.s32.totalorder %s28, 3
    %p58 = por %p56, %p57
    %p59 = scmp.ne.s32.totalorder %s48, %s49
    %p60 = scmp.eq.s32.totalorder %s28, 0
    %p61 = por %p59, %p60
    %p62 = scmp.ne.s32.totalorder %s48, %s49
    %p63 = scmp.eq.s32.totalorder %s29, 3
    %p64 = por %p62, %p63
    %p66 = scmp.ne.s32.totalorder %s49, %s65
    %p67 = scmp.eq.s32.totalorder %s29, 0
    %p68 = por %p66, %p67
    %s69 = ssub.s32 %s30, %s42
    %p70 = scmp.eq.s32.totalorder %s69, 0
    %s72 = sadd.s32 %s71, 1
    %s73 = scalar_select %p70, %s71, %s72
    %p76 = pneg %p70
    %p77 = scmp.eq.s32.totalorder %s23, 3
    %p78 = por %p76, %p77
    %p79 = scmp.ne.s32.totalorder %s71, %s74
    %p80 = scmp.eq.s32.totalorder %s23, 0
    %p81 = por %p79, %p80
    %p82 = scmp.ne.s32.totalorder %s71, %s74
    %p83 = scmp.eq.s32.totalorder %s28, 3
    %p84 = por %p82, %p83
    %p85 = scmp.ne.s32.totalorder %s74, %s75
    %p86 = scmp.eq.s32.totalorder %s28, 0
    %p87 = por %p85, %p86
    %p88 = scmp.ne.s32.totalorder %s74, %s75
    %p89 = scmp.eq.s32.totalorder %s29, 3
    %p90 = por %p88, %p89
    %p92 = scmp.ne.s32.totalorder %s75, %s91
    %p93 = scmp.eq.s32.totalorder %s29, 0
    %p94 = por %p92, %p93
    %s95 = ssub.s32 %s30, %s42
    %p96 = scmp.eq.s32.totalorder %s95, 0
    %s98 = sadd.s32 %s97, 1
    %s99 = scalar_select %p96, %s97, %s98
    %p102 = pneg %p96
    %p103 = scmp.eq.s32.totalorder %s23, 3
    %p104 = por %p102, %p103
    %p105 = scmp.ne.s32.totalorder %s97, %s100
    %p106 = scmp.eq.s32.totalorder %s23, 0
    %p107 = por %p105, %p106
    %p108 = scmp.ne.s32.totalorder %s97, %s100
    %p109 = scmp.eq.s32.totalorder %s28, 3
    %p110 = por %p108, %p109
    %p111 = scmp.ne.s32.totalorder %s100, %s101
    %p112 = scmp.eq.s32.totalorder %s28, 0
    %p113 = por %p111, %p112
    %p114 = scmp.ne.s32.totalorder %s100, %s101
    %p115 = scmp.eq.s32.totalorder %s29, 3
    %p116 = por %p114, %p115
    %p118 = scmp.ne.s32.totalorder %s101, %s117
    %p119 = scmp.eq.s32.totalorder %s29, 0
    %p120 = por %p118, %p119
    %s121 = ssub.s32 %s30, %s42
    %s122 = ssub.s32 %s31, %s38
    %s123 = sor.u32 %s121, %s122
    %p124 = scmp.eq.s32.totalorder %s123, 0
    %s126 = sadd.s32 %s125, 1
    %s127 = scalar_select %p124, %s125, %s126
    %p130 = pneg %p124
    %p131 = scmp.eq.s32.totalorder %s23, 3
    %p132 = por %p130, %p131
    %p133 = scmp.ne.s32.totalorder %s125, %s128
    %p134 = scmp.eq.s32.totalorder %s23, 0
    %p135 = por %p133, %p134
    %p136 = scmp.ne.s32.totalorder %s125, %s128
    %p137 = scmp.eq.s32.totalorder %s28, 3
    %p138 = por %p136, %p137
    %p139 = scmp.ne.s32.totalorder %s128, %s129
    %p140 = scmp.eq.s32.totalorder %s28, 0
    %p141 = por %p139, %p140
    %p142 = scmp.ne.s32.totalorder %s128, %s129
    %p143 = scmp.eq.s32.totalorder %s29, 3
    %p144 = por %p142, %p143
    %p146 = scmp.ne.s32.totalorder %s129, %s145
    %p147 = scmp.eq.s32.totalorder %s29, 0
    %p148 = por %p146, %p147
    %s149 = ssub.s32 %s30, %s42
    %s150 = ssub.s32 %s31, %s38
    %s151 = sor.u32 %s149, %s150
    %p152 = scmp.eq.s32.totalorder %s151, 0
    %s154 = sadd.s32 %s153, 1
    %s155 = scalar_select %p152, %s153, %s154
    %p158 = pneg %p152
    %p159 = scmp.eq.s32.totalorder %s23, 3
    %p160 = por %p158, %p159
    %p161 = scmp.ne.s32.totalorder %s153, %s156
    %p162 = scmp.eq.s32.totalorder %s23, 0
    %p163 = por %p161, %p162
    %p164 = scmp.ne.s32.totalorder %s153, %s156
    %p165 = scmp.eq.s32.totalorder %s28, 3
    %p166 = por %p164, %p165
    %p167 = scmp.ne.s32.totalorder %s156, %s157
    %p168 = scmp.eq.s32.totalorder %s28, 0
    %p169 = por %p167, %p168
    %p170 = scmp.ne.s32.totalorder %s156, %s157
    %p171 = scmp.eq.s32.totalorder %s29, 3
    %p172 = por %p170, %p171
    %p174 = scmp.ne.s32.totalorder %s157, %s173
    %p175 = scmp.eq.s32.totalorder %s29, 0
    %p176 = por %p174, %p175
    %s177 = ssub.s32 %s30, %s42
    %s178 = ssub.s32 %s31, %s38
    %s179 = sor.u32 %s177, %s178
    %p180 = scmp.eq.s32.totalorder %s179, 0
    %s182 = sadd.s32 %s181, 1
    %s183 = scalar_select %p180, %s181, %s182
    %p186 = pneg %p180
    %p187 = scmp.eq.s32.totalorder %s23, 3
    %p188 = por %p186, %p187
    %p189 = scmp.ne.s32.totalorder %s181, %s184
    %p190 = scmp.eq.s32.totalorder %s23, 0
    %p191 = por %p189, %p190
    %p192 = scmp.ne.s32.totalorder %s181, %s184
    %p193 = scmp.eq.s32.totalorder %s28, 3
    %p194 = por %p192, %p193
    %p195 = scmp.ne.s32.totalorder %s184, %s185
    %p196 = scmp.eq.s32.totalorder %s28, 0
    %p197 = por %p195, %p196
    %p198 = scmp.ne.s32.totalorder %s184, %s185
    %p199 = scmp.eq.s32.totalorder %s29, 3
    %p200 = por %p198, %p199
    %p202 = scmp.ne.s32.totalorder %s185, %s201
    %p203 = scmp.eq.s32.totalorder %s29, 0
    %p204 = por %p202, %p203
    %s205 = ssub.s32 %s30, %s42
    %s206 = ssub.s32 %s31, %s38
    %s207 = sor.u32 %s205, %s206
    %p208 = scmp.eq.s32.totalorder %s207, 0
    %s210 = sadd.s32 %s209, 1
    %s211 = scalar_select %p208, %s209, %s210
    %p214 = pneg %p208
    %p215 = scmp.eq.s32.totalorder %s23, 3
    %p216 = por %p214, %p215
    %p217 = scmp.ne.s32.totalorder %s209, %s212
    %p218 = scmp.eq.s32.totalorder %s23, 0
    %p219 = por %p217, %p218
    %p220 = scmp.ne.s32.totalorder %s209, %s212
    %p221 = scmp.eq.s32.totalorder %s28, 3
    %p222 = por %p220, %p221
    %p223 = scmp.ne.s32.totalorder %s212, %s213
    %p224 = scmp.eq.s32.totalorder %s28, 0
    %p225 = por %p223, %p224
    %p226 = scmp.ne.s32.totalorder %s212, %s213
    %p227 = scmp.eq.s32.totalorder %s29, 3
    %p228 = por %p226, %p227
    %p230 = scmp.ne.s32.totalorder %s213, %s229
    %p231 = scmp.eq.s32.totalorder %s29, 0
    %p232 = por %p230, %p231
    %s233 = ssub.s32 %s30, %s42
    %s234 = ssub.s32 %s31, %s38
    %s235 = sor.u32 %s233, %s234
    %p236 = scmp.eq.s32.totalorder %s235, 0
    %s238 = sadd.s32 %s237, 1
    %s239 = scalar_select %p236, %s237, %s238
    %p242 = pneg %p236
    %p243 = scmp.eq.s32.totalorder %s23, 3
    %p244 = por %p242, %p243
    %p245 = scmp.ne.s32.totalorder %s237, %s240
    %p246 = scmp.eq.s32.totalorder %s23, 0
    %p247 = por %p245, %p246
    %p248 = scmp.ne.s32.totalorder %s237, %s240
    %p249 = scmp.eq.s32.totalorder %s28, 3
    %p250 = por %p248, %p249
    %p251 = scmp.ne.s32.totalorder %s240, %s241
    %p252 = scmp.eq.s32.totalorder %s28, 0
    %p253 = por %p251, %p252
    %p254 = scmp.ne.s32.totalorder %s240, %s241
    %p255 = scmp.eq.s32.totalorder %s29, 3
    %p256 = por %p254, %p255
    %p258 = scmp.ne.s32.totalorder %s241, %s257
    %p259 = scmp.eq.s32.totalorder %s29, 0
    %p260 = por %p258, %p259
    %s261 = ssub.s32 %s30, %s42
    %s262 = ssub.s32 %s31, %s38
    %s263 = sor.u32 %s261, %s262
    %p264 = scmp.eq.s32.totalorder %s263, 0
    %s266 = sadd.s32 %s265, 1
    %s267 = scalar_select %p264, %s265, %s266
    %p270 = pneg %p264
    %p271 = scmp.eq.s32.totalorder %s23, 3
    %p272 = por %p270, %p271
    %p273 = scmp.ne.s32.totalorder %s265, %s268
    %p274 = scmp.eq.s32.totalorder %s23, 0
    %p275 = por %p273, %p274
    %p276 = scmp.ne.s32.totalorder %s265, %s268
    %p277 = scmp.eq.s32.totalorder %s28, 3
    %p278 = por %p276, %p277
    %p279 = scmp.ne.s32.totalorder %s268, %s269
    %p280 = scmp.eq.s32.totalorder %s28, 0
    %p281 = por %p279, %p280
    %p282 = scmp.ne.s32.totalorder %s268, %s269
    %p283 = scmp.eq.s32.totalorder %s29, 3
    %p284 = por %p282, %p283
    %p286 = scmp.ne.s32.totalorder %s269, %s285
    %p287 = scmp.eq.s32.totalorder %s29, 0
    %p288 = por %p286, %p287
    %s289 = ssub.s32 %s30, %s42
    %s290 = ssub.s32 %s31, %s38
    %s291 = sor.u32 %s289, %s290
    %p292 = scmp.eq.s32.totalorder %s291, 0
    %s294 = sadd.s32 %s293, 1
    %s295 = scalar_select %p292, %s293, %s294
    %p298 = pneg %p292
    %p299 = scmp.eq.s32.totalorder %s23, 3
    %p300 = por %p298, %p299
    %p301 = scmp.ne.s32.totalorder %s293, %s296
    %p302 = scmp.eq.s32.totalorder %s23, 0
    %p303 = por %p301, %p302
    %p304 = scmp.ne.s32.totalorder %s293, %s296
    %p305 = scmp.eq.s32.totalorder %s28, 3
    %p306 = por %p304, %p305
    %p307 = scmp.ne.s32.totalorder %s296, %s297
    %p308 = scmp.eq.s32.totalorder %s28, 0
    %p309 = por %p307, %p308
    %p310 = scmp.ne.s32.totalorder %s296, %s297
    %p311 = scmp.eq.s32.totalorder %s29, 3
    %p312 = por %p310, %p311
    %p314 = scmp.ne.s32.totalorder %s297, %s313
    %p315 = scmp.eq.s32.totalorder %s29, 0
    %p316 = por %p314, %p315
    %s317 = ssub.s32 %s30, %s42
    %s318 = ssub.s32 %s31, %s38
    %s319 = sor.u32 %s317, %s318
    %p320 = scmp.eq.s32.totalorder %s319, 0
    %s322 = sadd.s32 %s321, 1
    %s323 = scalar_select %p320, %s321, %s322
    %p326 = pneg %p320
    %p327 = scmp.eq.s32.totalorder %s23, 3
    %p328 = por %p326, %p327
    %p329 = scmp.ne.s32.totalorder %s321, %s324
    %p330 = scmp.eq.s32.totalorder %s23, 0
    %p331 = por %p329, %p330
    %p332 = scmp.ne.s32.totalorder %s321, %s324
    %p333 = scmp.eq.s32.totalorder %s28, 3
    %p334 = por %p332, %p333
    %p335 = scmp.ne.s32.totalorder %s324, %s325
    %p336 = scmp.eq.s32.totalorder %s28, 0
    %p337 = por %p335, %p336
    %p338 = scmp.ne.s32.totalorder %s324, %s325
    %p339 = scmp.eq.s32.totalorder %s29, 3
    %p340 = por %p338, %p339
    %p342 = scmp.ne.s32.totalorder %s325, %s341
    %p343 = scmp.eq.s32.totalorder %s29, 0
    %p344 = por %p342, %p343
    %s345 = ssub.s32 %s30, %s42
    %s346 = ssub.s32 %s31, %s38
    %s347 = sor.u32 %s345, %s346
    %p348 = scmp.eq.s32.totalorder %s347, 0
    %s350 = sadd.s32 %s349, 1
    %s351 = scalar_select %p348, %s349, %s350
    %p354 = pneg %p348
    %p355 = scmp.eq.s32.totalorder %s23, 3
    %p356 = por %p354, %p355
    %p357 = scmp.ne.s32.totalorder %s349, %s352
    %p358 = scmp.eq.s32.totalorder %s23, 0
    %p359 = por %p357, %p358
    %p360 = scmp.ne.s32.totalorder %s349, %s352
    %p361 = scmp.eq.s32.totalorder %s28, 3
    %p362 = por %p360, %p361
    %p363 = scmp.ne.s32.totalorder %s352, %s353
    %p364 = scmp.eq.s32.totalorder %s28, 0
    %p365 = por %p363, %p364
    %p366 = scmp.ne.s32.totalorder %s352, %s353
    %p367 = scmp.eq.s32.totalorder %s29, 3
    %p368 = por %p366, %p367
    %p370 = scmp.ne.s32.totalorder %s353, %s369
    %p371 = scmp.eq.s32.totalorder %s29, 0
    %p372 = por %p370, %p371
    %s373 = ssub.s32 %s30, %s42
    %s374 = ssub.s32 %s31, %s38
    %s375 = sor.u32 %s373, %s374
    %p376 = scmp.eq.s32.totalorder %s375, 0
    %s378 = sadd.s32 %s377, 1
    %s379 = scalar_select %p376, %s377, %s378
    %p382 = pneg %p376
    %p383 = scmp.eq.s32.totalorder %s23, 3
    %p384 = por %p382, %p383
    %p385 = scmp.ne.s32.totalorder %s377, %s380
    %p386 = scmp.eq.s32.totalorder %s23, 0
    %p387 = por %p385, %p386
    %p388 = scmp.ne.s32.totalorder %s377, %s380
    %p389 = scmp.eq.s32.totalorder %s28, 3
    %p390 = por %p388, %p389
    %p391 = scmp.ne.s32.totalorder %s380, %s381
    %p392 = scmp.eq.s32.totalorder %s28, 0
    %p393 = por %p391, %p392
    %p394 = scmp.ne.s32.totalorder %s380, %s381
    %p395 = scmp.eq.s32.totalorder %s29, 3
    %p396 = por %p394, %p395
    %p398 = scmp.ne.s32.totalorder %s381, %s397
    %p399 = scmp.eq.s32.totalorder %s29, 0
    %p400 = por %p398, %p399
    %s401 = ssub.s32 %s30, %s42
    %s402 = ssub.s32 %s31, %s38
    %s403 = sor.u32 %s401, %s402
    %p404 = scmp.eq.s32.totalorder %s403, 0
    %s406 = sadd.s32 %s405, 1
    %s407 = scalar_select %p404, %s405, %s406
    %p410 = pneg %p404
    %p411 = scmp.eq.s32.totalorder %s23, 3
    %p412 = por %p410, %p411
    %p413 = scmp.ne.s32.totalorder %s405, %s408
    %p414 = scmp.eq.s32.totalorder %s23, 0
    %p415 = por %p413, %p414
    %p416 = scmp.ne.s32.totalorder %s405, %s408
    %p417 = scmp.eq.s32.totalorder %s28, 3
    %p418 = por %p416, %p417
    %p419 = scmp.ne.s32.totalorder %s408, %s409
    %p420 = scmp.eq.s32.totalorder %s28, 0
    %p421 = por %p419, %p420
    %p422 = scmp.ne.s32.totalorder %s408, %s409
    %p423 = scmp.eq.s32.totalorder %s29, 3
    %p424 = por %p422, %p423
    %p426 = scmp.ne.s32.totalorder %s409, %s425
    %p427 = scmp.eq.s32.totalorder %s29, 0
    %p428 = por %p426, %p427
    %s429 = ssub.s32 %s30, %s42
    %s430 = ssub.s32 %s31, %s38
    %s431 = sor.u32 %s429, %s430
    %p432 = scmp.eq.s32.totalorder %s431, 0
    %s434 = sadd.s32 %s433, 1
    %s435 = scalar_select %p432, %s433, %s434
    %p438 = pneg %p432
    %p439 = scmp.eq.s32.totalorder %s23, 3
    %p440 = por %p438, %p439
    %p441 = scmp.ne.s32.totalorder %s433, %s436
    %p442 = scmp.eq.s32.totalorder %s23, 0
    %p443 = por %p441, %p442
    %p444 = scmp.ne.s32.totalorder %s433, %s436
    %p445 = scmp.eq.s32.totalorder %s28, 3
    %p446 = por %p444, %p445
    %p447 = scmp.ne.s32.totalorder %s436, %s437
    %p448 = scmp.eq.s32.totalorder %s28, 0
    %p449 = por %p447, %p448
    %p450 = scmp.ne.s32.totalorder %s436, %s437
    %p451 = scmp.eq.s32.totalorder %s29, 3
    %p452 = por %p450, %p451
    %p454 = scmp.ne.s32.totalorder %s437, %s453
    %p455 = scmp.eq.s32.totalorder %s29, 0
    %p456 = por %p454, %p455
    %s457 = ssub.s32 %s30, %s42
    %p458 = scmp.eq.s32.totalorder %s457, 0
    %s460 = sadd.s32 %s459, 1
    %s461 = scalar_select %p458, %s459, %s460
    %p464 = pneg %p458
    %p465 = scmp.eq.s32.totalorder %s23, 3
    %p466 = por %p464, %p465
    %p467 = scmp.ne.s32.totalorder %s459, %s462
    %p468 = scmp.eq.s32.totalorder %s23, 0
    %p469 = por %p467, %p468
    %p470 = scmp.ne.s32.totalorder %s459, %s462
    %p471 = scmp.eq.s32.totalorder %s28, 3
    %p472 = por %p470, %p471
    %p473 = scmp.ne.s32.totalorder %s462, %s463
    %p474 = scmp.eq.s32.totalorder %s28, 0
    %p475 = por %p473, %p474
    %p476 = scmp.ne.s32.totalorder %s462, %s463
    %p477 = scmp.eq.s32.totalorder %s29, 3
    %p478 = por %p476, %p477
    %p480 = scmp.ne.s32.totalorder %s463, %s479
    %p481 = scmp.eq.s32.totalorder %s29, 0
    %p482 = por %p480, %p481
    %s483 = ssub.s32 %s30, %s42
    %p484 = scmp.eq.s32.totalorder %s483, 0
    %s486 = sadd.s32 %s485, 1
    %s487 = scalar_select %p484, %s485, %s486
    %p490 = pneg %p484
    %p491 = scmp.eq.s32.totalorder %s23, 3
    %p492 = por %p490, %p491
    %p493 = scmp.ne.s32.totalorder %s485, %s488
    %p494 = scmp.eq.s32.totalorder %s23, 0
    %p495 = por %p493, %p494
    %p496 = scmp.ne.s32.totalorder %s485, %s488
    %p497 = scmp.eq.s32.totalorder %s28, 3
    %p498 = por %p496, %p497
    %p499 = scmp.ne.s32.totalorder %s488, %s489
    %p500 = scmp.eq.s32.totalorder %s28, 0
    %p501 = por %p499, %p500
    %p502 = scmp.ne.s32.totalorder %s488, %s489
    %p503 = scmp.eq.s32.totalorder %s29, 3
    %p504 = por %p502, %p503
    %p506 = scmp.ne.s32.totalorder %s489, %s505
    %p507 = scmp.eq.s32.totalorder %s29, 0
    %p508 = por %p506, %p507
    %s509 = ssub.s32 %s30, %s42
    %p510 = scmp.eq.s32.totalorder %s509, 0
    %s512 = sadd.s32 %s511, 1
    %s513 = scalar_select %p510, %s511, %s512
    %p516 = pneg %p510
    %p517 = scmp.eq.s32.totalorder %s23, 3
    %p518 = por %p516, %p517
    %p519 = scmp.ne.s32.totalorder %s511, %s514
    %p520 = scmp.eq.s32.totalorder %s23, 0
    %p521 = por %p519, %p520
    %p522 = scmp.ne.s32.totalorder %s511, %s514
    %p523 = scmp.eq.s32.totalorder %s28, 3
    %p524 = por %p522, %p523
    %p525 = scmp.ne.s32.totalorder %s514, %s515
    %p526 = scmp.eq.s32.totalorder %s28, 0
    %p527 = por %p525, %p526
    %p528 = scmp.ne.s32.totalorder %s514, %s515
    %p529 = scmp.eq.s32.totalorder %s29, 3
    %p530 = por %p528, %p529
    %p532 = scmp.ne.s32.totalorder %s515, %s531
    %p533 = scmp.eq.s32.totalorder %s29, 0
    %p534 = por %p532, %p533
    %p535 = scmp.le.s32.totalorder 1, %s23
    %p536 = scmp.lt.s32.totalorder %s23, 5
    %p537 = pnand %p535, %p536
    %p538 = pneg %p537
    // Predicated region
    $region9: #{bi_encoder_forward.1} parent=5 // pred_check
      _
    $region10: #{bi_encoder_forward.1} parent=5 // pred_check_branch
      %540 = sbr.rel (%p537) target = $region12
    $region11: #{bi_encoder_forward.1} parent=5 // pred_region
      %s541 = ssub.s32 %s23, 1
    $region12: #{bi_encoder_forward.1} parent=5 // pred_fallthru
      _
    %p542 = scmp.lt.s32.totalorder %s23, 4
    // Predicated region
    $region13: #{bi_encoder_forward.1} parent=5 // pred_check
      %p543 = pneg %p542
    $region14: #{bi_encoder_forward.1} parent=5 // pred_check_branch
      %545 = sbr.rel (%p543) target = $region16
    $region15: #{bi_encoder_forward.1} parent=5 // pred_region
      // Predicated region
      $region17: #{bi_encoder_forward.1} parent=15 // pred_check
        %p546 = pneg %p55
      $region18: #{bi_encoder_forward.1} parent=15 // pred_check_branch
        %548 = sbr.rel (%p546) target = $region20
      $region19: #{bi_encoder_forward.1} parent=15 // pred_region
        %p549 = scmp.lt.s32.totalorder %s30, 1
        %s550 = scalar_select %p549, %s30, 1
        %s551 = smul.addr %s550, 4
        %s552 = smul.addr %s551, 8
        %s553 = scalar_lea.vmem %s0, %s552
      $region20: #{bi_encoder_forward.1} parent=15 // pred_fallthru
        _
      // Predicated region
      $region21: #{bi_encoder_forward.1} parent=15 // pred_check
        %p554 = pneg %p81
      $region22: #{bi_encoder_forward.1} parent=15 // pred_check_branch
        %556 = sbr.rel (%p554) target = $region24
      $region23: #{bi_encoder_forward.1} parent=15 // pred_region
        %p557 = scmp.lt.s32.totalorder %s30, 1
        %s558 = scalar_select %p557, %s30, 1
        %s559 = scalar_lea.vmem %s1, %s558
      $region24: #{bi_encoder_forward.1} parent=15 // pred_fallthru
        _
      // Predicated region
      $region25: #{bi_encoder_forward.1} parent=15 // pred_check
        %p560 = pneg %p107
      $region26: #{bi_encoder_forward.1} parent=15 // pred_check_branch
        %562 = sbr.rel (%p560) target = $region28
      $region27: #{bi_encoder_forward.1} parent=15 // pred_region
        %p563 = scmp.lt.s32.totalorder %s30, 1
        %s564 = scalar_select %p563, %s30, 1
        %s565 = scalar_lea.vmem %s2, %s564
      $region28: #{bi_encoder_forward.1} parent=15 // pred_fallthru
        _
      // Predicated region
      $region29: #{bi_encoder_forward.1} parent=15 // pred_check
        %p566 = pneg %p135
      $region30: #{bi_encoder_forward.1} parent=15 // pred_check_branch
        %568 = sbr.rel (%p566) target = $region32
      $region31: #{bi_encoder_forward.1} parent=15 // pred_region
        %p569 = scmp.lt.s32.totalorder %s30, 1
        %s570 = scalar_select %p569, %s30, 1
        %p571 = scmp.lt.s32.totalorder %s31, 1
        %s572 = scalar_select %p571, %s31, 1
        %s573 = smul.addr %s572, 48
        %s574 = smul.addr %s570, 96
        %s575 = sadd.s32 %s573, %s574
        %s576 = smul.addr %s575, 4
        %s577 = scalar_lea.vmem %s3, %s576
      $region32: #{bi_encoder_forward.1} parent=15 // pred_fallthru
        _
      // Predicated region
      $region33: #{bi_encoder_forward.1} parent=15 // pred_check
        %p578 = pneg %p163
      $region34: #{bi_encoder_forward.1} parent=15 // pred_check_branch
        %580 = sbr.rel (%p578) target = $region36
      $region35: #{bi_encoder_forward.1} parent=15 // pred_region
        %p581 = scmp.lt.s32.totalorder %s30, 1
        %s582 = scalar_select %p581, %s30, 1
        %p583 = scmp.lt.s32.totalorder %s31, 1
        %s584 = scalar_select %p583, %s31, 1
        %s585 = smul.addr %s584, 3
        %s586 = smul.addr %s582, 6
        %s587 = sadd.s32 %s585, %s586
        %s588 = scalar_lea.vmem %s4, %s587
      $region36: #{bi_encoder_forward.1} parent=15 // pred_fallthru
        _
      // Predicated region
      $region37: #{bi_encoder_forward.1} parent=15 // pred_check
        %p589 = pneg %p191
      $region38: #{bi_encoder_forward.1} parent=15 // pred_check_branch
        %591 = sbr.rel (%p589) target = $region40
      $region39: #{bi_encoder_forward.1} parent=15 // pred_region
        %p592 = scmp.lt.s32.totalorder %s30, 1
        %s593 = scalar_select %p592, %s30, 1
        %p594 = scmp.lt.s32.totalorder %s31, 1
        %s595 = scalar_select %p594, %s31, 1
        %s596 = smul.addr %s595, 16
        %s597 = smul.addr %s593, 32
        %s598 = sadd.s32 %s596, %s597
        %s599 = smul.addr %s598, 4
        %s600 = scalar_lea.vmem %s5, %s599
      $region40: #{bi_encoder_forward.1} parent=15 // pred_fallthru
        _
      // Predicated region
      $region41: #{bi_encoder_forward.1} parent=15 // pred_check
        %p601 = pneg %p219
      $region42: #{bi_encoder_forward.1} parent=15 // pred_check_branch
        %603 = sbr.rel (%p601) target = $region44
      $region43: #{bi_encoder_forward.1} parent=15 // pred_region
        %p604 = scmp.lt.s32.totalorder %s30, 1
        %s605 = scalar_select %p604, %s30, 1
        %p606 = scmp.lt.s32.totalorder %s31, 1
        %s607 = scalar_select %p606, %s31, 1
        %s608 = smul.addr %s605, 2
        %s609 = sadd.s32 %s607, %s608
        %s610 = scalar_lea.vmem %s6, %s609
      $region44: #{bi_encoder_forward.1} parent=15 // pred_fallthru
        _
      // Predicated region
      $region45: #{bi_encoder_forward.1} parent=15 // pred_check
        %p611 = pneg %p247
      $region46: #{bi_encoder_forward.1} parent=15 // pred_check_branch
        %613 = sbr.rel (%p611) target = $region48
      $region47: #{bi_encoder_forward.1} parent=15 // pred_region
        %p614 = scmp.lt.s32.totalorder %s30, 1
        %s615 = scalar_select %p614, %s30, 1
        %p616 = scmp.lt.s32.totalorder %s31, 1
        %s617 = scalar_select %p616, %s31, 1
        %s618 = smul.addr %s615, 2
        %s619 = sadd.s32 %s617, %s618
        %s620 = scalar_lea.vmem %s7, %s619
      $region48: #{bi_encoder_forward.1} parent=15 // pred_fallthru
        _
      // Predicated region
      $region49: #{bi_encoder_forward.1} parent=15 // pred_check
        %p621 = pneg %p275
      $region50: #{bi_encoder_forward.1} parent=15 // pred_check_branch
        %623 = sbr.rel (%p621) target = $region52
      $region51: #{bi_encoder_forward.1} parent=15 // pred_region
        %p624 = scmp.lt.s32.totalorder %s30, 1
        %s625 = scalar_select %p624, %s30, 1
        %p626 = scmp.lt.s32.totalorder %s31, 1
        %s627 = scalar_select %p626, %s31, 1
        %s628 = smul.addr %s625, 2
        %s629 = sadd.s32 %s627, %s628
        %s630 = scalar_lea.vmem %s8, %s629
      $region52: #{bi_encoder_forward.1} parent=15 // pred_fallthru
        _
      // Predicated region
      $region53: #{bi_encoder_forward.1} parent=15 // pred_check
        %p631 = pneg %p303
      $region54: #{bi_encoder_forward.1} parent=15 // pred_check_branch
        %633 = sbr.rel (%p631) target = $region56
      $region55: #{bi_encoder_forward.1} parent=15 // pred_region
        %p634 = scmp.lt.s32.totalorder %s30, 1
        %s635 = scalar_select %p634, %s30, 1
        %p636 = scmp.lt.s32.totalorder %s31, 1
        %s637 = scalar_select %p636, %s31, 1
        %s638 = smul.addr %s637, 32
        %s639 = smul.addr %s635, 64
        %s640 = sadd.s32 %s638, %s639
        %s641 = smul.addr %s640, 4
        %s642 = scalar_lea.vmem %s9, %s641
      $region56: #{bi_encoder_forward.1} parent=15 // pred_fallthru
        _
      // Predicated region
      $region57: #{bi_encoder_forward.1} parent=15 // pred_check
        %p643 = pneg %p331
      $region58: #{bi_encoder_forward.1} parent=15 // pred_check_branch
        %645 = sbr.rel (%p643) target = $region60
      $region59: #{bi_encoder_forward.1} parent=15 // pred_region
        %p646 = scmp.lt.s32.totalorder %s30, 1
        %s647 = scalar_select %p646, %s30, 1
        %p648 = scmp.lt.s32.totalorder %s31, 1
        %s649 = scalar_select %p648, %s31, 1
        %s650 = smul.addr %s649, 2
        %s651 = smul.addr %s647, 4
        %s652 = sadd.s32 %s650, %s651
        %s653 = scalar_lea.vmem %s10, %s652
      $region60: #{bi_encoder_forward.1} parent=15 // pred_fallthru
        _
      // Predicated region
      $region61: #{bi_encoder_forward.1} parent=15 // pred_check
        %p654 = pneg %p359
      $region62: #{bi_encoder_forward.1} parent=15 // pred_check_branch
        %656 = sbr.rel (%p654) target = $region64
      $region63: #{bi_encoder_forward.1} parent=15 // pred_region
        %p657 = scmp.lt.s32.totalorder %s30, 1
        %s658 = scalar_select %p657, %s30, 1
        %p659 = scmp.lt.s32.totalorder %s31, 1
        %s660 = scalar_select %p659, %s31, 1
        %s661 = smul.addr %s660, 32
        %s662 = smul.addr %s658, 64
        %s663 = sadd.s32 %s661, %s662
        %s664 = smul.addr %s663, 4
        %s665 = scalar_lea.vmem %s11, %s664
      $region64: #{bi_encoder_forward.1} parent=15 // pred_fallthru
        _
      // Predicated region
      $region65: #{bi_encoder_forward.1} parent=15 // pred_check
        %p666 = pneg %p387
      $region66: #{bi_encoder_forward.1} parent=15 // pred_check_branch
        %668 = sbr.rel (%p666) target = $region68
      $region67: #{bi_encoder_forward.1} parent=15 // pred_region
        %p669 = scmp.lt.s32.totalorder %s30, 1
        %s670 = scalar_select %p669, %s30, 1
        %p671 = scmp.lt.s32.totalorder %s31, 1
        %s672 = scalar_select %p671, %s31, 1
        %s673 = smul.addr %s670, 2
        %s674 = sadd.s32 %s672, %s673
        %s675 = scalar_lea.vmem %s12, %s674
      $region68: #{bi_encoder_forward.1} parent=15 // pred_fallthru
        _
      // Predicated region
      $region69: #{bi_encoder_forward.1} parent=15 // pred_check
        %p676 = pneg %p415
      $region70: #{bi_encoder_forward.1} parent=15 // pred_check_branch
        %678 = sbr.rel (%p676) target = $region72
      $region71: #{bi_encoder_forward.1} parent=15 // pred_region
        %p679 = scmp.lt.s32.totalorder %s30, 1
        %s680 = scalar_select %p679, %s30, 1
        %p681 = scmp.lt.s32.totalorder %s31, 1
        %s682 = scalar_select %p681, %s31, 1
        %s683 = smul.addr %s680, 2
        %s684 = sadd.s32 %s682, %s683
        %s685 = scalar_lea.vmem %s13, %s684
      $region72: #{bi_encoder_forward.1} parent=15 // pred_fallthru
        _
      // Predicated region
      $region73: #{bi_encoder_forward.1} parent=15 // pred_check
        %p686 = pneg %p443
      $region74: #{bi_encoder_forward.1} parent=15 // pred_check_branch
        %688 = sbr.rel (%p686) target = $region76
      $region75: #{bi_encoder_forward.1} parent=15 // pred_region
        %p689 = scmp.lt.s32.totalorder %s30, 1
        %s690 = scalar_select %p689, %s30, 1
        %p691 = scmp.lt.s32.totalorder %s31, 1
        %s692 = scalar_select %p691, %s31, 1
        %s693 = smul.addr %s690, 2
        %s694 = sadd.s32 %s692, %s693
        %s695 = scalar_lea.vmem %s14, %s694
      $region76: #{bi_encoder_forward.1} parent=15 // pred_fallthru
        _
      // Predicated region
      $region77: #{bi_encoder_forward.1} parent=15 // pred_check
        %p696 = pneg %p469
      $region78: #{bi_encoder_forward.1} parent=15 // pred_check_branch
        %698 = sbr.rel (%p696) target = $region80
      $region79: #{bi_encoder_forward.1} parent=15 // pred_region
        %p699 = scmp.lt.s32.totalorder %s30, 1
        %s700 = scalar_select %p699, %s30, 1
        %s701 = smul.addr %s700, 16
        %s702 = smul.addr %s701, 4
        %s703 = scalar_lea.vmem %s15, %s702
      $region80: #{bi_encoder_forward.1} parent=15 // pred_fallthru
        _
      // Predicated region
      $region81: #{bi_encoder_forward.1} parent=15 // pred_check
        %p704 = pneg %p495
      $region82: #{bi_encoder_forward.1} parent=15 // pred_check_branch
        %706 = sbr.rel (%p704) target = $region84
      $region83: #{bi_encoder_forward.1} parent=15 // pred_region
        %p707 = scmp.lt.s32.totalorder %s30, 1
        %s708 = scalar_select %p707, %s30, 1
        %s709 = scalar_lea.vmem %s16, %s708
      $region84: #{bi_encoder_forward.1} parent=15 // pred_fallthru
        _
    $region16: #{bi_encoder_forward.1} parent=5 // pred_fallthru
      _
    %p710 = scmp.le.s32.totalorder 1, %s23
    %p711 = scmp.lt.s32.totalorder %s23, 5
    %p712 = pnand %p710, %p711
    %p713 = pneg %p712
    // Predicated region
    $region85: #{bi_encoder_forward.1} parent=5 // pred_check
      _
    $region86: #{bi_encoder_forward.1} parent=5 // pred_check_branch
      %715 = sbr.rel (%p712) target = $region88
    $region87: #{bi_encoder_forward.1} parent=5 // pred_region
      %s716 = ssub.s32 %s23, 1
      %p717 = scmp.lt.s32.totalorder %s32, 1
      %s718 = scalar_select %p717, %s32, 1
      %s719 = smul.addr %s718, 4
      %s720 = smul.addr %s719, 8
      %s721 = scalar_lea.vmem %s0, %s720
      %p722 = pneg %p61
      %p723 = pneg %p58
      %p724 = scmp.lt.s32.totalorder %s32, 1
      %s725 = scalar_select %p724, %s32, 1
      %s726 = scalar_lea.vmem %s1, %s725
      %p727 = pneg %p87
      %p728 = pneg %p84
      %p729 = scmp.lt.s32.totalorder %s32, 1
      %s730 = scalar_select %p729, %s32, 1
      %s731 = scalar_lea.vmem %s2, %s730
      %p732 = pneg %p113
      %p733 = pneg %p110
      %p734 = scmp.lt.s32.totalorder %s32, 1
      %s735 = scalar_select %p734, %s32, 1
      %p736 = scmp.lt.s32.totalorder %s33, 1
      %s737 = scalar_select %p736, %s33, 1
      %s738 = smul.addr %s737, 48
      %s739 = smul.addr %s735, 96
      %s740 = sadd.s32 %s738, %s739
      %s741 = smul.addr %s740, 4
      %s742 = scalar_lea.vmem %s3, %s741
      %p743 = pneg %p141
      %p744 = pneg %p138
      %p745 = scmp.lt.s32.totalorder %s32, 1
      %s746 = scalar_select %p745, %s32, 1
      %p747 = scmp.lt.s32.totalorder %s33, 1
      %s748 = scalar_select %p747, %s33, 1
      %s749 = smul.addr %s748, 3
      %s750 = smul.addr %s746, 6
      %s751 = sadd.s32 %s749, %s750
      %s752 = scalar_lea.vmem %s4, %s751
      %p753 = pneg %p169
      %p754 = pneg %p166
      %p755 = scmp.lt.s32.totalorder %s32, 1
      %s756 = scalar_select %p755, %s32, 1
      %p757 = scmp.lt.s32.totalorder %s33, 1
      %s758 = scalar_select %p757, %s33, 1
      %s759 = smul.addr %s758, 16
      %s760 = smul.addr %s756, 32
      %s761 = sadd.s32 %s759, %s760
      %s762 = smul.addr %s761, 4
      %s763 = scalar_lea.vmem %s5, %s762
      %p764 = pneg %p197
      %p765 = pneg %p194
      %p766 = scmp.lt.s32.totalorder %s32, 1
      %s767 = scalar_select %p766, %s32, 1
      %p768 = scmp.lt.s32.totalorder %s33, 1
      %s769 = scalar_select %p768, %s33, 1
      %s770 = smul.addr %s767, 2
      %s771 = sadd.s32 %s769, %s770
      %s772 = scalar_lea.vmem %s6, %s771
      %p773 = pneg %p225
      %p774 = pneg %p222
      %p775 = scmp.lt.s32.totalorder %s32, 1
      %s776 = scalar_select %p775, %s32, 1
      %p777 = scmp.lt.s32.totalorder %s33, 1
      %s778 = scalar_select %p777, %s33, 1
      %s779 = smul.addr %s776, 2
      %s780 = sadd.s32 %s778, %s779
      %s781 = scalar_lea.vmem %s7, %s780
      %p782 = pneg %p253
      %p783 = pneg %p250
      %p784 = scmp.lt.s32.totalorder %s32, 1
      %s785 = scalar_select %p784, %s32, 1
      %p786 = scmp.lt.s32.totalorder %s33, 1
      %s787 = scalar_select %p786, %s33, 1
      %s788 = smul.addr %s785, 2
      %s789 = sadd.s32 %s787, %s788
      %s790 = scalar_lea.vmem %s8, %s789
      %p791 = pneg %p281
      %p792 = pneg %p278
      %p793 = scmp.lt.s32.totalorder %s32, 1
      %s794 = scalar_select %p793, %s32, 1
      %p795 = scmp.lt.s32.totalorder %s33, 1
      %s796 = scalar_select %p795, %s33, 1
      %s797 = smul.addr %s796, 32
      %s798 = smul.addr %s794, 64
      %s799 = sadd.s32 %s797, %s798
      %s800 = smul.addr %s799, 4
      %s801 = scalar_lea.vmem %s9, %s800
      %p802 = pneg %p309
      %p803 = pneg %p306
      %p804 = scmp.lt.s32.totalorder %s32, 1
      %s805 = scalar_select %p804, %s32, 1
      %p806 = scmp.lt.s32.totalorder %s33, 1
      %s807 = scalar_select %p806, %s33, 1
      %s808 = smul.addr %s807, 2
      %s809 = smul.addr %s805, 4
      %s810 = sadd.s32 %s808, %s809
      %s811 = scalar_lea.vmem %s10, %s810
      %p812 = pneg %p337
      %p813 = pneg %p334
      %p814 = scmp.lt.s32.totalorder %s32, 1
      %s815 = scalar_select %p814, %s32, 1
      %p816 = scmp.lt.s32.totalorder %s33, 1
      %s817 = scalar_select %p816, %s33, 1
      %s818 = smul.addr %s817, 32
      %s819 = smul.addr %s815, 64
      %s820 = sadd.s32 %s818, %s819
      %s821 = smul.addr %s820, 4
      %s822 = scalar_lea.vmem %s11, %s821
      %p823 = pneg %p365
      %p824 = pneg %p362
      %p825 = scmp.lt.s32.totalorder %s32, 1
      %s826 = scalar_select %p825, %s32, 1
      %p827 = scmp.lt.s32.totalorder %s33, 1
      %s828 = scalar_select %p827, %s33, 1
      %s829 = smul.addr %s826, 2
      %s830 = sadd.s32 %s828, %s829
      %s831 = scalar_lea.vmem %s12, %s830
      %p832 = pneg %p393
      %p833 = pneg %p390
      %p834 = scmp.lt.s32.totalorder %s32, 1
      %s835 = scalar_select %p834, %s32, 1
      %p836 = scmp.lt.s32.totalorder %s33, 1
      %s837 = scalar_select %p836, %s33, 1
      %s838 = smul.addr %s835, 2
      %s839 = sadd.s32 %s837, %s838
      %s840 = scalar_lea.vmem %s13, %s839
      %p841 = pneg %p421
      %p842 = pneg %p418
      %p843 = scmp.lt.s32.totalorder %s32, 1
      %s844 = scalar_select %p843, %s32, 1
      %p845 = scmp.lt.s32.totalorder %s33, 1
      %s846 = scalar_select %p845, %s33, 1
      %s847 = smul.addr %s844, 2
      %s848 = sadd.s32 %s846, %s847
      %s849 = scalar_lea.vmem %s14, %s848
      %p850 = pneg %p449
      %p851 = pneg %p446
      %p852 = scmp.lt.s32.totalorder %s32, 1
      %s853 = scalar_select %p852, %s32, 1
      %s854 = smul.addr %s853, 16
      %s855 = smul.addr %s854, 4
      %s856 = scalar_lea.vmem %s15, %s855
      %p857 = pneg %p475
      %p858 = pneg %p472
      %p859 = scmp.lt.s32.totalorder %s32, 1
      %s860 = scalar_select %p859, %s32, 1
      %s861 = scalar_lea.vmem %s16, %s860
      %p862 = pneg %p501
      %p863 = pneg %p498
      %p864 = pneg %p527
      %p865 = pneg %p524
      %p866 = scmp.lt.s32.totalorder %s32, 1
      %s867 = scalar_select %p866, %s32, 1
      %s868 = smul.addr %s867, 2
      %s869 = scalar_lea.vmem %s17, %s868
      %p870 = scmp.lt.s32.totalorder %s32, 1
      %s871 = scalar_select %p870, %s32, 1
      %s872 = smul.addr %s871, 4
      %s873 = smul.addr %s872, 8
      %s874 = scalar_lea.vmem %s0, %s873
      %p875 = scmp.lt.s32.totalorder %s32, 1
      %s876 = scalar_select %p875, %s32, 1
      %s877 = scalar_lea.vmem %s1, %s876
      %p878 = scmp.lt.s32.totalorder %s32, 1
      %s879 = scalar_select %p878, %s32, 1
      %s880 = scalar_lea.vmem %s2, %s879
      %p881 = scmp.lt.s32.totalorder %s32, 1
      %s882 = scalar_select %p881, %s32, 1
      %p883 = scmp.lt.s32.totalorder %s33, 1
      %s884 = scalar_select %p883, %s33, 1
      %s885 = smul.addr %s884, 48
      %s886 = smul.addr %s882, 96
      %s887 = sadd.s32 %s885, %s886
      %s888 = smul.addr %s887, 4
      %s889 = scalar_lea.vmem %s3, %s888
      %p890 = scmp.lt.s32.totalorder %s32, 1
      %s891 = scalar_select %p890, %s32, 1
      %p892 = scmp.lt.s32.totalorder %s33, 1
      %s893 = scalar_select %p892, %s33, 1
      %s894 = smul.addr %s893, 3
      %s895 = smul.addr %s891, 6
      %s896 = sadd.s32 %s894, %s895
      %s897 = scalar_lea.vmem %s4, %s896
      %p898 = scmp.lt.s32.totalorder %s32, 1
      %s899 = scalar_select %p898, %s32, 1
      %p900 = scmp.lt.s32.totalorder %s33, 1
      %s901 = scalar_select %p900, %s33, 1
      %s902 = smul.addr %s901, 16
      %s903 = smul.addr %s899, 32
      %s904 = sadd.s32 %s902, %s903
      %s905 = smul.addr %s904, 4
      %s906 = scalar_lea.vmem %s5, %s905
      %p907 = scmp.lt.s32.totalorder %s32, 1
      %s908 = scalar_select %p907, %s32, 1
      %p909 = scmp.lt.s32.totalorder %s33, 1
      %s910 = scalar_select %p909, %s33, 1
      %s911 = smul.addr %s908, 2
      %s912 = sadd.s32 %s910, %s911
      %s913 = scalar_lea.vmem %s6, %s912
      %p914 = scmp.lt.s32.totalorder %s32, 1
      %s915 = scalar_select %p914, %s32, 1
      %p916 = scmp.lt.s32.totalorder %s33, 1
      %s917 = scalar_select %p916, %s33, 1
      %s918 = smul.addr %s915, 2
      %s919 = sadd.s32 %s917, %s918
      %s920 = scalar_lea.vmem %s7, %s919
      %p921 = scmp.lt.s32.totalorder %s32, 1
      %s922 = scalar_select %p921, %s32, 1
      %p923 = scmp.lt.s32.totalorder %s33, 1
      %s924 = scalar_select %p923, %s33, 1
      %s925 = smul.addr %s922, 2
      %s926 = sadd.s32 %s924, %s925
      %s927 = scalar_lea.vmem %s8, %s926
      %p928 = scmp.lt.s32.totalorder %s32, 1
      %s929 = scalar_select %p928, %s32, 1
      %p930 = scmp.lt.s32.totalorder %s33, 1
      %s931 = scalar_select %p930, %s33, 1
      %s932 = smul.addr %s931, 32
      %s933 = smul.addr %s929, 64
      %s934 = sadd.s32 %s932, %s933
      %s935 = smul.addr %s934, 4
      %s936 = scalar_lea.vmem %s9, %s935
      %p937 = scmp.lt.s32.totalorder %s32, 1
      %s938 = scalar_select %p937, %s32, 1
      %p939 = scmp.lt.s32.totalorder %s33, 1
      %s940 = scalar_select %p939, %s33, 1
      %s941 = smul.addr %s940, 2
      %s942 = smul.addr %s938, 4
      %s943 = sadd.s32 %s941, %s942
      %s944 = scalar_lea.vmem %s10, %s943
      %p945 = scmp.lt.s32.totalorder %s32, 1
      %s946 = scalar_select %p945, %s32, 1
      %p947 = scmp.lt.s32.totalorder %s33, 1
      %s948 = scalar_select %p947, %s33, 1
      %s949 = smul.addr %s948, 32
      %s950 = smul.addr %s946, 64
      %s951 = sadd.s32 %s949, %s950
      %s952 = smul.addr %s951, 4
      %s953 = scalar_lea.vmem %s11, %s952
      %p954 = scmp.lt.s32.totalorder %s32, 1
      %s955 = scalar_select %p954, %s32, 1
      %p956 = scmp.lt.s32.totalorder %s33, 1
      %s957 = scalar_select %p956, %s33, 1
      %s958 = smul.addr %s955, 2
      %s959 = sadd.s32 %s957, %s958
      %s960 = scalar_lea.vmem %s12, %s959
      %p961 = scmp.lt.s32.totalorder %s32, 1
      %s962 = scalar_select %p961, %s32, 1
      %p963 = scmp.lt.s32.totalorder %s33, 1
      %s964 = scalar_select %p963, %s33, 1
      %s965 = smul.addr %s962, 2
      %s966 = sadd.s32 %s964, %s965
      %s967 = scalar_lea.vmem %s13, %s966
      %p968 = scmp.lt.s32.totalorder %s32, 1
      %s969 = scalar_select %p968, %s32, 1
      %p970 = scmp.lt.s32.totalorder %s33, 1
      %s971 = scalar_select %p970, %s33, 1
      %s972 = smul.addr %s969, 2
      %s973 = sadd.s32 %s971, %s972
      %s974 = scalar_lea.vmem %s14, %s973
      %p975 = scmp.lt.s32.totalorder %s32, 1
      %s976 = scalar_select %p975, %s32, 1
      %s977 = smul.addr %s976, 16
      %s978 = smul.addr %s977, 4
      %s979 = scalar_lea.vmem %s15, %s978
      %p980 = scmp.lt.s32.totalorder %s32, 1
      %s981 = scalar_select %p980, %s32, 1
      %s982 = scalar_lea.vmem %s16, %s981
      %p983 = scmp.lt.s32.totalorder %s32, 1
      %s984 = scalar_select %p983, %s32, 1
      %s985 = smul.addr %s984, 2
      %s986 = scalar_lea.vmem %s17, %s985
      %p988 = scmp.eq.s32.totalorder %s33, 0
      // Predicated region
      $region89: #{bi_encoder_forward.1} parent=87 // pred_check
        %p989 = pneg %p988
      $region90: #{bi_encoder_forward.1} parent=87 // pred_check_branch
        %991 = sbr.rel (%p989) target = $region92
      $region91: #{bi_encoder_forward.1} parent=87 // pred_region
        %v992 = vld [vmem:[%s874] sm:$0xff]
        %v993 = vld [vmem:[%s874 + $0x8] sm:$0xff]
        %v994 = vld [vmem:[%s874 + $0x10] sm:$0xff]
        %v995 = vld [vmem:[%s874 + $0x18] sm:$0xff]
        %v996 = vld [vmem:[%s877] sm:$0x1]
        %v997 = vld [vmem:[%s880] sm:$0x1]
        %998 = vadd.xlane.f32.xlu0 %v992
        %v999 = vpop.xlane.xlu0 %998
        %1000 = vadd.xlane.f32.xlu0 %v993
        %v1001 = vpop.xlane.xlu0 %1000
        %1002 = vadd.xlane.f32.xlu0 %v994
        %v1003 = vpop.xlane.xlu0 %1002
        %1004 = vadd.xlane.f32.xlu0 %v995
        %v1005 = vpop.xlane.xlu0 %1004
        %v1006 = vrcp.pop 128.0
        %v1007 = vmul.f32 %v999, %v1006
        %v1008 = vmul.f32 %v1001, %v1006
        %v1009 = vmul.f32 %v1003, %v1006
        %v1010 = vmul.f32 %v1005, %v1006
        %v1011 = vsub.f32 %v992, %v1007
        %v1012 = vsub.f32 %v993, %v1008
        %v1013 = vsub.f32 %v994, %v1009
        %v1014 = vsub.f32 %v995, %v1010
        %v1015 = vmul.f32 %v1011, %v1011
        %v1016 = vmul.f32 %v1012, %v1012
        %v1017 = vmul.f32 %v1013, %v1013
        %v1018 = vmul.f32 %v1014, %v1014
        %1019 = vadd.xlane.f32.xlu0 %v1015
        %v1020 = vpop.xlane.xlu0 %1019
        %1021 = vadd.xlane.f32.xlu0 %v1016
        %v1022 = vpop.xlane.xlu0 %1021
        %1023 = vadd.xlane.f32.xlu0 %v1017
        %v1024 = vpop.xlane.xlu0 %1023
        %1025 = vadd.xlane.f32.xlu0 %v1018
        %v1026 = vpop.xlane.xlu0 %1025
        %v1027 = vmul.f32 %v1020, %v1006
        %v1028 = vmul.f32 %v1022, %v1006
        %v1029 = vmul.f32 %v1024, %v1006
        %v1030 = vmul.f32 %v1026, %v1006
        %v1031 = vadd.f32 %v1027, 1e-12
        %v1032 = vadd.f32 %v1028, 1e-12
        %v1033 = vadd.f32 %v1029, 1e-12
        %v1034 = vadd.f32 %v1030, 1e-12
        %v1035 = vrsqrt.pop %v1031
        %v1036 = vrsqrt.pop %v1032
        %v1037 = vrsqrt.pop %v1033
        %v1038 = vrsqrt.pop %v1034
        %v1039 = vmul.f32 %v1011, %v1035
        %v1040 = vmul.f32 %v1012, %v1036
        %v1041 = vmul.f32 %v1013, %v1037
        %v1042 = vmul.f32 %v1014, %v1038
        %v1044 = vlaneseq
        %v1045 = vshrl.u32 %v1044, 7
        %v1046 = vsub.s32 0, %v1045
        %v1047 = vrot.slane %v996, %v1046
        %v1049 = vmul.f32 %v1039, %v1047
        %v1050 = vmul.f32 %v1040, %v1047
        %v1051 = vmul.f32 %v1041, %v1047
        %v1052 = vmul.f32 %v1042, %v1047
        %v1054 = vlaneseq
        %v1055 = vshrl.u32 %v1054, 7
        %v1056 = vsub.s32 0, %v1055
        %v1057 = vrot.slane %v997, %v1056
        %v1059 = vadd.f32 %v1049, %v1057
        %v1060 = vadd.f32 %v1050, %v1057
        %v1061 = vadd.f32 %v1051, %v1057
        %v1062 = vadd.f32 %v1052, %v1057
        %1063 = vst [vmem:[#allocation2] sm:$0xff] %v1059
        %1064 = vst [vmem:[#allocation2 + $0x8] sm:$0xff] %v1060
        %1065 = vst [vmem:[#allocation2 + $0x10] sm:$0xff] %v1061
        %1066 = vst [vmem:[#allocation2 + $0x18] sm:$0xff] %v1062
      $region92: #{bi_encoder_forward.1} parent=87 // pred_fallthru
        _
      %v1067 = vld [vmem:[#allocation2] sm:$0xff]
      %v1068 = vld [vmem:[#allocation2 + $0x8] sm:$0xff]
      %v1069 = vld [vmem:[#allocation2 + $0x10] sm:$0xff]
      %v1070 = vld [vmem:[#allocation2 + $0x18] sm:$0xff]
      %v1071 = vpack.c.bf16 %v1068, %v1067
      %v1072 = vpack.c.bf16 %v1070, %v1069
      %v1073 = vld [vmem:[%s889] sm:$0xff]
      %v1074 = vld [vmem:[%s889 + $0x8] sm:$0xf]
      %v1075 = vld [vmem:[%s889 + $0xc] sm:$0xff]
      %v1076 = vld [vmem:[%s889 + $0x14] sm:$0xf]
      %v1077 = vld [vmem:[%s889 + $0x18] sm:$0xff]
      %v1078 = vld [vmem:[%s889 + $0x20] sm:$0xf]
      %v1079 = vld [vmem:[%s889 + $0x24] sm:$0xff]
      %v1080 = vld [vmem:[%s889 + $0x2c] sm:$0xf]
      %v1081 = vld [vmem:[%s889 + $0x30] sm:$0xff]
      %v1082 = vld [vmem:[%s889 + $0x38] sm:$0xf]
      %v1083 = vld [vmem:[%s889 + $0x3c] sm:$0xff]
      %v1084 = vld [vmem:[%s889 + $0x44] sm:$0xf]
      %v1085 = vld [vmem:[%s889 + $0x48] sm:$0xff]
      %v1086 = vld [vmem:[%s889 + $0x50] sm:$0xf]
      %v1087 = vld [vmem:[%s889 + $0x54] sm:$0xff]
      %v1088 = vld [vmem:[%s889 + $0x5c] sm:$0xf]
      %v1089 = vld [vmem:[%s889 + $0x60] sm:$0xff]
      %v1090 = vld [vmem:[%s889 + $0x68] sm:$0xf]
      %v1091 = vld [vmem:[%s889 + $0x6c] sm:$0xff]
      %v1092 = vld [vmem:[%s889 + $0x74] sm:$0xf]
      %v1093 = vld [vmem:[%s889 + $0x78] sm:$0xff]
      %v1094 = vld [vmem:[%s889 + $0x80] sm:$0xf]
      %v1095 = vld [vmem:[%s889 + $0x84] sm:$0xff]
      %v1096 = vld [vmem:[%s889 + $0x8c] sm:$0xf]
      %v1097 = vld [vmem:[%s889 + $0x90] sm:$0xff]
      %v1098 = vld [vmem:[%s889 + $0x98] sm:$0xf]
      %v1099 = vld [vmem:[%s889 + $0x9c] sm:$0xff]
      %v1100 = vld [vmem:[%s889 + $0xa4] sm:$0xf]
      %v1101 = vld [vmem:[%s889 + $0xa8] sm:$0xff]
      %v1102 = vld [vmem:[%s889 + $0xb0] sm:$0xf]
      %v1103 = vld [vmem:[%s889 + $0xb4] sm:$0xff]
      %v1104 = vld [vmem:[%s889 + $0xbc] sm:$0xf]
      %v1105 = vld [vmem:[%s897] sm:$0x7]
      %v1107 = vlaneseq
      %v1108 = vshrl.u32 %v1107, 7
      %v1109 = vsub.s32 0, %v1108
      %v1110 = vrot.slane %v1105, %v1109
      %v1111 = vlaneseq
      %v1112 = vshrl.u32 %v1111, 7
      %v1113 = vsub.s32 1, %v1112
      %v1114 = vrot.slane %v1105, %v1113
      %v1115 = vlaneseq
      %v1116 = vshrl.u32 %v1115, 7
      %v1117 = vsub.s32 2, %v1116
      %v1118 = vrot.slane %v1105, %v1117
      %v1154 = vunpack.c.l.b16 %v1073
      %v1155 = vunpack.c.h.b16 %v1073
      %v1156 = vunpack.c.l.b16 %v1074
      %v1157 = vunpack.c.l.b16 %v1075
      %v1158 = vunpack.c.h.b16 %v1075
      %v1159 = vunpack.c.l.b16 %v1076
      %v1160 = vunpack.c.l.b16 %v1077
      %v1161 = vunpack.c.h.b16 %v1077
      %v1162 = vunpack.c.l.b16 %v1078
      %v1163 = vunpack.c.l.b16 %v1079
      %v1164 = vunpack.c.h.b16 %v1079
      %v1165 = vunpack.c.l.b16 %v1080
      %v1166 = vunpack.c.l.b16 %v1081
      %v1167 = vunpack.c.h.b16 %v1081
      %v1168 = vunpack.c.l.b16 %v1082
      %v1169 = vunpack.c.l.b16 %v1083
      %v1170 = vunpack.c.h.b16 %v1083
      %v1171 = vunpack.c.l.b16 %v1084
      %v1172 = vunpack.c.l.b16 %v1085
      %v1173 = vunpack.c.h.b16 %v1085
      %v1174 = vunpack.c.l.b16 %v1086
      %v1175 = vunpack.c.l.b16 %v1087
      %v1176 = vunpack.c.h.b16 %v1087
      %v1177 = vunpack.c.l.b16 %v1088
      %v1178 = vunpack.c.l.b16 %v1089
      %v1179 = vunpack.c.h.b16 %v1089
      %v1180 = vunpack.c.l.b16 %v1090
      %v1181 = vunpack.c.l.b16 %v1091
      %v1182 = vunpack.c.h.b16 %v1091
      %v1183 = vunpack.c.l.b16 %v1092
      %v1184 = vunpack.c.l.b16 %v1093
      %v1185 = vunpack.c.h.b16 %v1093
      %v1186 = vunpack.c.l.b16 %v1094
      %v1187 = vunpack.c.l.b16 %v1095
      %v1188 = vunpack.c.h.b16 %v1095
      %v1189 = vunpack.c.l.b16 %v1096
      %v1190 = vunpack.c.l.b16 %v1097
      %v1191 = vunpack.c.h.b16 %v1097
      %v1192 = vunpack.c.l.b16 %v1098
      %v1193 = vunpack.c.l.b16 %v1099
      %v1194 = vunpack.c.h.b16 %v1099
      %v1195 = vunpack.c.l.b16 %v1100
      %v1196 = vunpack.c.l.b16 %v1101
      %v1197 = vunpack.c.h.b16 %v1101
      %v1198 = vunpack.c.l.b16 %v1102
      %v1199 = vunpack.c.l.b16 %v1103
      %v1200 = vunpack.c.h.b16 %v1103
      %v1201 = vunpack.c.l.b16 %v1104
      %v1202 = vpack.c.b16 %v1157, %v1154
      %v1203 = vpack.c.b16 %v1158, %v1155
      %v1204 = vpack.c.b16 %v1159, %v1156
      %v1205 = vpack.c.b16 %v1163, %v1160
      %v1206 = vpack.c.b16 %v1164, %v1161
      %v1207 = vpack.c.b16 %v1165, %v1162
      %v1208 = vpack.c.b16 %v1169, %v1166
      %v1209 = vpack.c.b16 %v1170, %v1167
      %v1210 = vpack.c.b16 %v1171, %v1168
      %v1211 = vpack.c.b16 %v1175, %v1172
      %v1212 = vpack.c.b16 %v1176, %v1173
      %v1213 = vpack.c.b16 %v1177, %v1174
      %v1214 = vpack.c.b16 %v1181, %v1178
      %v1215 = vpack.c.b16 %v1182, %v1179
      %v1216 = vpack.c.b16 %v1183, %v1180
      %v1217 = vpack.c.b16 %v1187, %v1184
      %v1218 = vpack.c.b16 %v1188, %v1185
      %v1219 = vpack.c.b16 %v1189, %v1186
      %v1220 = vpack.c.b16 %v1193, %v1190
      %v1221 = vpack.c.b16 %v1194, %v1191
      %v1222 = vpack.c.b16 %v1195, %v1192
      %v1223 = vpack.c.b16 %v1199, %v1196
      %v1224 = vpack.c.b16 %v1200, %v1197
      %v1225 = vpack.c.b16 %v1201, %v1198
      %1250 = vmatprep.subr.bf16.mxu0 %v1203
      %1251 = vmatpush1.bf16.msra.mxu0 %v1202
      %1252 = vmatprep.subr.bf16.mxu0 %v1206
      %1253 = vmatpush1.bf16.msra.mxu0 %v1205
      %1254 = vmatprep.subr.bf16.mxu0 %v1209
      %1255 = vmatpush1.bf16.msra.mxu0 %v1208
      %1256 = vmatprep.subr.bf16.mxu0 %v1212
      %1257 = vmatpush1.bf16.msra.mxu0 %v1211
      %1258 = vmatprep.subr.bf16.mxu0 %v1215
      %1259 = vmatpush1.bf16.msra.mxu0 %v1214
      %1260 = vmatprep.subr.bf16.mxu0 %v1218
      %1261 = vmatpush1.bf16.msra.mxu0 %v1217
      %1262 = vmatprep.subr.bf16.mxu0 %v1221
      %1263 = vmatpush1.bf16.msra.mxu0 %v1220
      %1264 = vmatprep.subr.bf16.mxu0 %v1224
      %1265 = vmatpush1.bf16.msra.mxu0 %v1223
      %1266 = vmatprep.subr.bf16.mxu0 0
      %1267 = vmatpush1.bf16.msra.mxu0 0
      %1268 = vmatprep.subr.bf16.mxu0 0
      %1269 = vmatpush1.bf16.msra.mxu0 0
      %1270 = vmatprep.subr.bf16.mxu0 0
      %1271 = vmatpush1.bf16.msra.mxu0 0
      %1272 = vmatprep.subr.bf16.mxu0 0
      %1273 = vmatpush1.bf16.msra.mxu0 0
      %1274 = vmatprep.subr.bf16.mxu0 0
      %1275 = vmatpush1.bf16.msra.mxu0 0
      %1276 = vmatprep.subr.bf16.mxu0 0
      %1277 = vmatpush1.bf16.msra.mxu0 0
      %1278 = vmatprep.subr.bf16.mxu0 0
      %1279 = vmatpush1.bf16.msra.mxu0 0
      %1280 = vmatprep.subr.bf16.mxu0 0
      %1281 = vmatpush1.bf16.msra.mxu0 0
      %1282 = vmatprep.mubr.bf16.mxu0 0
      %1283 = vmatmul.mubr.bf16.gmra.mrb[0].mxu0 %v1071
      %v1284 = vpop.f32.mrb[0].mxu0
      %v1285 = vadd.f32 %v1110, %v1284
      %v1286 = vpop.f32.mrb[0].mxu0
      %v1287 = vadd.f32 %v1114, %v1286
      %v1288 = vpop.f32.mrb[0].mxu0
      %v1289 = vadd.f32 %v1110, %v1288
      %v1290 = vpop.f32.mrb[0].mxu0
      %v1291 = vadd.f32 %v1114, %v1290
      %1292 = vmatprep.mubr.bf16.mxu0 0
      %1293 = vmatmul.mubr.bf16.gmra.mrb[0].mxu0 %v1072
      %v1294 = vpop.f32.mrb[0].mxu0
      %v1295 = vadd.f32 %v1110, %v1294
      %v1296 = vpop.f32.mrb[0].mxu0
      %v1297 = vadd.f32 %v1114, %v1296
      %v1298 = vpop.f32.mrb[0].mxu0
      %v1299 = vadd.f32 %v1110, %v1298
      %v1300 = vpop.f32.mrb[0].mxu0
      %v1301 = vadd.f32 %v1114, %v1300
      %1302 = vdwg.mxu0
      %1303 = vmatprep.subr.bf16.mxu0 0
      %1304 = vmatpush1.bf16.msra.mxu0 %v1204
      %1305 = vmatprep.subr.bf16.mxu0 0
      %1306 = vmatpush1.bf16.msra.mxu0 %v1207
      %1307 = vmatprep.subr.bf16.mxu0 0
      %1308 = vmatpush1.bf16.msra.mxu0 %v1210
      %1309 = vmatprep.subr.bf16.mxu0 0
      %1310 = vmatpush1.bf16.msra.mxu0 %v1213
      %1311 = vmatprep.subr.bf16.mxu0 0
      %1312 = vmatpush1.bf16.msra.mxu0 %v1216
      %1313 = vmatprep.subr.bf16.mxu0 0
      %1314 = vmatpush1.bf16.msra.mxu0 %v1219
      %1315 = vmatprep.subr.bf16.mxu0 0
      %1316 = vmatpush1.bf16.msra.mxu0 %v1222
      %1317 = vmatprep.subr.bf16.mxu0 0
      %1318 = vmatpush1.bf16.msra.mxu0 %v1225
      %1319 = vmatprep.subr.bf16.mxu0 0
      %1320 = vmatpush1.bf16.msra.mxu0 0
      %1321 = vmatprep.subr.bf16.mxu0 0
      %1322 = vmatpush1.bf16.msra.mxu0 0
      %1323 = vmatprep.subr.bf16.mxu0 0
      %1324 = vmatpush1.bf16.msra.mxu0 0
      %1325 = vmatprep.subr.bf16.mxu0 0
      %1326 = vmatpush1.bf16.msra.mxu0 0
      %1327 = vmatprep.subr.bf16.mxu0 0
      %1328 = vmatpush1.bf16.msra.mxu0 0
      %1329 = vmatprep.subr.bf16.mxu0 0
      %1330 = vmatpush1.bf16.msra.mxu0 0
      %1331 = vmatprep.subr.bf16.mxu0 0
      %1332 = vmatpush1.bf16.msra.mxu0 0
      %1333 = vmatprep.subr.bf16.mxu0 0
      %1334 = vmatpush1.bf16.msra.mxu0 0
      %1335 = vmatprep.mubr.bf16.mxu0 0
      %1336 = vmatmul.mubr.bf16.gmra.mrb[0].mxu0 %v1071
      %v1337 = vpop.f32.mrb[0].mxu0
      %v1338 = vadd.f32 %v1118, %v1337
      %v1339 = vpop.f32.mrb[0].mxu0
      %v1340 = vpop.f32.mrb[0].mxu0
      %v1341 = vadd.f32 %v1118, %v1340
      %v1342 = vpop.f32.mrb[0].mxu0
      %1343 = vmatprep.mubr.bf16.mxu0 0
      %1344 = vmatmul.mubr.bf16.gmra.mrb[0].mxu0 %v1072
      %v1345 = vpop.f32.mrb[0].mxu0
      %v1346 = vadd.f32 %v1118, %v1345
      %v1347 = vpop.f32.mrb[0].mxu0
      %v1348 = vpop.f32.mrb[0].mxu0
      %v1349 = vadd.f32 %v1118, %v1348
      %v1350 = vpop.f32.mrb[0].mxu0
      %1351 = vdwg.mxu0
      %v1352 = vpack.c.bf16 %v1289, %v1285
      %v1353 = vpack.c.bf16 %v1291, %v1287
      %v1354 = vpack.c.bf16 %v1341, %v1338
      %vm1355 = vcmask 523264
      %v1357 = vsel %vm1355, %v1352, 0
      %v1360 = vsel %vm1355, %v1353, 0
      %1362 = vmatprep.subr.bf16.mxu0 0
      %1363 = vmatpush1.bf16.xpose.msra.mxu0 %v1360
      %1364 = vmatprep.subr.bf16.mxu0 0
      %1365 = vmatpush1.bf16.xpose.msra.mxu0 0
      %1366 = vmatprep.subr.bf16.mxu0 0
      %1367 = vmatpush1.bf16.xpose.msra.mxu0 0
      %1368 = vmatprep.subr.bf16.mxu0 0
      %1369 = vmatpush1.bf16.xpose.msra.mxu0 0
      %1370 = vmatprep.subr.bf16.mxu0 0
      %1371 = vmatpush1.bf16.xpose.msra.mxu0 0
      %1372 = vmatprep.subr.bf16.mxu0 0
      %1373 = vmatpush1.bf16.xpose.msra.mxu0 0
      %1374 = vmatprep.subr.bf16.mxu0 0
      %1375 = vmatpush1.bf16.xpose.msra.mxu0 0
      %1376 = vmatprep.subr.bf16.mxu0 0
      %1377 = vmatpush1.bf16.xpose.msra.mxu0 0
      %1378 = vmatprep.subr.bf16.mxu0 0
      %1379 = vmatpush1.bf16.xpose.msra.mxu0 0
      %1380 = vmatprep.subr.bf16.mxu0 0
      %1381 = vmatpush1.bf16.xpose.msra.mxu0 0
      %1382 = vmatprep.subr.bf16.mxu0 0
      %1383 = vmatpush1.bf16.xpose.msra.mxu0 0
      %1384 = vmatprep.subr.bf16.mxu0 0
      %1385 = vmatpush1.bf16.xpose.msra.mxu0 0
      %1386 = vmatprep.subr.bf16.mxu0 0
      %1387 = vmatpush1.bf16.xpose.msra.mxu0 0
      %1388 = vmatprep.subr.bf16.mxu0 0
      %1389 = vmatpush1.bf16.xpose.msra.mxu0 0
      %1390 = vmatprep.subr.bf16.mxu0 0
      %1391 = vmatpush1.bf16.xpose.msra.mxu0 0
      %1392 = vmatprep.subr.bf16.mxu0 0
      %1393 = vmatpush1.bf16.xpose.msra.mxu0 0
      %1394 = vmatprep.mubr.bf16.mxu0 0
      %1395 = vmatmul.mubr.bf16.gmra.mrb[0].mxu0 %v1357
      %v1396 = vpop.f32.mrb[0].mxu0
      %v1397 = vadd.f32 0.0, %v1396
      %v1398 = vpop.f32.mrb[0].mxu0
      %v1399 = vpop.f32.mrb[0].mxu0
      %v1400 = vadd.f32 0.0, %v1399
      %v1401 = vpop.f32.mrb[0].mxu0
      %1402 = vdwg.mxu0
      %v1403 = vmul.f32 %v1397, 0.125
      %v1404 = vmul.f32 %v1400, 0.125
      %vm1405 = vcmask 130048
      %v1406 = vsel %vm1405, %v1403, -inf
      %1407 = vmax.xlane.f32.xlu0 %v1406
      %v1408 = vpop.xlane.xlu0 %1407
      %v1409 = vsel %vm1405, %v1404, -inf
      %1410 = vmax.xlane.f32.xlu0 %v1409
      %v1411 = vpop.xlane.xlu0 %1410
      %v1412 = vsub.f32 %v1403, %v1408
      %v1413 = vsub.f32 %v1404, %v1411
      %v1414 = vmul.f32 %v1412, 1.442695
      %v1415 = vpow.pop %v1414
      %v1416 = vmul.f32 %v1413, 1.442695
      %v1417 = vpow.pop %v1416
      %v1418 = vsel %vm1405, %v1415, 0.0
      %1419 = vadd.xlane.f32.xlu0 %v1418
      %v1420 = vpop.xlane.xlu0 %1419
      %v1421 = vsel %vm1405, %v1417, 0.0
      %1422 = vadd.xlane.f32.xlu0 %v1421
      %v1423 = vpop.xlane.xlu0 %1422
      %v1424 = vrcp.pop %v1420
      %v1425 = vrcp.pop %v1423
      %v1426 = vmul.f32 %v1415, %v1424
      %v1427 = vmul.f32 %v1417, %v1425
      %v1428 = vpack.c.bf16 %v1427, %v1426
      %v1430 = vsel %vm1405, %v1428, 0
      %1432 = vmatprep.subr.bf16.mxu0 0
      %1433 = vmatpush1.bf16.msra.mxu0 %v1354
      %1434 = vmatprep.subr.bf16.mxu0 0
      %1435 = vmatpush1.bf16.msra.mxu0 0
      %1436 = vmatprep.subr.bf16.mxu0 0
      %1437 = vmatpush1.bf16.msra.mxu0 0
      %1438 = vmatprep.subr.bf16.mxu0 0
      %1439 = vmatpush1.bf16.msra.mxu0 0
      %1440 = vmatprep.subr.bf16.mxu0 0
      %1441 = vmatpush1.bf16.msra.mxu0 0
      %1442 = vmatprep.subr.bf16.mxu0 0
      %1443 = vmatpush1.bf16.msra.mxu0 0
      %1444 = vmatprep.subr.bf16.mxu0 0
      %1445 = vmatpush1.bf16.msra.mxu0 0
      %1446 = vmatprep.subr.bf16.mxu0 0
      %1447 = vmatpush1.bf16.msra.mxu0 0
      %1448 = vmatprep.subr.bf16.mxu0 0
      %1449 = vmatpush1.bf16.msra.mxu0 0
      %1450 = vmatprep.subr.bf16.mxu0 0
      %1451 = vmatpush1.bf16.msra.mxu0 0
      %1452 = vmatprep.subr.bf16.mxu0 0
      %1453 = vmatpush1.bf16.msra.mxu0 0
      %1454 = vmatprep.subr.bf16.mxu0 0
      %1455 = vmatpush1.bf16.msra.mxu0 0
      %1456 = vmatprep.subr.bf16.mxu0 0
      %1457 = vmatpush1.bf16.msra.mxu0 0
      %1458 = vmatprep.subr.bf16.mxu0 0
      %1459 = vmatpush1.bf16.msra.mxu0 0
      %1460 = vmatprep.subr.bf16.mxu0 0
      %1461 = vmatpush1.bf16.msra.mxu0 0
      %1462 = vmatprep.subr.bf16.mxu0 0
      %1463 = vmatpush1.bf16.msra.mxu0 0
      %1464 = vmatprep.mubr.bf16.mxu0 0
      %1465 = vmatmul.mubr.bf16.gmra.mrb[0].mxu0 %v1430
      %v1466 = vpop.f32.mrb[0].mxu0
      %v1467 = vadd.f32 0.0, %v1466
      %v1468 = vpop.f32.mrb[0].mxu0
      %v1469 = vpop.f32.mrb[0].mxu0
      %v1470 = vadd.f32 0.0, %v1469
      %v1471 = vpop.f32.mrb[0].mxu0
      %1472 = vdwg.mxu0
      %1474 = vrot.lane.b32.xlu0 %v1352, 64
      %v1475 = vpop.permute.xlu0 %1474
      %1477 = vrot.lane.b32.xlu0 %v1353, 64
      %v1478 = vpop.permute.xlu0 %1477
      %v1480 = vsel %vm1355, %v1475, 0
      %v1483 = vsel %vm1355, %v1478, 0
      %1485 = vmatprep.subr.bf16.mxu0 0
      %1486 = vmatpush1.bf16.xpose.msra.mxu0 %v1483
      %1487 = vmatprep.subr.bf16.mxu0 0
      %1488 = vmatpush1.bf16.xpose.msra.mxu0 0
      %1489 = vmatprep.subr.bf16.mxu0 0
      %1490 = vmatpush1.bf16.xpose.msra.mxu0 0
      %1491 = vmatprep.subr.bf16.mxu0 0
      %1492 = vmatpush1.bf16.xpose.msra.mxu0 0
      %1493 = vmatprep.subr.bf16.mxu0 0
      %1494 = vmatpush1.bf16.xpose.msra.mxu0 0
      %1495 = vmatprep.subr.bf16.mxu0 0
      %1496 = vmatpush1.bf16.xpose.msra.mxu0 0
      %1497 = vmatprep.subr.bf16.mxu0 0
      %1498 = vmatpush1.bf16.xpose.msra.mxu0 0
      %1499 = vmatprep.subr.bf16.mxu0 0
      %1500 = vmatpush1.bf16.xpose.msra.mxu0 0
      %1501 = vmatprep.subr.bf16.mxu0 0
      %1502 = vmatpush1.bf16.xpose.msra.mxu0 0
      %1503 = vmatprep.subr.bf16.mxu0 0
      %1504 = vmatpush1.bf16.xpose.msra.mxu0 0
      %1505 = vmatprep.subr.bf16.mxu0 0
      %1506 = vmatpush1.bf16.xpose.msra.mxu0 0
      %1507 = vmatprep.subr.bf16.mxu0 0
      %1508 = vmatpush1.bf16.xpose.msra.mxu0 0
      %1509 = vmatprep.subr.bf16.mxu0 0
      %1510 = vmatpush1.bf16.xpose.msra.mxu0 0
      %1511 = vmatprep.subr.bf16.mxu0 0
      %1512 = vmatpush1.bf16.xpose.msra.mxu0 0
      %1513 = vmatprep.subr.bf16.mxu0 0
      %1514 = vmatpush1.bf16.xpose.msra.mxu0 0
      %1515 = vmatprep.subr.bf16.mxu0 0
      %1516 = vmatpush1.bf16.xpose.msra.mxu0 0
      %1517 = vmatprep.mubr.bf16.mxu0 0
      %1518 = vmatmul.mubr.bf16.gmra.mrb[0].mxu0 %v1480
      %v1519 = vpop.f32.mrb[0].mxu0
      %v1520 = vadd.f32 0.0, %v1519
      %v1521 = vpop.f32.mrb[0].mxu0
      %v1522 = vpop.f32.mrb[0].mxu0
      %v1523 = vadd.f32 0.0, %v1522
      %v1524 = vpop.f32.mrb[0].mxu0
      %1525 = vdwg.mxu0
      %v1526 = vmul.f32 %v1520, 0.125
      %v1527 = vmul.f32 %v1523, 0.125
      %v1528 = vsel %vm1405, %v1526, -inf
      %1529 = vmax.xlane.f32.xlu0 %v1528
      %v1530 = vpop.xlane.xlu0 %1529
      %v1531 = vsel %vm1405, %v1527, -inf
      %1532 = vmax.xlane.f32.xlu0 %v1531
      %v1533 = vpop.xlane.xlu0 %1532
      %v1534 = vsub.f32 %v1526, %v1530
      %v1535 = vsub.f32 %v1527, %v1533
      %v1536 = vmul.f32 %v1534, 1.442695
      %v1537 = vpow.pop %v1536
      %v1538 = vmul.f32 %v1535, 1.442695
      %v1539 = vpow.pop %v1538
      %v1540 = vsel %vm1405, %v1537, 0.0
      %1541 = vadd.xlane.f32.xlu0 %v1540
      %v1542 = vpop.xlane.xlu0 %1541
      %v1543 = vsel %vm1405, %v1539, 0.0
      %1544 = vadd.xlane.f32.xlu0 %v1543
      %v1545 = vpop.xlane.xlu0 %1544
      %v1546 = vrcp.pop %v1542
      %v1547 = vrcp.pop %v1545
      %v1548 = vmul.f32 %v1537, %v1546
      %v1549 = vmul.f32 %v1539, %v1547
      %v1550 = vpack.c.bf16 %v1549, %v1548
      %1552 = vrot.lane.b32.xlu0 %v1354, 64
      %v1553 = vpop.permute.xlu0 %1552
      %v1556 = vsel %vm1405, %v1550, 0
      %1558 = vmatprep.subr.bf16.mxu0 0
      %1559 = vmatpush1.bf16.msra.mxu0 %v1553
      %1560 = vmatprep.subr.bf16.mxu0 0
      %1561 = vmatpush1.bf16.msra.mxu0 0
      %1562 = vmatprep.subr.bf16.mxu0 0
      %1563 = vmatpush1.bf16.msra.mxu0 0
      %1564 = vmatprep.subr.bf16.mxu0 0
      %1565 = vmatpush1.bf16.msra.mxu0 0
      %1566 = vmatprep.subr.bf16.mxu0 0
      %1567 = vmatpush1.bf16.msra.mxu0 0
      %1568 = vmatprep.subr.bf16.mxu0 0
      %1569 = vmatpush1.bf16.msra.mxu0 0
      %1570 = vmatprep.subr.bf16.mxu0 0
      %1571 = vmatpush1.bf16.msra.mxu0 0
      %1572 = vmatprep.subr.bf16.mxu0 0
      %1573 = vmatpush1.bf16.msra.mxu0 0
      %1574 = vmatprep.subr.bf16.mxu0 0
      %1575 = vmatpush1.bf16.msra.mxu0 0
      %1576 = vmatprep.subr.bf16.mxu0 0
      %1577 = vmatpush1.bf16.msra.mxu0 0
      %1578 = vmatprep.subr.bf16.mxu0 0
      %1579 = vmatpush1.bf16.msra.mxu0 0
      %1580 = vmatprep.subr.bf16.mxu0 0
      %1581 = vmatpush1.bf16.msra.mxu0 0
      %1582 = vmatprep.subr.bf16.mxu0 0
      %1583 = vmatpush1.bf16.msra.mxu0 0
      %1584 = vmatprep.subr.bf16.mxu0 0
      %1585 = vmatpush1.bf16.msra.mxu0 0
      %1586 = vmatprep.subr.bf16.mxu0 0
      %1587 = vmatpush1.bf16.msra.mxu0 0
      %1588 = vmatprep.subr.bf16.mxu0 0
      %1589 = vmatpush1.bf16.msra.mxu0 0
      %1590 = vmatprep.mubr.bf16.mxu0 0
      %1591 = vmatmul.mubr.bf16.gmra.mrb[0].mxu0 %v1556
      %v1592 = vpop.f32.mrb[0].mxu0
      %v1593 = vadd.f32 0.0, %v1592
      %v1594 = vpop.f32.mrb[0].mxu0
      %v1595 = vpop.f32.mrb[0].mxu0
      %v1596 = vadd.f32 0.0, %v1595
      %v1597 = vpop.f32.mrb[0].mxu0
      %1598 = vdwg.mxu0
      %1601 = vrot.lane.b32.xlu0 %v1593, 64
      %v1602 = vpop.permute.xlu0 %1601
      %1603 = vrot.lane.b32.xlu0 %v1596, 64
      %v1604 = vpop.permute.xlu0 %1603
      %v1607 = vsel %vm1355, %v1467, %v1602
      %v1608 = vsel %vm1355, %v1470, %v1604
      %v1609 = vpack.c.bf16 %v1299, %v1295
      %v1610 = vpack.c.bf16 %v1301, %v1297
      %v1611 = vpack.c.bf16 %v1349, %v1346
      %v1613 = vsel %vm1355, %v1609, 0
      %v1616 = vsel %vm1355, %v1610, 0
      %1618 = vmatprep.subr.bf16.mxu0 0
      %1619 = vmatpush1.bf16.xpose.msra.mxu0 %v1616
      %1620 = vmatprep.subr.bf16.mxu0 0
      %1621 = vmatpush1.bf16.xpose.msra.mxu0 0
      %1622 = vmatprep.subr.bf16.mxu0 0
      %1623 = vmatpush1.bf16.xpose.msra.mxu0 0
      %1624 = vmatprep.subr.bf16.mxu0 0
      %1625 = vmatpush1.bf16.xpose.msra.mxu0 0
      %1626 = vmatprep.subr.bf16.mxu0 0
      %1627 = vmatpush1.bf16.xpose.msra.mxu0 0
      %1628 = vmatprep.subr.bf16.mxu0 0
      %1629 = vmatpush1.bf16.xpose.msra.mxu0 0
      %1630 = vmatprep.subr.bf16.mxu0 0
      %1631 = vmatpush1.bf16.xpose.msra.mxu0 0
      %1632 = vmatprep.subr.bf16.mxu0 0
      %1633 = vmatpush1.bf16.xpose.msra.mxu0 0
      %1634 = vmatprep.subr.bf16.mxu0 0
      %1635 = vmatpush1.bf16.xpose.msra.mxu0 0
      %1636 = vmatprep.subr.bf16.mxu0 0
      %1637 = vmatpush1.bf16.xpose.msra.mxu0 0
      %1638 = vmatprep.subr.bf16.mxu0 0
      %1639 = vmatpush1.bf16.xpose.msra.mxu0 0
      %1640 = vmatprep.subr.bf16.mxu0 0
      %1641 = vmatpush1.bf16.xpose.msra.mxu0 0
      %1642 = vmatprep.subr.bf16.mxu0 0
      %1643 = vmatpush1.bf16.xpose.msra.mxu0 0
      %1644 = vmatprep.subr.bf16.mxu0 0
      %1645 = vmatpush1.bf16.xpose.msra.mxu0 0
      %1646 = vmatprep.subr.bf16.mxu0 0
      %1647 = vmatpush1.bf16.xpose.msra.mxu0 0
      %1648 = vmatprep.subr.bf16.mxu0 0
      %1649 = vmatpush1.bf16.xpose.msra.mxu0 0
      %1650 = vmatprep.mubr.bf16.mxu0 0
      %1651 = vmatmul.mubr.bf16.gmra.mrb[0].mxu0 %v1613
      %v1652 = vpop.f32.mrb[0].mxu0
      %v1653 = vadd.f32 0.0, %v1652
      %v1654 = vpop.f32.mrb[0].mxu0
      %v1655 = vpop.f32.mrb[0].mxu0
      %v1656 = vadd.f32 0.0, %v1655
      %v1657 = vpop.f32.mrb[0].mxu0
      %1658 = vdwg.mxu0
      %v1659 = vmul.f32 %v1653, 0.125
      %v1660 = vmul.f32 %v1656, 0.125
      %v1661 = vsel %vm1405, %v1659, -inf
      %1662 = vmax.xlane.f32.xlu0 %v1661
      %v1663 = vpop.xlane.xlu0 %1662
      %v1664 = vsel %vm1405, %v1660, -inf
      %1665 = vmax.xlane.f32.xlu0 %v1664
      %v1666 = vpop.xlane.xlu0 %1665
      %v1667 = vsub.f32 %v1659, %v1663
      %v1668 = vsub.f32 %v1660, %v1666
      %v1669 = vmul.f32 %v1667, 1.442695
      %v1670 = vpow.pop %v1669
      %v1671 = vmul.f32 %v1668, 1.442695
      %v1672 = vpow.pop %v1671
      %v1673 = vsel %vm1405, %v1670, 0.0
      %1674 = vadd.xlane.f32.xlu0 %v1673
      %v1675 = vpop.xlane.xlu0 %1674
      %v1676 = vsel %vm1405, %v1672, 0.0
      %1677 = vadd.xlane.f32.xlu0 %v1676
      %v1678 = vpop.xlane.xlu0 %1677
      %v1679 = vrcp.pop %v1675
      %v1680 = vrcp.pop %v1678
      %v1681 = vmul.f32 %v1670, %v1679
      %v1682 = vmul.f32 %v1672, %v1680
      %v1683 = vpack.c.bf16 %v1682, %v1681
      %v1685 = vsel %vm1405, %v1683, 0
      %1687 = vmatprep.subr.bf16.mxu0 0
      %1688 = vmatpush1.bf16.msra.mxu0 %v1611
      %1689 = vmatprep.subr.bf16.mxu0 0
      %1690 = vmatpush1.bf16.msra.mxu0 0
      %1691 = vmatprep.subr.bf16.mxu0 0
      %1692 = vmatpush1.bf16.msra.mxu0 0
      %1693 = vmatprep.subr.bf16.mxu0 0
      %1694 = vmatpush1.bf16.msra.mxu0 0
      %1695 = vmatprep.subr.bf16.mxu0 0
      %1696 = vmatpush1.bf16.msra.mxu0 0
      %1697 = vmatprep.subr.bf16.mxu0 0
      %1698 = vmatpush1.bf16.msra.mxu0 0
      %1699 = vmatprep.subr.bf16.mxu0 0
      %1700 = vmatpush1.bf16.msra.mxu0 0
      %1701 = vmatprep.subr.bf16.mxu0 0
      %1702 = vmatpush1.bf16.msra.mxu0 0
      %1703 = vmatprep.subr.bf16.mxu0 0
      %1704 = vmatpush1.bf16.msra.mxu0 0
      %1705 = vmatprep.subr.bf16.mxu0 0
      %1706 = vmatpush1.bf16.msra.mxu0 0
      %1707 = vmatprep.subr.bf16.mxu0 0
      %1708 = vmatpush1.bf16.msra.mxu0 0
      %1709 = vmatprep.subr.bf16.mxu0 0
      %1710 = vmatpush1.bf16.msra.mxu0 0
      %1711 = vmatprep.subr.bf16.mxu0 0
      %1712 = vmatpush1.bf16.msra.mxu0 0
      %1713 = vmatprep.subr.bf16.mxu0 0
      %1714 = vmatpush1.bf16.msra.mxu0 0
      %1715 = vmatprep.subr.bf16.mxu0 0
      %1716 = vmatpush1.bf16.msra.mxu0 0
      %1717 = vmatprep.subr.bf16.mxu0 0
      %1718 = vmatpush1.bf16.msra.mxu0 0
      %1719 = vmatprep.mubr.bf16.mxu0 0
      %1720 = vmatmul.mubr.bf16.gmra.mrb[0].mxu0 %v1685
      %v1721 = vpop.f32.mrb[0].mxu0
      %v1722 = vadd.f32 0.0, %v1721
      %v1723 = vpop.f32.mrb[0].mxu0
      %v1724 = vpop.f32.mrb[0].mxu0
      %v1725 = vadd.f32 0.0, %v1724
      %v1726 = vpop.f32.mrb[0].mxu0
      %1727 = vdwg.mxu0
      %1729 = vrot.lane.b32.xlu0 %v1609, 64
      %v1730 = vpop.permute.xlu0 %1729
      %1732 = vrot.lane.b32.xlu0 %v1610, 64
      %v1733 = vpop.permute.xlu0 %1732
      %v1735 = vsel %vm1355, %v1730, 0
      %v1738 = vsel %vm1355, %v1733, 0
      %1740 = vmatprep.subr.bf16.mxu0 0
      %1741 = vmatpush1.bf16.xpose.msra.mxu0 %v1738
      %1742 = vmatprep.subr.bf16.mxu0 0
      %1743 = vmatpush1.bf16.xpose.msra.mxu0 0
      %1744 = vmatprep.subr.bf16.mxu0 0
      %1745 = vmatpush1.bf16.xpose.msra.mxu0 0
      %1746 = vmatprep.subr.bf16.mxu0 0
      %1747 = vmatpush1.bf16.xpose.msra.mxu0 0
      %1748 = vmatprep.subr.bf16.mxu0 0
      %1749 = vmatpush1.bf16.xpose.msra.mxu0 0
      %1750 = vmatprep.subr.bf16.mxu0 0
      %1751 = vmatpush1.bf16.xpose.msra.mxu0 0
      %1752 = vmatprep.subr.bf16.mxu0 0
      %1753 = vmatpush1.bf16.xpose.msra.mxu0 0
      %1754 = vmatprep.subr.bf16.mxu0 0
      %1755 = vmatpush1.bf16.xpose.msra.mxu0 0
      %1756 = vmatprep.subr.bf16.mxu0 0
      %1757 = vmatpush1.bf16.xpose.msra.mxu0 0
      %1758 = vmatprep.subr.bf16.mxu0 0
      %1759 = vmatpush1.bf16.xpose.msra.mxu0 0
      %1760 = vmatprep.subr.bf16.mxu0 0
      %1761 = vmatpush1.bf16.xpose.msra.mxu0 0
      %1762 = vmatprep.subr.bf16.mxu0 0
      %1763 = vmatpush1.bf16.xpose.msra.mxu0 0
      %1764 = vmatprep.subr.bf16.mxu0 0
      %1765 = vmatpush1.bf16.xpose.msra.mxu0 0
      %1766 = vmatprep.subr.bf16.mxu0 0
      %1767 = vmatpush1.bf16.xpose.msra.mxu0 0
      %1768 = vmatprep.subr.bf16.mxu0 0
      %1769 = vmatpush1.bf16.xpose.msra.mxu0 0
      %1770 = vmatprep.subr.bf16.mxu0 0
      %1771 = vmatpush1.bf16.xpose.msra.mxu0 0
      %1772 = vmatprep.mubr.bf16.mxu0 0
      %1773 = vmatmul.mubr.bf16.gmra.mrb[0].mxu0 %v1735
      %v1774 = vpop.f32.mrb[0].mxu0
      %v1775 = vadd.f32 0.0, %v1774
      %v1776 = vpop.f32.mrb[0].mxu0
      %v1777 = vpop.f32.mrb[0].mxu0
      %v1778 = vadd.f32 0.0, %v1777
      %v1779 = vpop.f32.mrb[0].mxu0
      %1780 = vdwg.mxu0
      %v1781 = vmul.f32 %v1775, 0.125
      %v1782 = vmul.f32 %v1778, 0.125
      %v1783 = vsel %vm1405, %v1781, -inf
      %1784 = vmax.xlane.f32.xlu0 %v1783
      %v1785 = vpop.xlane.xlu0 %1784
      %v1786 = vsel %vm1405, %v1782, -inf
      %1787 = vmax.xlane.f32.xlu0 %v1786
      %v1788 = vpop.xlane.xlu0 %1787
      %v1789 = vsub.f32 %v1781, %v1785
      %v1790 = vsub.f32 %v1782, %v1788
      %v1791 = vmul.f32 %v1789, 1.442695
      %v1792 = vpow.pop %v1791
      %v1793 = vmul.f32 %v1790, 1.442695
      %v1794 = vpow.pop %v1793
      %v1795 = vsel %vm1405, %v1792, 0.0
      %1796 = vadd.xlane.f32.xlu0 %v1795
      %v1797 = vpop.xlane.xlu0 %1796
      %v1798 = vsel %vm1405, %v1794, 0.0
      %1799 = vadd.xlane.f32.xlu0 %v1798
      %v1800 = vpop.xlane.xlu0 %1799
      %v1801 = vrcp.pop %v1797
      %v1802 = vrcp.pop %v1800
      %v1803 = vmul.f32 %v1792, %v1801
      %v1804 = vmul.f32 %v1794, %v1802
      %v1805 = vpack.c.bf16 %v1804, %v1803
      %1807 = vrot.lane.b32.xlu0 %v1611, 64
      %v1808 = vpop.permute.xlu0 %1807
      %v1811 = vsel %vm1405, %v1805, 0
      %1813 = vmatprep.subr.bf16.mxu0 0
      %1814 = vmatpush1.bf16.msra.mxu0 %v1808
      %1815 = vmatprep.subr.bf16.mxu0 0
      %1816 = vmatpush1.bf16.msra.mxu0 0
      %1817 = vmatprep.subr.bf16.mxu0 0
      %1818 = vmatpush1.bf16.msra.mxu0 0
      %1819 = vmatprep.subr.bf16.mxu0 0
      %1820 = vmatpush1.bf16.msra.mxu0 0
      %1821 = vmatprep.subr.bf16.mxu0 0
      %1822 = vmatpush1.bf16.msra.mxu0 0
      %1823 = vmatprep.subr.bf16.mxu0 0
      %1824 = vmatpush1.bf16.msra.mxu0 0
      %1825 = vmatprep.subr.bf16.mxu0 0
      %1826 = vmatpush1.bf16.msra.mxu0 0
      %1827 = vmatprep.subr.bf16.mxu0 0
      %1828 = vmatpush1.bf16.msra.mxu0 0
      %1829 = vmatprep.subr.bf16.mxu0 0
      %1830 = vmatpush1.bf16.msra.mxu0 0
      %1831 = vmatprep.subr.bf16.mxu0 0
      %1832 = vmatpush1.bf16.msra.mxu0 0
      %1833 = vmatprep.subr.bf16.mxu0 0
      %1834 = vmatpush1.bf16.msra.mxu0 0
      %1835 = vmatprep.subr.bf16.mxu0 0
      %1836 = vmatpush1.bf16.msra.mxu0 0
      %1837 = vmatprep.subr.bf16.mxu0 0
      %1838 = vmatpush1.bf16.msra.mxu0 0
      %1839 = vmatprep.subr.bf16.mxu0 0
      %1840 = vmatpush1.bf16.msra.mxu0 0
      %1841 = vmatprep.subr.bf16.mxu0 0
      %1842 = vmatpush1.bf16.msra.mxu0 0
      %1843 = vmatprep.subr.bf16.mxu0 0
      %1844 = vmatpush1.bf16.msra.mxu0 0
      %1845 = vmatprep.mubr.bf16.mxu0 0
      %1846 = vmatmul.mubr.bf16.gmra.mrb[0].mxu0 %v1811
      %v1847 = vpop.f32.mrb[0].mxu0
      %v1848 = vadd.f32 0.0, %v1847
      %v1849 = vpop.f32.mrb[0].mxu0
      %v1850 = vpop.f32.mrb[0].mxu0
      %v1851 = vadd.f32 0.0, %v1850
      %v1852 = vpop.f32.mrb[0].mxu0
      %1853 = vdwg.mxu0
      %1856 = vrot.lane.b32.xlu0 %v1848, 64
      %v1857 = vpop.permute.xlu0 %1856
      %1858 = vrot.lane.b32.xlu0 %v1851, 64
      %v1859 = vpop.permute.xlu0 %1858
      %v1862 = vsel %vm1355, %v1722, %v1857
      %v1863 = vsel %vm1355, %v1725, %v1859
      %v1864 = vpack.c.bf16 %v1608, %v1607
      %v1865 = vpack.c.bf16 %v1863, %v1862
      %v1866 = vld [vmem:[%s906] sm:$0xf]
      %v1867 = vld [vmem:[%s906 + $0x4] sm:$0xf]
      %v1868 = vld [vmem:[%s906 + $0x8] sm:$0xf]
      %v1869 = vld [vmem:[%s906 + $0xc] sm:$0xf]
      %v1870 = vld [vmem:[%s906 + $0x10] sm:$0xf]
      %v1871 = vld [vmem:[%s906 + $0x14] sm:$0xf]
      %v1872 = vld [vmem:[%s906 + $0x18] sm:$0xf]
      %v1873 = vld [vmem:[%s906 + $0x1c] sm:$0xf]
      %v1874 = vld [vmem:[%s906 + $0x20] sm:$0xf]
      %v1875 = vld [vmem:[%s906 + $0x24] sm:$0xf]
      %v1876 = vld [vmem:[%s906 + $0x28] sm:$0xf]
      %v1877 = vld [vmem:[%s906 + $0x2c] sm:$0xf]
      %v1878 = vld [vmem:[%s906 + $0x30] sm:$0xf]
      %v1879 = vld [vmem:[%s906 + $0x34] sm:$0xf]
      %v1880 = vld [vmem:[%s906 + $0x38] sm:$0xf]
      %v1881 = vld [vmem:[%s906 + $0x3c] sm:$0xf]
      %v1882 = vld [vmem:[%s913] sm:$0x1]
      %v1884 = vlaneseq
      %v1885 = vshrl.u32 %v1884, 7
      %v1886 = vsub.s32 0, %v1885
      %v1887 = vrot.slane %v1882, %v1886
      %v1905 = vunpack.c.l.b16 %v1866
      %v1906 = vunpack.c.l.b16 %v1867
      %v1907 = vunpack.c.l.b16 %v1868
      %v1908 = vunpack.c.l.b16 %v1869
      %v1909 = vunpack.c.l.b16 %v1870
      %v1910 = vunpack.c.l.b16 %v1871
      %v1911 = vunpack.c.l.b16 %v1872
      %v1912 = vunpack.c.l.b16 %v1873
      %v1913 = vunpack.c.l.b16 %v1874
      %v1914 = vunpack.c.l.b16 %v1875
      %v1915 = vunpack.c.l.b16 %v1876
      %v1916 = vunpack.c.l.b16 %v1877
      %v1917 = vunpack.c.l.b16 %v1878
      %v1918 = vunpack.c.l.b16 %v1879
      %v1919 = vunpack.c.l.b16 %v1880
      %v1920 = vunpack.c.l.b16 %v1881
      %v1921 = vpack.c.b16 %v1906, %v1905
      %v1922 = vpack.c.b16 %v1908, %v1907
      %v1923 = vpack.c.b16 %v1910, %v1909
      %v1924 = vpack.c.b16 %v1912, %v1911
      %v1925 = vpack.c.b16 %v1914, %v1913
      %v1926 = vpack.c.b16 %v1916, %v1915
      %v1927 = vpack.c.b16 %v1918, %v1917
      %v1928 = vpack.c.b16 %v1920, %v1919
      %1937 = vmatprep.subr.bf16.mxu0 0
      %1938 = vmatpush1.bf16.msra.mxu0 %v1921
      %1939 = vmatprep.subr.bf16.mxu0 0
      %1940 = vmatpush1.bf16.msra.mxu0 %v1922
      %1941 = vmatprep.subr.bf16.mxu0 0
      %1942 = vmatpush1.bf16.msra.mxu0 %v1923
      %1943 = vmatprep.subr.bf16.mxu0 0
      %1944 = vmatpush1.bf16.msra.mxu0 %v1924
      %1945 = vmatprep.subr.bf16.mxu0 0
      %1946 = vmatpush1.bf16.msra.mxu0 %v1925
      %1947 = vmatprep.subr.bf16.mxu0 0
      %1948 = vmatpush1.bf16.msra.mxu0 %v1926
      %1949 = vmatprep.subr.bf16.mxu0 0
      %1950 = vmatpush1.bf16.msra.mxu0 %v1927
      %1951 = vmatprep.subr.bf16.mxu0 0
      %1952 = vmatpush1.bf16.msra.mxu0 %v1928
      %1953 = vmatprep.subr.bf16.mxu0 0
      %1954 = vmatpush1.bf16.msra.mxu0 0
      %1955 = vmatprep.subr.bf16.mxu0 0
      %1956 = vmatpush1.bf16.msra.mxu0 0
      %1957 = vmatprep.subr.bf16.mxu0 0
      %1958 = vmatpush1.bf16.msra.mxu0 0
      %1959 = vmatprep.subr.bf16.mxu0 0
      %1960 = vmatpush1.bf16.msra.mxu0 0
      %1961 = vmatprep.subr.bf16.mxu0 0
      %1962 = vmatpush1.bf16.msra.mxu0 0
      %1963 = vmatprep.subr.bf16.mxu0 0
      %1964 = vmatpush1.bf16.msra.mxu0 0
      %1965 = vmatprep.subr.bf16.mxu0 0
      %1966 = vmatpush1.bf16.msra.mxu0 0
      %1967 = vmatprep.subr.bf16.mxu0 0
      %1968 = vmatpush1.bf16.msra.mxu0 0
      %1969 = vmatprep.mubr.bf16.mxu0 0
      %1970 = vmatmul.mubr.bf16.gmra.mrb[0].mxu0 %v1864
      %v1971 = vpop.f32.mrb[0].mxu0
      %v1972 = vadd.f32 %v1887, %v1971
      %v1973 = vpop.f32.mrb[0].mxu0
      %v1974 = vpop.f32.mrb[0].mxu0
      %v1975 = vadd.f32 %v1887, %v1974
      %v1976 = vpop.f32.mrb[0].mxu0
      %1977 = vmatprep.mubr.bf16.mxu0 0
      %1978 = vmatmul.mubr.bf16.gmra.mrb[0].mxu0 %v1865
      %v1979 = vpop.f32.mrb[0].mxu0
      %v1980 = vadd.f32 %v1887, %v1979
      %v1981 = vpop.f32.mrb[0].mxu0
      %v1982 = vpop.f32.mrb[0].mxu0
      %v1983 = vadd.f32 %v1887, %v1982
      %v1984 = vpop.f32.mrb[0].mxu0
      %1985 = vdwg.mxu0
      %v1986 = vadd.f32 %v1067, %v1972
      %v1987 = vadd.f32 %v1068, %v1975
      %v1988 = vadd.f32 %v1069, %v1980
      %v1989 = vadd.f32 %v1070, %v1983
      %v1990 = vld [vmem:[%s920] sm:$0x1]
      %v1991 = vld [vmem:[%s927] sm:$0x1]
      %1992 = vadd.xlane.f32.xlu0 %v1986
      %v1993 = vpop.xlane.xlu0 %1992
      %1994 = vadd.xlane.f32.xlu0 %v1987
      %v1995 = vpop.xlane.xlu0 %1994
      %1996 = vadd.xlane.f32.xlu0 %v1988
      %v1997 = vpop.xlane.xlu0 %1996
      %1998 = vadd.xlane.f32.xlu0 %v1989
      %v1999 = vpop.xlane.xlu0 %1998
      %v2000 = vrcp.pop 128.0
      %v2001 = vmul.f32 %v1993, %v2000
      %v2002 = vmul.f32 %v1995, %v2000
      %v2003 = vmul.f32 %v1997, %v2000
      %v2004 = vmul.f32 %v1999, %v2000
      %v2005 = vsub.f32 %v1986, %v2001
      %v2006 = vsub.f32 %v1987, %v2002
      %v2007 = vsub.f32 %v1988, %v2003
      %v2008 = vsub.f32 %v1989, %v2004
      %v2009 = vmul.f32 %v2005, %v2005
      %v2010 = vmul.f32 %v2006, %v2006
      %v2011 = vmul.f32 %v2007, %v2007
      %v2012 = vmul.f32 %v2008, %v2008
      %2013 = vadd.xlane.f32.xlu0 %v2009
      %v2014 = vpop.xlane.xlu0 %2013
      %2015 = vadd.xlane.f32.xlu0 %v2010
      %v2016 = vpop.xlane.xlu0 %2015
      %2017 = vadd.xlane.f32.xlu0 %v2011
      %v2018 = vpop.xlane.xlu0 %2017
      %2019 = vadd.xlane.f32.xlu0 %v2012
      %v2020 = vpop.xlane.xlu0 %2019
      %v2021 = vmul.f32 %v2014, %v2000
      %v2022 = vmul.f32 %v2016, %v2000
      %v2023 = vmul.f32 %v2018, %v2000
      %v2024 = vmul.f32 %v2020, %v2000
      %v2025 = vadd.f32 %v2021, 1e-12
      %v2026 = vadd.f32 %v2022, 1e-12
      %v2027 = vadd.f32 %v2023, 1e-12
      %v2028 = vadd.f32 %v2024, 1e-12
      %v2029 = vrsqrt.pop %v2025
      %v2030 = vrsqrt.pop %v2026
      %v2031 = vrsqrt.pop %v2027
      %v2032 = vrsqrt.pop %v2028
      %v2033 = vmul.f32 %v2005, %v2029
      %v2034 = vmul.f32 %v2006, %v2030
      %v2035 = vmul.f32 %v2007, %v2031
      %v2036 = vmul.f32 %v2008, %v2032
      %v2038 = vlaneseq
      %v2039 = vshrl.u32 %v2038, 7
      %v2040 = vsub.s32 0, %v2039
      %v2041 = vrot.slane %v1990, %v2040
      %v2043 = vmul.f32 %v2033, %v2041
      %v2044 = vmul.f32 %v2034, %v2041
      %v2045 = vmul.f32 %v2035, %v2041
      %v2046 = vmul.f32 %v2036, %v2041
      %v2048 = vlaneseq
      %v2049 = vshrl.u32 %v2048, 7
      %v2050 = vsub.s32 0, %v2049
      %v2051 = vrot.slane %v1991, %v2050
      %v2053 = vadd.f32 %v2043, %v2051
      %v2054 = vadd.f32 %v2044, %v2051
      %v2055 = vadd.f32 %v2045, %v2051
      %v2056 = vadd.f32 %v2046, %v2051
      %v2057 = vpack.c.bf16 %v2054, %v2053
      %v2058 = vpack.c.bf16 %v2056, %v2055
      %v2059 = vld [vmem:[%s936] sm:$0xff]
      %v2060 = vld [vmem:[%s936 + $0x8] sm:$0xff]
      %v2061 = vld [vmem:[%s936 + $0x10] sm:$0xff]
      %v2062 = vld [vmem:[%s936 + $0x18] sm:$0xff]
      %v2063 = vld [vmem:[%s936 + $0x20] sm:$0xff]
      %v2064 = vld [vmem:[%s936 + $0x28] sm:$0xff]
      %v2065 = vld [vmem:[%s936 + $0x30] sm:$0xff]
      %v2066 = vld [vmem:[%s936 + $0x38] sm:$0xff]
      %v2067 = vld [vmem:[%s936 + $0x40] sm:$0xff]
      %v2068 = vld [vmem:[%s936 + $0x48] sm:$0xff]
      %v2069 = vld [vmem:[%s936 + $0x50] sm:$0xff]
      %v2070 = vld [vmem:[%s936 + $0x58] sm:$0xff]
      %v2071 = vld [vmem:[%s936 + $0x60] sm:$0xff]
      %v2072 = vld [vmem:[%s936 + $0x68] sm:$0xff]
      %v2073 = vld [vmem:[%s936 + $0x70] sm:$0xff]
      %v2074 = vld [vmem:[%s936 + $0x78] sm:$0xff]
      %v2075 = vld [vmem:[%s944] sm:$0x3]
      %v2077 = vlaneseq
      %v2078 = vshrl.u32 %v2077, 7
      %v2079 = vsub.s32 0, %v2078
      %v2080 = vrot.slane %v2075, %v2079
      %v2081 = vlaneseq
      %v2082 = vshrl.u32 %v2081, 7
      %v2083 = vsub.s32 1, %v2082
      %v2084 = vrot.slane %v2075, %v2083
      %v2103 = vunpack.c.l.b16 %v2059
      %v2104 = vunpack.c.h.b16 %v2059
      %v2105 = vunpack.c.l.b16 %v2060
      %v2106 = vunpack.c.h.b16 %v2060
      %v2107 = vunpack.c.l.b16 %v2061
      %v2108 = vunpack.c.h.b16 %v2061
      %v2109 = vunpack.c.l.b16 %v2062
      %v2110 = vunpack.c.h.b16 %v2062
      %v2111 = vunpack.c.l.b16 %v2063
      %v2112 = vunpack.c.h.b16 %v2063
      %v2113 = vunpack.c.l.b16 %v2064
      %v2114 = vunpack.c.h.b16 %v2064
      %v2115 = vunpack.c.l.b16 %v2065
      %v2116 = vunpack.c.h.b16 %v2065
      %v2117 = vunpack.c.l.b16 %v2066
      %v2118 = vunpack.c.h.b16 %v2066
      %v2119 = vunpack.c.l.b16 %v2067
      %v2120 = vunpack.c.h.b16 %v2067
      %v2121 = vunpack.c.l.b16 %v2068
      %v2122 = vunpack.c.h.b16 %v2068
      %v2123 = vunpack.c.l.b16 %v2069
      %v2124 = vunpack.c.h.b16 %v2069
      %v2125 = vunpack.c.l.b16 %v2070
      %v2126 = vunpack.c.h.b16 %v2070
      %v2127 = vunpack.c.l.b16 %v2071
      %v2128 = vunpack.c.h.b16 %v2071
      %v2129 = vunpack.c.l.b16 %v2072
      %v2130 = vunpack.c.h.b16 %v2072
      %v2131 = vunpack.c.l.b16 %v2073
      %v2132 = vunpack.c.h.b16 %v2073
      %v2133 = vunpack.c.l.b16 %v2074
      %v2134 = vunpack.c.h.b16 %v2074
      %v2135 = vpack.c.b16 %v2105, %v2103
      %v2136 = vpack.c.b16 %v2106, %v2104
      %v2137 = vpack.c.b16 %v2109, %v2107
      %v2138 = vpack.c.b16 %v2110, %v2108
      %v2139 = vpack.c.b16 %v2113, %v2111
      %v2140 = vpack.c.b16 %v2114, %v2112
      %v2141 = vpack.c.b16 %v2117, %v2115
      %v2142 = vpack.c.b16 %v2118, %v2116
      %v2143 = vpack.c.b16 %v2121, %v2119
      %v2144 = vpack.c.b16 %v2122, %v2120
      %v2145 = vpack.c.b16 %v2125, %v2123
      %v2146 = vpack.c.b16 %v2126, %v2124
      %v2147 = vpack.c.b16 %v2129, %v2127
      %v2148 = vpack.c.b16 %v2130, %v2128
      %v2149 = vpack.c.b16 %v2133, %v2131
      %v2150 = vpack.c.b16 %v2134, %v2132
      %2167 = vmatprep.subr.bf16.mxu0 %v2136
      %2168 = vmatpush1.bf16.msra.mxu0 %v2135
      %2169 = vmatprep.subr.bf16.mxu0 %v2138
      %2170 = vmatpush1.bf16.msra.mxu0 %v2137
      %2171 = vmatprep.subr.bf16.mxu0 %v2140
      %2172 = vmatpush1.bf16.msra.mxu0 %v2139
      %2173 = vmatprep.subr.bf16.mxu0 %v2142
      %2174 = vmatpush1.bf16.msra.mxu0 %v2141
      %2175 = vmatprep.subr.bf16.mxu0 %v2144
      %2176 = vmatpush1.bf16.msra.mxu0 %v2143
      %2177 = vmatprep.subr.bf16.mxu0 %v2146
      %2178 = vmatpush1.bf16.msra.mxu0 %v2145
      %2179 = vmatprep.subr.bf16.mxu0 %v2148
      %2180 = vmatpush1.bf16.msra.mxu0 %v2147
      %2181 = vmatprep.subr.bf16.mxu0 %v2150
      %2182 = vmatpush1.bf16.msra.mxu0 %v2149
      %2183 = vmatprep.subr.bf16.mxu0 0
      %2184 = vmatpush1.bf16.msra.mxu0 0
      %2185 = vmatprep.subr.bf16.mxu0 0
      %2186 = vmatpush1.bf16.msra.mxu0 0
      %2187 = vmatprep.subr.bf16.mxu0 0
      %2188 = vmatpush1.bf16.msra.mxu0 0
      %2189 = vmatprep.subr.bf16.mxu0 0
      %2190 = vmatpush1.bf16.msra.mxu0 0
      %2191 = vmatprep.subr.bf16.mxu0 0
      %2192 = vmatpush1.bf16.msra.mxu0 0
      %2193 = vmatprep.subr.bf16.mxu0 0
      %2194 = vmatpush1.bf16.msra.mxu0 0
      %2195 = vmatprep.subr.bf16.mxu0 0
      %2196 = vmatpush1.bf16.msra.mxu0 0
      %2197 = vmatprep.subr.bf16.mxu0 0
      %2198 = vmatpush1.bf16.msra.mxu0 0
      %2199 = vmatprep.mubr.bf16.mxu0 0
      %2200 = vmatmul.mubr.bf16.gmra.mrb[0].mxu0 %v2057
      %v2201 = vpop.f32.mrb[0].mxu0
      %v2202 = vadd.f32 %v2080, %v2201
      %v2203 = vpop.f32.mrb[0].mxu0
      %v2204 = vadd.f32 %v2084, %v2203
      %v2205 = vpop.f32.mrb[0].mxu0
      %v2206 = vadd.f32 %v2080, %v2205
      %v2207 = vpop.f32.mrb[0].mxu0
      %v2208 = vadd.f32 %v2084, %v2207
      %2209 = vmatprep.mubr.bf16.mxu0 0
      %2210 = vmatmul.mubr.bf16.gmra.mrb[0].mxu0 %v2058
      %v2211 = vpop.f32.mrb[0].mxu0
      %v2212 = vadd.f32 %v2080, %v2211
      %v2213 = vpop.f32.mrb[0].mxu0
      %v2214 = vadd.f32 %v2084, %v2213
      %v2215 = vpop.f32.mrb[0].mxu0
      %v2216 = vadd.f32 %v2080, %v2215
      %v2217 = vpop.f32.mrb[0].mxu0
      %v2218 = vadd.f32 %v2084, %v2217
      %2219 = vdwg.mxu0
      %v2220 = vmul.f32 %v2202, %v2202
      %v2221 = vmul.f32 %v2204, %v2204
      %v2222 = vmul.f32 %v2206, %v2206
      %v2223 = vmul.f32 %v2208, %v2208
      %v2224 = vmul.f32 %v2212, %v2212
      %v2225 = vmul.f32 %v2214, %v2214
      %v2226 = vmul.f32 %v2216, %v2216
      %v2227 = vmul.f32 %v2218, %v2218
      %v2228 = vmul.f32 %v2202, %v2220
      %v2229 = vmul.f32 %v2204, %v2221
      %v2230 = vmul.f32 %v2206, %v2222
      %v2231 = vmul.f32 %v2208, %v2223
      %v2232 = vmul.f32 %v2212, %v2224
      %v2233 = vmul.f32 %v2214, %v2225
      %v2234 = vmul.f32 %v2216, %v2226
      %v2235 = vmul.f32 %v2218, %v2227
      %v2236 = vmul.f32 %v2228, 0.044715
      %v2237 = vmul.f32 %v2229, 0.044715
      %v2238 = vmul.f32 %v2230, 0.044715
      %v2239 = vmul.f32 %v2231, 0.044715
      %v2240 = vmul.f32 %v2232, 0.044715
      %v2241 = vmul.f32 %v2233, 0.044715
      %v2242 = vmul.f32 %v2234, 0.044715
      %v2243 = vmul.f32 %v2235, 0.044715
      %v2244 = vadd.f32 %v2202, %v2236
      %v2245 = vadd.f32 %v2204, %v2237
      %v2246 = vadd.f32 %v2206, %v2238
      %v2247 = vadd.f32 %v2208, %v2239
      %v2248 = vadd.f32 %v2212, %v2240
      %v2249 = vadd.f32 %v2214, %v2241
      %v2250 = vadd.f32 %v2216, %v2242
      %v2251 = vadd.f32 %v2218, %v2243
      %v2252 = vmul.f32 %v2244, 0.7978846
      %v2253 = vmul.f32 %v2245, 0.7978846
      %v2254 = vmul.f32 %v2246, 0.7978846
      %v2255 = vmul.f32 %v2247, 0.7978846
      %v2256 = vmul.f32 %v2248, 0.7978846
      %v2257 = vmul.f32 %v2249, 0.7978846
      %v2258 = vmul.f32 %v2250, 0.7978846
      %v2259 = vmul.f32 %v2251, 0.7978846
      %v2260 = vtanh.pop %v2252
      %v2261 = vtanh.pop %v2253
      %v2262 = vtanh.pop %v2254
      %v2263 = vtanh.pop %v2255
      %v2264 = vtanh.pop %v2256
      %v2265 = vtanh.pop %v2257
      %v2266 = vtanh.pop %v2258
      %v2267 = vtanh.pop %v2259
      %v2268 = vadd.f32 %v2260, 1.0
      %v2269 = vadd.f32 %v2261, 1.0
      %v2270 = vadd.f32 %v2262, 1.0
      %v2271 = vadd.f32 %v2263, 1.0
      %v2272 = vadd.f32 %v2264, 1.0
      %v2273 = vadd.f32 %v2265, 1.0
      %v2274 = vadd.f32 %v2266, 1.0
      %v2275 = vadd.f32 %v2267, 1.0
      %v2276 = vmul.f32 %v2268, 0.5
      %v2277 = vmul.f32 %v2269, 0.5
      %v2278 = vmul.f32 %v2270, 0.5
      %v2279 = vmul.f32 %v2271, 0.5
      %v2280 = vmul.f32 %v2272, 0.5
      %v2281 = vmul.f32 %v2273, 0.5
      %v2282 = vmul.f32 %v2274, 0.5
      %v2283 = vmul.f32 %v2275, 0.5
      %v2284 = vmul.f32 %v2202, %v2276
      %v2285 = vmul.f32 %v2204, %v2277
      %v2286 = vmul.f32 %v2206, %v2278
      %v2287 = vmul.f32 %v2208, %v2279
      %v2288 = vmul.f32 %v2212, %v2280
      %v2289 = vmul.f32 %v2214, %v2281
      %v2290 = vmul.f32 %v2216, %v2282
      %v2291 = vmul.f32 %v2218, %v2283
      %v2292 = vpack.c.bf16 %v2286, %v2284
      %v2293 = vpack.c.bf16 %v2287, %v2285
      %v2294 = vpack.c.bf16 %v2290, %v2288
      %v2295 = vpack.c.bf16 %v2291, %v2289
      %v2296 = vld [vmem:[%s953] sm:$0xf]
      %v2297 = vld [vmem:[%s953 + $0x4] sm:$0xf]
      %v2298 = vld [vmem:[%s953 + $0x8] sm:$0xf]
      %v2299 = vld [vmem:[%s953 + $0xc] sm:$0xf]
      %v2300 = vld [vmem:[%s953 + $0x10] sm:$0xf]
      %v2301 = vld [vmem:[%s953 + $0x14] sm:$0xf]
      %v2302 = vld [vmem:[%s953 + $0x18] sm:$0xf]
      %v2303 = vld [vmem:[%s953 + $0x1c] sm:$0xf]
      %v2304 = vld [vmem:[%s953 + $0x20] sm:$0xf]
      %v2305 = vld [vmem:[%s953 + $0x24] sm:$0xf]
      %v2306 = vld [vmem:[%s953 + $0x28] sm:$0xf]
      %v2307 = vld [vmem:[%s953 + $0x2c] sm:$0xf]
      %v2308 = vld [vmem:[%s953 + $0x30] sm:$0xf]
      %v2309 = vld [vmem:[%s953 + $0x34] sm:$0xf]
      %v2310 = vld [vmem:[%s953 + $0x38] sm:$0xf]
      %v2311 = vld [vmem:[%s953 + $0x3c] sm:$0xf]
      %v2312 = vld [vmem:[%s953 + $0x40] sm:$0xf]
      %v2313 = vld [vmem:[%s953 + $0x44] sm:$0xf]
      %v2314 = vld [vmem:[%s953 + $0x48] sm:$0xf]
      %v2315 = vld [vmem:[%s953 + $0x4c] sm:$0xf]
      %v2316 = vld [vmem:[%s953 + $0x50] sm:$0xf]
      %v2317 = vld [vmem:[%s953 + $0x54] sm:$0xf]
      %v2318 = vld [vmem:[%s953 + $0x58] sm:$0xf]
      %v2319 = vld [vmem:[%s953 + $0x5c] sm:$0xf]
      %v2320 = vld [vmem:[%s953 + $0x60] sm:$0xf]
      %v2321 = vld [vmem:[%s953 + $0x64] sm:$0xf]
      %v2322 = vld [vmem:[%s953 + $0x68] sm:$0xf]
      %v2323 = vld [vmem:[%s953 + $0x6c] sm:$0xf]
      %v2324 = vld [vmem:[%s953 + $0x70] sm:$0xf]
      %v2325 = vld [vmem:[%s953 + $0x74] sm:$0xf]
      %v2326 = vld [vmem:[%s953 + $0x78] sm:$0xf]
      %v2327 = vld [vmem:[%s953 + $0x7c] sm:$0xf]
      %v2328 = vld [vmem:[%s960] sm:$0x1]
      %v2330 = vlaneseq
      %v2331 = vshrl.u32 %v2330, 7
      %v2332 = vsub.s32 0, %v2331
      %v2333 = vrot.slane %v2328, %v2332
      %v2367 = vunpack.c.l.b16 %v2296
      %v2368 = vunpack.c.l.b16 %v2297
      %v2369 = vunpack.c.l.b16 %v2298
      %v2370 = vunpack.c.l.b16 %v2299
      %v2371 = vunpack.c.l.b16 %v2300
      %v2372 = vunpack.c.l.b16 %v2301
      %v2373 = vunpack.c.l.b16 %v2302
      %v2374 = vunpack.c.l.b16 %v2303
      %v2375 = vunpack.c.l.b16 %v2304
      %v2376 = vunpack.c.l.b16 %v2305
      %v2377 = vunpack.c.l.b16 %v2306
      %v2378 = vunpack.c.l.b16 %v2307
      %v2379 = vunpack.c.l.b16 %v2308
      %v2380 = vunpack.c.l.b16 %v2309
      %v2381 = vunpack.c.l.b16 %v2310
      %v2382 = vunpack.c.l.b16 %v2311
      %v2383 = vunpack.c.l.b16 %v2312
      %v2384 = vunpack.c.l.b16 %v2313
      %v2385 = vunpack.c.l.b16 %v2314
      %v2386 = vunpack.c.l.b16 %v2315
      %v2387 = vunpack.c.l.b16 %v2316
      %v2388 = vunpack.c.l.b16 %v2317
      %v2389 = vunpack.c.l.b16 %v2318
      %v2390 = vunpack.c.l.b16 %v2319
      %v2391 = vunpack.c.l.b16 %v2320
      %v2392 = vunpack.c.l.b16 %v2321
      %v2393 = vunpack.c.l.b16 %v2322
      %v2394 = vunpack.c.l.b16 %v2323
      %v2395 = vunpack.c.l.b16 %v2324
      %v2396 = vunpack.c.l.b16 %v2325
      %v2397 = vunpack.c.l.b16 %v2326
      %v2398 = vunpack.c.l.b16 %v2327
      %v2399 = vpack.c.b16 %v2368, %v2367
      %v2400 = vpack.c.b16 %v2370, %v2369
      %v2401 = vpack.c.b16 %v2372, %v2371
      %v2402 = vpack.c.b16 %v2374, %v2373
      %v2403 = vpack.c.b16 %v2376, %v2375
      %v2404 = vpack.c.b16 %v2378, %v2377
      %v2405 = vpack.c.b16 %v2380, %v2379
      %v2406 = vpack.c.b16 %v2382, %v2381
      %v2407 = vpack.c.b16 %v2384, %v2383
      %v2408 = vpack.c.b16 %v2386, %v2385
      %v2409 = vpack.c.b16 %v2388, %v2387
      %v2410 = vpack.c.b16 %v2390, %v2389
      %v2411 = vpack.c.b16 %v2392, %v2391
      %v2412 = vpack.c.b16 %v2394, %v2393
      %v2413 = vpack.c.b16 %v2396, %v2395
      %v2414 = vpack.c.b16 %v2398, %v2397
      %2431 = vmatprep.subr.bf16.mxu0 0
      %2432 = vmatpush1.bf16.msra.mxu0 %v2399
      %2433 = vmatprep.subr.bf16.mxu0 0
      %2434 = vmatpush1.bf16.msra.mxu0 %v2400
      %2435 = vmatprep.subr.bf16.mxu0 0
      %2436 = vmatpush1.bf16.msra.mxu0 %v2401
      %2437 = vmatprep.subr.bf16.mxu0 0
      %2438 = vmatpush1.bf16.msra.mxu0 %v2402
      %2439 = vmatprep.subr.bf16.mxu0 0
      %2440 = vmatpush1.bf16.msra.mxu0 %v2403
      %2441 = vmatprep.subr.bf16.mxu0 0
      %2442 = vmatpush1.bf16.msra.mxu0 %v2404
      %2443 = vmatprep.subr.bf16.mxu0 0
      %2444 = vmatpush1.bf16.msra.mxu0 %v2405
      %2445 = vmatprep.subr.bf16.mxu0 0
      %2446 = vmatpush1.bf16.msra.mxu0 %v2406
      %2447 = vmatprep.subr.bf16.mxu0 0
      %2448 = vmatpush1.bf16.msra.mxu0 %v2407
      %2449 = vmatprep.subr.bf16.mxu0 0
      %2450 = vmatpush1.bf16.msra.mxu0 %v2408
      %2451 = vmatprep.subr.bf16.mxu0 0
      %2452 = vmatpush1.bf16.msra.mxu0 %v2409
      %2453 = vmatprep.subr.bf16.mxu0 0
      %2454 = vmatpush1.bf16.msra.mxu0 %v2410
      %2455 = vmatprep.subr.bf16.mxu0 0
      %2456 = vmatpush1.bf16.msra.mxu0 %v2411
      %2457 = vmatprep.subr.bf16.mxu0 0
      %2458 = vmatpush1.bf16.msra.mxu0 %v2412
      %2459 = vmatprep.subr.bf16.mxu0 0
      %2460 = vmatpush1.bf16.msra.mxu0 %v2413
      %2461 = vmatprep.subr.bf16.mxu0 0
      %2462 = vmatpush1.bf16.msra.mxu0 %v2414
      %2463 = vmatprep.mubr.bf16.mxu0 %v2293
      %2464 = vmatmul.mubr.bf16.gmra.mrb[0].mxu0 %v2292
      %v2465 = vpop.f32.mrb[0].mxu0
      %v2466 = vadd.f32 %v2333, %v2465
      %v2467 = vpop.f32.mrb[0].mxu0
      %v2468 = vpop.f32.mrb[0].mxu0
      %v2469 = vadd.f32 %v2333, %v2468
      %v2470 = vpop.f32.mrb[0].mxu0
      %2471 = vmatprep.mubr.bf16.mxu0 %v2295
      %2472 = vmatmul.mubr.bf16.gmra.mrb[0].mxu0 %v2294
      %v2473 = vpop.f32.mrb[0].mxu0
      %v2474 = vadd.f32 %v2333, %v2473
      %v2475 = vpop.f32.mrb[0].mxu0
      %v2476 = vpop.f32.mrb[0].mxu0
      %v2477 = vadd.f32 %v2333, %v2476
      %v2478 = vpop.f32.mrb[0].mxu0
      %2479 = vdwg.mxu0
      %v2480 = vadd.f32 %v2053, %v2466
      %v2481 = vadd.f32 %v2054, %v2469
      %v2482 = vadd.f32 %v2055, %v2474
      %v2483 = vadd.f32 %v2056, %v2477
      %v2484 = vld [vmem:[%s967] sm:$0x1]
      %v2485 = vld [vmem:[%s974] sm:$0x1]
      %2486 = vadd.xlane.f32.xlu0 %v2480
      %v2487 = vpop.xlane.xlu0 %2486
      %2488 = vadd.xlane.f32.xlu0 %v2481
      %v2489 = vpop.xlane.xlu0 %2488
      %2490 = vadd.xlane.f32.xlu0 %v2482
      %v2491 = vpop.xlane.xlu0 %2490
      %2492 = vadd.xlane.f32.xlu0 %v2483
      %v2493 = vpop.xlane.xlu0 %2492
      %v2494 = vmul.f32 %v2487, %v2000
      %v2495 = vmul.f32 %v2489, %v2000
      %v2496 = vmul.f32 %v2491, %v2000
      %v2497 = vmul.f32 %v2493, %v2000
      %v2498 = vsub.f32 %v2480, %v2494
      %v2499 = vsub.f32 %v2481, %v2495
      %v2500 = vsub.f32 %v2482, %v2496
      %v2501 = vsub.f32 %v2483, %v2497
      %v2502 = vmul.f32 %v2498, %v2498
      %v2503 = vmul.f32 %v2499, %v2499
      %v2504 = vmul.f32 %v2500, %v2500
      %v2505 = vmul.f32 %v2501, %v2501
      %2506 = vadd.xlane.f32.xlu0 %v2502
      %v2507 = vpop.xlane.xlu0 %2506
      %2508 = vadd.xlane.f32.xlu0 %v2503
      %v2509 = vpop.xlane.xlu0 %2508
      %2510 = vadd.xlane.f32.xlu0 %v2504
      %v2511 = vpop.xlane.xlu0 %2510
      %2512 = vadd.xlane.f32.xlu0 %v2505
      %v2513 = vpop.xlane.xlu0 %2512
      %v2514 = vmul.f32 %v2507, %v2000
      %v2515 = vmul.f32 %v2509, %v2000
      %v2516 = vmul.f32 %v2511, %v2000
      %v2517 = vmul.f32 %v2513, %v2000
      %v2518 = vadd.f32 %v2514, 1e-12
      %v2519 = vadd.f32 %v2515, 1e-12
      %v2520 = vadd.f32 %v2516, 1e-12
      %v2521 = vadd.f32 %v2517, 1e-12
      %v2522 = vrsqrt.pop %v2518
      %v2523 = vrsqrt.pop %v2519
      %v2524 = vrsqrt.pop %v2520
      %v2525 = vrsqrt.pop %v2521
      %v2526 = vmul.f32 %v2498, %v2522
      %v2527 = vmul.f32 %v2499, %v2523
      %v2528 = vmul.f32 %v2500, %v2524
      %v2529 = vmul.f32 %v2501, %v2525
      %v2531 = vlaneseq
      %v2532 = vshrl.u32 %v2531, 7
      %v2533 = vsub.s32 0, %v2532
      %v2534 = vrot.slane %v2484, %v2533
      %v2536 = vmul.f32 %v2526, %v2534
      %v2537 = vmul.f32 %v2527, %v2534
      %v2538 = vmul.f32 %v2528, %v2534
      %v2539 = vmul.f32 %v2529, %v2534
      %v2541 = vlaneseq
      %v2542 = vshrl.u32 %v2541, 7
      %v2543 = vsub.s32 0, %v2542
      %v2544 = vrot.slane %v2485, %v2543
      %v2546 = vadd.f32 %v2536, %v2544
      %v2547 = vadd.f32 %v2537, %v2544
      %v2548 = vadd.f32 %v2538, %v2544
      %v2549 = vadd.f32 %v2539, %v2544
      %2550 = vst [vmem:[#allocation2] sm:$0xff] %v2546
      %2551 = vst [vmem:[#allocation2 + $0x8] sm:$0xff] %v2547
      %2552 = vst [vmem:[#allocation2 + $0x10] sm:$0xff] %v2548
      %2553 = vst [vmem:[#allocation2 + $0x18] sm:$0xff] %v2549
      %p2554 = scmp.eq.s32.totalorder %s33, 1
      // Predicated region
      $region93: #{bi_encoder_forward.1} parent=87 // pred_check
        %p2555 = pneg %p2554
      $region94: #{bi_encoder_forward.1} parent=87 // pred_check_branch
        %2557 = sbr.rel (%p2555) target = $region96
      $region95: #{bi_encoder_forward.1} parent=87 // pred_region
        %v2559 = vrot.slane %v2548, 7
        %vm2561 = vcmask 1040384
        %v2562 = vsel %vm2561, %v2546, %v2559
        %v2563 = vpack.c.bf16 %v2562, %v2562
        %v2564 = vld [vmem:[%s979] sm:$0xf]
        %v2565 = vld [vmem:[%s979 + $0x4] sm:$0xf]
        %v2566 = vld [vmem:[%s979 + $0x8] sm:$0xf]
        %v2567 = vld [vmem:[%s979 + $0xc] sm:$0xf]
        %v2568 = vld [vmem:[%s979 + $0x10] sm:$0xf]
        %v2569 = vld [vmem:[%s979 + $0x14] sm:$0xf]
        %v2570 = vld [vmem:[%s979 + $0x18] sm:$0xf]
        %v2571 = vld [vmem:[%s979 + $0x1c] sm:$0xf]
        %v2572 = vld [vmem:[%s979 + $0x20] sm:$0xf]
        %v2573 = vld [vmem:[%s979 + $0x24] sm:$0xf]
        %v2574 = vld [vmem:[%s979 + $0x28] sm:$0xf]
        %v2575 = vld [vmem:[%s979 + $0x2c] sm:$0xf]
        %v2576 = vld [vmem:[%s979 + $0x30] sm:$0xf]
        %v2577 = vld [vmem:[%s979 + $0x34] sm:$0xf]
        %v2578 = vld [vmem:[%s979 + $0x38] sm:$0xf]
        %v2579 = vld [vmem:[%s979 + $0x3c] sm:$0xf]
        %v2580 = vld [vmem:[%s982] sm:$0x1]
        %v2582 = vlaneseq
        %v2583 = vshrl.u32 %v2582, 7
        %v2584 = vsub.s32 0, %v2583
        %v2585 = vrot.slane %v2580, %v2584
        %v2603 = vunpack.c.l.b16 %v2564
        %v2604 = vunpack.c.l.b16 %v2565
        %v2605 = vunpack.c.l.b16 %v2566
        %v2606 = vunpack.c.l.b16 %v2567
        %v2607 = vunpack.c.l.b16 %v2568
        %v2608 = vunpack.c.l.b16 %v2569
        %v2609 = vunpack.c.l.b16 %v2570
        %v2610 = vunpack.c.l.b16 %v2571
        %v2611 = vunpack.c.l.b16 %v2572
        %v2612 = vunpack.c.l.b16 %v2573
        %v2613 = vunpack.c.l.b16 %v2574
        %v2614 = vunpack.c.l.b16 %v2575
        %v2615 = vunpack.c.l.b16 %v2576
        %v2616 = vunpack.c.l.b16 %v2577
        %v2617 = vunpack.c.l.b16 %v2578
        %v2618 = vunpack.c.l.b16 %v2579
        %v2619 = vpack.c.b16 %v2604, %v2603
        %v2620 = vpack.c.b16 %v2606, %v2605
        %v2621 = vpack.c.b16 %v2608, %v2607
        %v2622 = vpack.c.b16 %v2610, %v2609
        %v2623 = vpack.c.b16 %v2612, %v2611
        %v2624 = vpack.c.b16 %v2614, %v2613
        %v2625 = vpack.c.b16 %v2616, %v2615
        %v2626 = vpack.c.b16 %v2618, %v2617
        %2635 = vmatprep.subr.bf16.mxu0 0
        %2636 = vmatpush1.bf16.msra.mxu0 %v2619
        %2637 = vmatprep.subr.bf16.mxu0 0
        %2638 = vmatpush1.bf16.msra.mxu0 %v2620
        %2639 = vmatprep.subr.bf16.mxu0 0
        %2640 = vmatpush1.bf16.msra.mxu0 %v2621
        %2641 = vmatprep.subr.bf16.mxu0 0
        %2642 = vmatpush1.bf16.msra.mxu0 %v2622
        %2643 = vmatprep.subr.bf16.mxu0 0
        %2644 = vmatpush1.bf16.msra.mxu0 %v2623
        %2645 = vmatprep.subr.bf16.mxu0 0
        %2646 = vmatpush1.bf16.msra.mxu0 %v2624
        %2647 = vmatprep.subr.bf16.mxu0 0
        %2648 = vmatpush1.bf16.msra.mxu0 %v2625
        %2649 = vmatprep.subr.bf16.mxu0 0
        %2650 = vmatpush1.bf16.msra.mxu0 %v2626
        %2651 = vmatprep.subr.bf16.mxu0 0
        %2652 = vmatpush1.bf16.msra.mxu0 0
        %2653 = vmatprep.subr.bf16.mxu0 0
        %2654 = vmatpush1.bf16.msra.mxu0 0
        %2655 = vmatprep.subr.bf16.mxu0 0
        %2656 = vmatpush1.bf16.msra.mxu0 0
        %2657 = vmatprep.subr.bf16.mxu0 0
        %2658 = vmatpush1.bf16.msra.mxu0 0
        %2659 = vmatprep.subr.bf16.mxu0 0
        %2660 = vmatpush1.bf16.msra.mxu0 0
        %2661 = vmatprep.subr.bf16.mxu0 0
        %2662 = vmatpush1.bf16.msra.mxu0 0
        %2663 = vmatprep.subr.bf16.mxu0 0
        %2664 = vmatpush1.bf16.msra.mxu0 0
        %2665 = vmatprep.subr.bf16.mxu0 0
        %2666 = vmatpush1.bf16.msra.mxu0 0
        %2667 = vmatprep.mubr.bf16.mxu0 0
        %2668 = vmatmul.mubr.bf16.gmra.mrb[0].mxu0 %v2563
        %v2669 = vpop.f32.mrb[0].mxu0
        %v2670 = vadd.f32 %v2585, %v2669
        %v2671 = vpop.f32.mrb[0].mxu0
        %v2672 = vpop.f32.mrb[0].mxu0
        %v2673 = vpop.f32.mrb[0].mxu0
        %2674 = vdwg.mxu0
        %v2675 = vtanh.pop %v2670
        %2676 = vst [vmem:[%s986] sm:$0x3] %v2675
      $region96: #{bi_encoder_forward.1} parent=87 // pred_fallthru
        _
      %p2677 = scmp.lt.s32.totalorder %s32, 1
      %s2678 = scalar_select %p2677, %s32, 1
      %s2679 = smul.addr %s2678, 2
      %s2680 = scalar_lea.vmem %s17, %s2679
      // Predicated region
      $region97: #{bi_encoder_forward.1} parent=87 // pred_check
        %p2681 = pneg %p524
      $region98: #{bi_encoder_forward.1} parent=87 // pred_check_branch
        %2683 = sbr.rel (%p2681) target = $region100
      $region99: #{bi_encoder_forward.1} parent=87 // pred_region
        _
      $region100: #{bi_encoder_forward.1} parent=87 // pred_fallthru
        _
    $region88: #{bi_encoder_forward.1} parent=5 // pred_fallthru
      _
    %p2684 = scmp.le.s32.totalorder 2, %s23
    // Predicated region
    $region101: #{bi_encoder_forward.1} parent=5 // pred_check
      %p2685 = pneg %p2684
    $region102: #{bi_encoder_forward.1} parent=5 // pred_check_branch
      %2687 = sbr.rel (%p2685) target = $region104
    $region103: #{bi_encoder_forward.1} parent=5 // pred_region
      %s2688 = ssub.s32 %s23, 2
      // Predicated region
      $region105: #{bi_encoder_forward.1} parent=103 // pred_check
        %p2689 = pneg %p530
      $region106: #{bi_encoder_forward.1} parent=103 // pred_check_branch
        %2691 = sbr.rel (%p2689) target = $region108
      $region107: #{bi_encoder_forward.1} parent=103 // pred_region
        %p2692 = scmp.lt.s32.totalorder %s34, 1
        %s2693 = scalar_select %p2692, %s34, 1
        %s2694 = smul.addr %s2693, 2
        %s2695 = scalar_lea.vmem %s17, %s2694
      $region108: #{bi_encoder_forward.1} parent=103 // pred_fallthru
        _
    $region104: #{bi_encoder_forward.1} parent=5 // pred_fallthru
      _
  $region6: #{bi_encoder_forward.1} parent=0 // loop_footer
    %s27 = sadd.s32 1, %s23
  $region7: #{bi_encoder_forward.1} parent=0 // loop_footer_branch
    %22 = sbr.rel target = $region3
  $region8: #{bi_encoder_forward.1} parent=0 // loop_exit
    _

</llo_original>
